<compile_context>
chip_gen: v5e
topology: v5e:2x2
jax: 0.10.0
libtpu: 0.0.40
codegen_flags: <defaults>
</compile_context>

<pallas_src>
import jax
import jax.numpy as jnp
from jax import lax
from jax.experimental import pallas as pl
from jax.experimental.pallas import tpu as pltpu


def _round_up(x, m):
    return ((x + m - 1) // m) * m


def _slap_init_embed_kernel(locs_t_ref, depot_ref, w8_ref, b_ref, out_ref,
                            feat_ref):
    """One grid step = one [Bb (batch rows) x Nb (nodes)] output tile.

    locs_t_ref: [Bb, 2, Nb]  x/y rows, node dim lane-dense
    depot_ref:  [Bb, 1, 2]   depot (node 0) coordinates per batch row
    w8_ref:     [8, E]       Linear weight, transposed and zero-padded 3 -> 8
    b_ref:      [1, E]       bias
    out_ref:    [Bb, Nb, E]
    feat_ref:   [Bb, 8, Nb]  persistent VMEM scratch (feature row-stacks)
    """
    bb, _, bn = locs_t_ref.shape

    xy = locs_t_ref[...]                                 # [Bb, 2, Nb]
    dep = depot_ref[...]                                 # [Bb, 1, 2]
    dep_x = dep[:, :, 0]                                 # [Bb, 1]
    dep_y = dep[:, :, 1]                                 # [Bb, 1]

    # Manhattan distance from the depot to every node, vectorized over the
    # whole sub-batch.  Only row 0 of the full distance matrix is needed.
    d_all = (jnp.abs(xy[:, 0, :] - dep_x) +
             jnp.abs(xy[:, 1, :] - dep_y))               # [Bb, Nb]

    # Stage the [8, Nb] feature row-stack per batch row:
    #   row 0 = x, row 1 = y, row 2 = depot distance, rows 3..7 = 0 padding.
    # (Zero the pad rows every step: cheap, and safe under megacore grid
    # sharding where program_id 0 may never run on a given core.)
    feat_ref[:, 3:, :] = jnp.zeros((bb, 5, bn), jnp.float32)
    feat_ref[:, 0:2, :] = xy
    feat_ref[:, 2:3, :] = d_all[:, None, :]

    w8 = w8_ref[...]                                     # [8, E]
    bias = b_ref[...]                                    # [1, E]

    def body(bi, carry):
        f = feat_ref[bi]                                 # [8, Nb]
        # (8 x Nb)^T @ (8 x E) on the MXU; HIGHEST precision keeps f32
        # accuracy vs. the pure-f32 reference.
        acc = lax.dot_general(
            f, w8,
            dimension_numbers=(((0,), (0,)), ((), ())),
            precision=lax.Precision.HIGHEST,
            preferred_element_type=jnp.float32)          # [Nb, E]
        out_ref[bi] = (acc + bias).astype(out_ref.dtype)
        return carry

    # Fully unroll small per-row loops so the store of row i can overlap the
    # matmul of row i+1; partially unroll very large sub-batches.
    lax.fori_loop(0, bb, body, 0, unroll=True if bb <= 32 else 8)


def _tpu_two_tensorcores():
    """Best-effort v7x detection (2 TensorCores, 64 MiB VMEM per chip)."""
    try:
        kind = jax.devices()[0].device_kind.lower()
    except Exception:
        return False
    return ("v7" in kind) or ("7x" in kind)


def _choose_blocks(B, n, E_pad, out_itemsize, two_cores):
    """Pick (block_b, block_n) so each output block is near the per-generation
    sweet spot while the double-buffered working set stays inside VMEM."""
    # ~8 MiB blocks on v7x (64 MiB physical VMEM, very fast writeback),
    # ~16 MiB on v5e/v6e (single TC, 128 MiB VMEM) to amortize the ~0.35 us
    # per-grid-step overhead.
    target = (8 << 20) if two_cores else (16 << 20)

    # Node-dim tile: full n unless a single batch row overflows the budget.
    block_n = n
    if n * E_pad * out_itemsize > target and n % 128 == 0:
        block_n = 128
        for d in range(n - 128, 0, -128):
            if n % d == 0 and d * E_pad * out_itemsize <= target:
                block_n = d
                break

    n_steps = n // block_n
    per_b = block_n * E_pad * out_itemsize

    # Batch tile: largest divisor of B that fits the budget.  On v7x keep the
    # grid >= 4 steps so both TensorCores stay busy and pipelined; on v5e/v6e
    # (single TC) extra grid steps are pure overhead, so no minimum.
    min_steps = min(4, B * n_steps) if two_cores else 1
    block_b = 1
    for bb in range(1, B + 1):
        if B % bb:
            continue
        if bb * per_b > target or bb > 64:
            break
        if (B // bb) * n_steps < min_steps:
            continue
        block_b = bb
    return block_b, block_n


def _vmem_limit_bytes(block_b, block_n, E_pad, out_itemsize):
    ln = _round_up(block_n, 128)
    out_blk = block_b * block_n * E_pad * out_itemsize
    locs_blk = block_b * 8 * ln * 4          # (2 -> 8)-sublane padded in VMEM
    depot_blk = block_b * 8 * 128 * 4        # (1, 2) padded to (8, 128)
    scratch = block_b * 8 * ln * 4
    fixed = 2 * 9 * E_pad * 4                # w8 + bias, double-buffered
    need = 2 * (out_blk + locs_blk + depot_blk) + scratch + fixed
    return int(min(max(32 << 20, need + (4 << 20)), 64 << 20))


def slap_init_embedding(locs, weight, bias, *, block_b=None, block_n=None,
                        out_dtype=None):
    """SLAPInitEmbedding forward.

    locs:   [B, n, 2] float32
    weight: [E, 3]    float32  (PyTorch nn.Linear weight layout)
    bias:   [E]       float32
    returns [B, n, E] in `out_dtype` (default locs.dtype; pass jnp.bfloat16 to
    halve HBM writeback — the kernel is writeback-bound — if downstream
    consumers accept it).
    """
    B, n, two = locs.shape
    assert two == 2, "locs must have 2 coordinates per node"
    E = weight.shape[0]
    out_dtype = jnp.dtype(out_dtype or locs.dtype)
    E_pad = _round_up(E, 128)   # lane-dense, unmasked output stores

    two_cores = _tpu_two_tensorcores()
    auto_b, auto_n = _choose_blocks(B, n, E_pad, out_dtype.itemsize, two_cores)
    block_b = block_b or auto_b
    block_n = block_n or auto_n
    assert B % block_b == 0, "block_b must divide B"
    assert n % block_n == 0, "block_n must divide n"

    # Layout plumbing (tiny arrays, negligible XLA cost).
    locs_f32 = locs.astype(jnp.float32)
    locs_t = jnp.transpose(locs_f32, (0, 2, 1))            # [B, 2, n]
    depot = locs_f32[:, 0:1, :]                            # [B, 1, 2]
    w8 = jnp.zeros((8, E_pad), jnp.float32).at[:3, :E].set(
        jnp.transpose(weight).astype(jnp.float32))         # [8, E_pad]
    bias_p = jnp.zeros((1, E_pad), jnp.float32).at[0, :E].set(
        bias.astype(jnp.float32))                          # [1, E_pad]

    grid = (B // block_b, n // block_n)

    out = pl.pallas_call(
        _slap_init_embed_kernel,
        out_shape=jax.ShapeDtypeStruct((B, n, E_pad), out_dtype),
        grid_spec=pltpu.PrefetchScalarGridSpec(
            num_scalar_prefetch=0,
            grid=grid,
            in_specs=[
                pl.BlockSpec((block_b, 2, block_n), lambda b, j: (b, 0, j)),
                pl.BlockSpec((block_b, 1, 2), lambda b, j: (b, 0, 0)),
                pl.BlockSpec((8, E_pad), lambda b, j: (0, 0)),
                pl.BlockSpec((1, E_pad), lambda b, j: (0, 0)),
            ],
            out_specs=pl.BlockSpec((block_b, block_n, E_pad),
                                   lambda b, j: (b, j, 0)),
            scratch_shapes=[pltpu.VMEM((block_b, 8, block_n), jnp.float32)],
        ),
        compiler_params=pltpu.CompilerParams(
            dimension_semantics=("parallel", "parallel"),
            vmem_limit_bytes=_vmem_limit_bytes(block_b, block_n, E_pad,
                                               out_dtype.itemsize),
        ),
    )(locs_t, depot, w8, bias_p)

    if E_pad != E:
        out = out[..., :E]
    return out


def _reference(locs, weight, bias):
    # Pure-JAX mirror of the PyTorch forward (HIGHEST precision so the f32
    # baseline is apples-to-apples with the MXU-HIGHEST kernel matmul).
    diff = locs[:, :, None, :] - locs[:, None, :, :]
    dist_mat = jnp.sum(jnp.abs(diff), axis=-1)                        # [B,n,n]
    depot_to_all = dist_mat[:, 0, :]                                  # [B,n]
    feat = jnp.concatenate([locs, depot_to_all[..., None]], axis=-1)  # [B,n,3]
    proj = jnp.einsum("bnk,ek->bne", feat, weight,
                      precision=lax.Precision.HIGHEST)
    return proj + bias                                                # [B,n,E]


if __name__ == "__main__":
    key = jax.random.PRNGKey(0)
    k_locs, k_w, k_b = jax.random.split(key, 3)

    # Small but lane-aligned shapes (n and E multiples of 128 for unmasked
    # loads/stores).  TODO(synk): depot index is hardcoded to node 0, matching
    # the reference module; a configurable depot_idx would need a scalar arg.
    B, n, embed_dim = 8, 128, 128

    # nn.Linear(3, embed_dim) parameters in PyTorch layout.
    weight = jax.random.uniform(k_w, (embed_dim, 3), jnp.float32, -0.5, 0.5)
    bias = jax.random.uniform(k_b, (embed_dim,), jnp.float32, -0.5, 0.5)
    locs = jax.random.uniform(k_locs, (B, n, 2), jnp.float32)

    out = slap_init_embedding(locs, weight, bias)
    out = jax.block_until_ready(out)

    ref = _reference(locs, weight, bias)
    assert out.shape == (B, n, embed_dim)
    assert jnp.allclose(out, ref, atol=5e-5, rtol=5e-5), float(
        jnp.max(jnp.abs(out - ref)))

    print("KERNEL_OK")
</pallas_src>

<mosaic_0001>
module attributes {stable_mosaic.version = 11 : i64} {
  func.func @_slap_init_embed_kernel(%arg0: i32, %arg1: i32, %arg2: memref<8x2x128xf32, #tpu.memory_space<vmem>>, %arg3: memref<8x1x2xf32, #tpu.memory_space<vmem>>, %arg4: memref<8x128xf32, #tpu.memory_space<vmem>>, %arg5: memref<1x128xf32, #tpu.memory_space<vmem>>, %arg6: memref<8x128x128xf32, #tpu.memory_space<vmem>>, %arg7: memref<8x8x128xf32, #tpu.memory_space<vmem>>) attributes {dimension_semantics = [#tpu.dimension_semantics<parallel>, #tpu.dimension_semantics<parallel>], iteration_bounds = array<i64: 1, 1>, scalar_prefetch = 0 : i64, scratch_operands = 1 : i64, tpu.core_type = #tpu.core_type<tc>, window_params = [{transform_indices = @transform_0, window_bounds = array<i64: 8, 2, 128>}, {transform_indices = @transform_1, window_bounds = array<i64: 8, 1, 2>}, {pipeline_mode = #tpu.pipeline_mode<synchronous>, transform_indices = @transform_2, window_bounds = array<i64: 8, 128>}, {pipeline_mode = #tpu.pipeline_mode<synchronous>, transform_indices = @transform_3, window_bounds = array<i64: 1, 128>}, {transform_indices = @transform_4, window_bounds = array<i64: 8, 128, 128>}]} {
    %c0 = arith.constant 0 : index
    %c0_0 = arith.constant 0 : index
    %c0_1 = arith.constant 0 : index
    %0 = vector.load %arg2[%c0, %c0_0, %c0_1] : memref<8x2x128xf32, #tpu.memory_space<vmem>>, vector<8x2x128xf32>
    %c0_2 = arith.constant 0 : index
    %c0_3 = arith.constant 0 : index
    %c0_4 = arith.constant 0 : index
    %1 = vector.load %arg3[%c0_2, %c0_3, %c0_4] : memref<8x1x2xf32, #tpu.memory_space<vmem>>, vector<8x1x2xf32>
    %2 = vector.extract_strided_slice %1 {offsets = [0, 0, 0], sizes = [8, 1, 1], strides = [1, 1, 1]} : vector<8x1x2xf32> to vector<8x1x1xf32>
    %3 = vector.shape_cast %2 : vector<8x1x1xf32> to vector<8x1xf32>
    %4 = vector.extract_strided_slice %1 {offsets = [0, 0, 1], sizes = [8, 1, 1], strides = [1, 1, 1]} : vector<8x1x2xf32> to vector<8x1x1xf32>
    %5 = vector.shape_cast %4 : vector<8x1x1xf32> to vector<8x1xf32>
    %6 = vector.extract_strided_slice %0 {offsets = [0, 0, 0], sizes = [8, 1, 128], strides = [1, 1, 1]} : vector<8x2x128xf32> to vector<8x1x128xf32>
    %7 = vector.shape_cast %6 : vector<8x1x128xf32> to vector<8x128xf32>
    %8 = vector.broadcast %3 : vector<8x1xf32> to vector<8x128xf32>
    %9 = arith.subf %7, %8 : vector<8x128xf32>
    %10 = math.absf %9 : vector<8x128xf32>
    %11 = vector.extract_strided_slice %0 {offsets = [0, 1, 0], sizes = [8, 1, 128], strides = [1, 1, 1]} : vector<8x2x128xf32> to vector<8x1x128xf32>
    %12 = vector.shape_cast %11 : vector<8x1x128xf32> to vector<8x128xf32>
    %13 = vector.broadcast %5 : vector<8x1xf32> to vector<8x128xf32>
    %14 = arith.subf %12, %13 : vector<8x128xf32>
    %15 = math.absf %14 : vector<8x128xf32>
    %16 = arith.addf %10, %15 : vector<8x128xf32>
    %cst = arith.constant 0.000000e+00 : f32
    %17 = vector.broadcast %cst : f32 to vector<8x5x128xf32>
    %c0_5 = arith.constant 0 : index
    %c3 = arith.constant 3 : index
    %c0_6 = arith.constant 0 : index
    %18 = vector.load %arg7[%c0_5, %c3, %c0_6] : memref<8x8x128xf32, #tpu.memory_space<vmem>>, vector<8x5x128xf32>
    tpu.vector_store %arg7[%c0_5, %c3, %c0_6], %17 {strides = array<i32>} : memref<8x8x128xf32, #tpu.memory_space<vmem>>, vector<8x5x128xf32>,
    %c0_7 = arith.constant 0 : index
    %c0_8 = arith.constant 0 : index
    %c0_9 = arith.constant 0 : index
    %19 = vector.load %arg7[%c0_7, %c0_8, %c0_9] : memref<8x8x128xf32, #tpu.memory_space<vmem>>, vector<8x2x128xf32>
    tpu.vector_store %arg7[%c0_7, %c0_8, %c0_9], %0 {strides = array<i32>} : memref<8x8x128xf32, #tpu.memory_space<vmem>>, vector<8x2x128xf32>,
    %20 = vector.shape_cast %16 : vector<8x128xf32> to vector<8x1x128xf32>
    %c0_10 = arith.constant 0 : index
    %c2 = arith.constant 2 : index
    %c0_11 = arith.constant 0 : index
    %21 = vector.load %arg7[%c0_10, %c2, %c0_11] : memref<8x8x128xf32, #tpu.memory_space<vmem>>, vector<8x1x128xf32>
    tpu.vector_store %arg7[%c0_10, %c2, %c0_11], %20 {strides = array<i32>} : memref<8x8x128xf32, #tpu.memory_space<vmem>>, vector<8x1x128xf32>,
    %c0_12 = arith.constant 0 : index
    %c0_13 = arith.constant 0 : index
    %22 = vector.load %arg4[%c0_12, %c0_13] : memref<8x128xf32, #tpu.memory_space<vmem>>, vector<8x128xf32>
    %c0_14 = arith.constant 0 : index
    %c0_15 = arith.constant 0 : index
    %23 = vector.load %arg5[%c0_14, %c0_15] : memref<1x128xf32, #tpu.memory_space<vmem>>, vector<1x128xf32>
    %c0_i32 = arith.constant 0 : i32
    %24 = arith.index_cast %c0_i32 : i32 to index
    %c0_16 = arith.constant 0 : index
    %c0_17 = arith.constant 0 : index
    %25 = vector.load %arg7[%24, %c0_16, %c0_17] : memref<8x8x128xf32, #tpu.memory_space<vmem>>, vector<1x8x128xf32>
    %26 = vector.shape_cast %25 : vector<1x8x128xf32> to vector<8x128xf32>
    %cst_18 = arith.constant dense<0.000000e+00> : vector<128x128xf32>
    %27 = tpu.matmul %26, %22, %cst_18 {dimension_numbers = #tpu.dot_dimension_numbers<[0], [0], [1], [1], [0, 1, 1, 1], [], []>, precision = #tpu.contract_precision<fp32>} : vector<8x128xf32>, vector<8x128xf32>, vector<128x128xf32> -> vector<128x128xf32>
    %28 = vector.broadcast %23 : vector<1x128xf32> to vector<128x128xf32>
    %29 = arith.addf %27, %28 : vector<128x128xf32>
    %30 = arith.index_cast %c0_i32 : i32 to index
    %c0_19 = arith.constant 0 : index
    %c0_20 = arith.constant 0 : index
    %31 = vector.load %arg6[%30, %c0_19, %c0_20] : memref<8x128x128xf32, #tpu.memory_space<vmem>>, vector<1x128x128xf32>
    %32 = vector.shape_cast %31 : vector<1x128x128xf32> to vector<128x128xf32>
    %33 = vector.shape_cast %29 : vector<128x128xf32> to vector<1x128x128xf32>
    tpu.vector_store %arg6[%30, %c0_19, %c0_20], %33 {strides = array<i32>} : memref<8x128x128xf32, #tpu.memory_space<vmem>>, vector<1x128x128xf32>,
    %c1_i32 = arith.constant 1 : i32
    %34 = arith.index_cast %c1_i32 : i32 to index
    %c0_21 = arith.constant 0 : index
    %c0_22 = arith.constant 0 : index
    %35 = vector.load %arg7[%34, %c0_21, %c0_22] : memref<8x8x128xf32, #tpu.memory_space<vmem>>, vector<1x8x128xf32>
    %36 = vector.shape_cast %35 : vector<1x8x128xf32> to vector<8x128xf32>
    %cst_23 = arith.constant dense<0.000000e+00> : vector<128x128xf32>
    %37 = tpu.matmul %36, %22, %cst_23 {dimension_numbers = #tpu.dot_dimension_numbers<[0], [0], [1], [1], [0, 1, 1, 1], [], []>, precision = #tpu.contract_precision<fp32>} : vector<8x128xf32>, vector<8x128xf32>, vector<128x128xf32> -> vector<128x128xf32>
    %38 = vector.broadcast %23 : vector<1x128xf32> to vector<128x128xf32>
    %39 = arith.addf %37, %38 : vector<128x128xf32>
    %40 = arith.index_cast %c1_i32 : i32 to index
    %c0_24 = arith.constant 0 : index
    %c0_25 = arith.constant 0 : index
    %41 = vector.load %arg6[%40, %c0_24, %c0_25] : memref<8x128x128xf32, #tpu.memory_space<vmem>>, vector<1x128x128xf32>
    %42 = vector.shape_cast %41 : vector<1x128x128xf32> to vector<128x128xf32>
    %43 = vector.shape_cast %39 : vector<128x128xf32> to vector<1x128x128xf32>
    tpu.vector_store %arg6[%40, %c0_24, %c0_25], %43 {strides = array<i32>} : memref<8x128x128xf32, #tpu.memory_space<vmem>>, vector<1x128x128xf32>,
    %c2_i32 = arith.constant 2 : i32
    %44 = arith.index_cast %c2_i32 : i32 to index
    %c0_26 = arith.constant 0 : index
    %c0_27 = arith.constant 0 : index
    %45 = vector.load %arg7[%44, %c0_26, %c0_27] : memref<8x8x128xf32, #tpu.memory_space<vmem>>, vector<1x8x128xf32>
    %46 = vector.shape_cast %45 : vector<1x8x128xf32> to vector<8x128xf32>
    %cst_28 = arith.constant dense<0.000000e+00> : vector<128x128xf32>
    %47 = tpu.matmul %46, %22, %cst_28 {dimension_numbers = #tpu.dot_dimension_numbers<[0], [0], [1], [1], [0, 1, 1, 1], [], []>, precision = #tpu.contract_precision<fp32>} : vector<8x128xf32>, vector<8x128xf32>, vector<128x128xf32> -> vector<128x128xf32>
    %48 = vector.broadcast %23 : vector<1x128xf32> to vector<128x128xf32>
    %49 = arith.addf %47, %48 : vector<128x128xf32>
    %50 = arith.index_cast %c2_i32 : i32 to index
    %c0_29 = arith.constant 0 : index
    %c0_30 = arith.constant 0 : index
    %51 = vector.load %arg6[%50, %c0_29, %c0_30] : memref<8x128x128xf32, #tpu.memory_space<vmem>>, vector<1x128x128xf32>
    %52 = vector.shape_cast %51 : vector<1x128x128xf32> to vector<128x128xf32>
    %53 = vector.shape_cast %49 : vector<128x128xf32> to vector<1x128x128xf32>
    tpu.vector_store %arg6[%50, %c0_29, %c0_30], %53 {strides = array<i32>} : memref<8x128x128xf32, #tpu.memory_space<vmem>>, vector<1x128x128xf32>,
    %c3_i32 = arith.constant 3 : i32
    %54 = arith.index_cast %c3_i32 : i32 to index
    %c0_31 = arith.constant 0 : index
    %c0_32 = arith.constant 0 : index
    %55 = vector.load %arg7[%54, %c0_31, %c0_32] : memref<8x8x128xf32, #tpu.memory_space<vmem>>, vector<1x8x128xf32>
    %56 = vector.shape_cast %55 : vector<1x8x128xf32> to vector<8x128xf32>
    %cst_33 = arith.constant dense<0.000000e+00> : vector<128x128xf32>
    %57 = tpu.matmul %56, %22, %cst_33 {dimension_numbers = #tpu.dot_dimension_numbers<[0], [0], [1], [1], [0, 1, 1, 1], [], []>, precision = #tpu.contract_precision<fp32>} : vector<8x128xf32>, vector<8x128xf32>, vector<128x128xf32> -> vector<128x128xf32>
    %58 = vector.broadcast %23 : vector<1x128xf32> to vector<128x128xf32>
    %59 = arith.addf %57, %58 : vector<128x128xf32>
    %60 = arith.index_cast %c3_i32 : i32 to index
    %c0_34 = arith.constant 0 : index
    %c0_35 = arith.constant 0 : index
    %61 = vector.load %arg6[%60, %c0_34, %c0_35] : memref<8x128x128xf32, #tpu.memory_space<vmem>>, vector<1x128x128xf32>
    %62 = vector.shape_cast %61 : vector<1x128x128xf32> to vector<128x128xf32>
    %63 = vector.shape_cast %59 : vector<128x128xf32> to vector<1x128x128xf32>
    tpu.vector_store %arg6[%60, %c0_34, %c0_35], %63 {strides = array<i32>} : memref<8x128x128xf32, #tpu.memory_space<vmem>>, vector<1x128x128xf32>,
    %c4_i32 = arith.constant 4 : i32
    %64 = arith.index_cast %c4_i32 : i32 to index
    %c0_36 = arith.constant 0 : index
    %c0_37 = arith.constant 0 : index
    %65 = vector.load %arg7[%64, %c0_36, %c0_37] : memref<8x8x128xf32, #tpu.memory_space<vmem>>, vector<1x8x128xf32>
    %66 = vector.shape_cast %65 : vector<1x8x128xf32> to vector<8x128xf32>
    %cst_38 = arith.constant dense<0.000000e+00> : vector<128x128xf32>
    %67 = tpu.matmul %66, %22, %cst_38 {dimension_numbers = #tpu.dot_dimension_numbers<[0], [0], [1], [1], [0, 1, 1, 1], [], []>, precision = #tpu.contract_precision<fp32>} : vector<8x128xf32>, vector<8x128xf32>, vector<128x128xf32> -> vector<128x128xf32>
    %68 = vector.broadcast %23 : vector<1x128xf32> to vector<128x128xf32>
    %69 = arith.addf %67, %68 : vector<128x128xf32>
    %70 = arith.index_cast %c4_i32 : i32 to index
    %c0_39 = arith.constant 0 : index
    %c0_40 = arith.constant 0 : index
    %71 = vector.load %arg6[%70, %c0_39, %c0_40] : memref<8x128x128xf32, #tpu.memory_space<vmem>>, vector<1x128x128xf32>
    %72 = vector.shape_cast %71 : vector<1x128x128xf32> to vector<128x128xf32>
    %73 = vector.shape_cast %69 : vector<128x128xf32> to vector<1x128x128xf32>
    tpu.vector_store %arg6[%70, %c0_39, %c0_40], %73 {strides = array<i32>} : memref<8x128x128xf32, #tpu.memory_space<vmem>>, vector<1x128x128xf32>,
    %c5_i32 = arith.constant 5 : i32
    %74 = arith.index_cast %c5_i32 : i32 to index
    %c0_41 = arith.constant 0 : index
    %c0_42 = arith.constant 0 : index
    %75 = vector.load %arg7[%74, %c0_41, %c0_42] : memref<8x8x128xf32, #tpu.memory_space<vmem>>, vector<1x8x128xf32>
    %76 = vector.shape_cast %75 : vector<1x8x128xf32> to vector<8x128xf32>
    %cst_43 = arith.constant dense<0.000000e+00> : vector<128x128xf32>
    %77 = tpu.matmul %76, %22, %cst_43 {dimension_numbers = #tpu.dot_dimension_numbers<[0], [0], [1], [1], [0, 1, 1, 1], [], []>, precision = #tpu.contract_precision<fp32>} : vector<8x128xf32>, vector<8x128xf32>, vector<128x128xf32> -> vector<128x128xf32>
    %78 = vector.broadcast %23 : vector<1x128xf32> to vector<128x128xf32>
    %79 = arith.addf %77, %78 : vector<128x128xf32>
    %80 = arith.index_cast %c5_i32 : i32 to index
    %c0_44 = arith.constant 0 : index
    %c0_45 = arith.constant 0 : index
    %81 = vector.load %arg6[%80, %c0_44, %c0_45] : memref<8x128x128xf32, #tpu.memory_space<vmem>>, vector<1x128x128xf32>
    %82 = vector.shape_cast %81 : vector<1x128x128xf32> to vector<128x128xf32>
    %83 = vector.shape_cast %79 : vector<128x128xf32> to vector<1x128x128xf32>
    tpu.vector_store %arg6[%80, %c0_44, %c0_45], %83 {strides = array<i32>} : memref<8x128x128xf32, #tpu.memory_space<vmem>>, vector<1x128x128xf32>,
    %c6_i32 = arith.constant 6 : i32
    %84 = arith.index_cast %c6_i32 : i32 to index
    %c0_46 = arith.constant 0 : index
    %c0_47 = arith.constant 0 : index
    %85 = vector.load %arg7[%84, %c0_46, %c0_47] : memref<8x8x128xf32, #tpu.memory_space<vmem>>, vector<1x8x128xf32>
    %86 = vector.shape_cast %85 : vector<1x8x128xf32> to vector<8x128xf32>
    %cst_48 = arith.constant dense<0.000000e+00> : vector<128x128xf32>
    %87 = tpu.matmul %86, %22, %cst_48 {dimension_numbers = #tpu.dot_dimension_numbers<[0], [0], [1], [1], [0, 1, 1, 1], [], []>, precision = #tpu.contract_precision<fp32>} : vector<8x128xf32>, vector<8x128xf32>, vector<128x128xf32> -> vector<128x128xf32>
    %88 = vector.broadcast %23 : vector<1x128xf32> to vector<128x128xf32>
    %89 = arith.addf %87, %88 : vector<128x128xf32>
    %90 = arith.index_cast %c6_i32 : i32 to index
    %c0_49 = arith.constant 0 : index
    %c0_50 = arith.constant 0 : index
    %91 = vector.load %arg6[%90, %c0_49, %c0_50] : memref<8x128x128xf32, #tpu.memory_space<vmem>>, vector<1x128x128xf32>
    %92 = vector.shape_cast %91 : vector<1x128x128xf32> to vector<128x128xf32>
    %93 = vector.shape_cast %89 : vector<128x128xf32> to vector<1x128x128xf32>
    tpu.vector_store %arg6[%90, %c0_49, %c0_50], %93 {strides = array<i32>} : memref<8x128x128xf32, #tpu.memory_space<vmem>>, vector<1x128x128xf32>,
    %c7_i32 = arith.constant 7 : i32
    %94 = arith.index_cast %c7_i32 : i32 to index
    %c0_51 = arith.constant 0 : index
    %c0_52 = arith.constant 0 : index
    %95 = vector.load %arg7[%94, %c0_51, %c0_52] : memref<8x8x128xf32, #tpu.memory_space<vmem>>, vector<1x8x128xf32>
    %96 = vector.shape_cast %95 : vector<1x8x128xf32> to vector<8x128xf32>
    %cst_53 = arith.constant dense<0.000000e+00> : vector<128x128xf32>
    %97 = tpu.matmul %96, %22, %cst_53 {dimension_numbers = #tpu.dot_dimension_numbers<[0], [0], [1], [1], [0, 1, 1, 1], [], []>, precision = #tpu.contract_precision<fp32>} : vector<8x128xf32>, vector<8x128xf32>, vector<128x128xf32> -> vector<128x128xf32>
    %98 = vector.broadcast %23 : vector<1x128xf32> to vector<128x128xf32>
    %99 = arith.addf %97, %98 : vector<128x128xf32>
    %100 = arith.index_cast %c7_i32 : i32 to index
    %c0_54 = arith.constant 0 : index
    %c0_55 = arith.constant 0 : index
    %101 = vector.load %arg6[%100, %c0_54, %c0_55] : memref<8x128x128xf32, #tpu.memory_space<vmem>>, vector<1x128x128xf32>
    %102 = vector.shape_cast %101 : vector<1x128x128xf32> to vector<128x128xf32>
    %103 = vector.shape_cast %99 : vector<128x128xf32> to vector<1x128x128xf32>
    tpu.vector_store %arg6[%100, %c0_54, %c0_55], %103 {strides = array<i32>} : memref<8x128x128xf32, #tpu.memory_space<vmem>>, vector<1x128x128xf32>,
    %c8_i32 = arith.constant 8 : i32
    return
  }
  func.func @transform_0(%arg0: i32, %arg1: i32) -> (i32, i32, i32) {
    %c0_i32 = arith.constant 0 : i32
    %c0_i32_0 = arith.constant 0 : i32
    return %arg0, %c0_i32, %arg1 : i32, i32, i32
  }
  func.func @transform_1(%arg0: i32, %arg1: i32) -> (i32, i32, i32) {
    %c0_i32 = arith.constant 0 : i32
    %c0_i32_0 = arith.constant 0 : i32
    %c0_i32_1 = arith.constant 0 : i32
    return %arg0, %c0_i32, %c0_i32_0 : i32, i32, i32
  }
  func.func @transform_2(%arg0: i32, %arg1: i32) -> (i32, i32) {
    %c0_i32 = arith.constant 0 : i32
    %c0_i32_0 = arith.constant 0 : i32
    %c0_i32_1 = arith.constant 0 : i32
    return %c0_i32, %c0_i32_0 : i32, i32
  }
  func.func @transform_3(%arg0: i32, %arg1: i32) -> (i32, i32) {
    %c0_i32 = arith.constant 0 : i32
    %c0_i32_0 = arith.constant 0 : i32
    %c0_i32_1 = arith.constant 0 : i32
    return %c0_i32, %c0_i32_0 : i32, i32
  }
  func.func @transform_4(%arg0: i32, %arg1: i32) -> (i32, i32, i32) {
    %c0_i32 = arith.constant 0 : i32
    %c0_i32_0 = arith.constant 0 : i32
    return %arg0, %arg1, %c0_i32 : i32, i32, i32
  }
}

</mosaic_0001>

<llo_original>
// kernel: tpu_custom_call.1
$region0: #{tpu_custom_call.1}
  #allocation0 [shape = 'u32[]', space=smem, size = 0x4, offset = 0x4, fixed_abs, tag = 'smem constant byte address 0x4 - core index']
  #allocation1 [shape = 'u32[72,128]{1,0:T(1,128)}', space=vmem, size = 0x9000, scoped, tag = 'internal scratch']
  #allocation2 [shape = 'f32[8,8,128]{2,1,0:T(8,128)}', space=vmem, size = 0x8000, scoped, tag = 'scratch operand']
  %s0 = inlined_call_operand.hbm [shape: f32[8,2,128], index: 0, kind: input, shape index: {}]
  %s1 = inlined_call_operand.vmem [shape: f32[8,1,2], index: 1, kind: input, shape index: {}]
  %s2 = inlined_call_operand.vmem [shape: f32[8,128], index: 2, kind: input, shape index: {}]
  %s3 = inlined_call_operand.vmem [shape: f32[1,128], index: 3, kind: input, shape index: {}]
  %s4 = inlined_call_operand.hbm [shape: f32[8,128,128], index: 4, kind: output, shape index: {}]
  %s5 = sld [smem:[#allocation0]]
  $region30: #{tpu_custom_call.1} parent=0
    _
  %s7 = ssub.s32 1, %s5
  %s8 = scalar_select 0, %s7, %s5
  $region1: #{tpu_custom_call.1} parent=0
    #allocation3 [shape = 'u8[8192]{0}', space=vmem, size = 0x2000, scoped, tag = 'input window, operand 0, single buffered']
    #allocation4 [shape = 's32[1]{0}', space=sflag, size = 0x4, scoped, tag = 'scoped memory for tpu_custom_call.1']
    #allocation5 [shape = 's32[1]{0}', space=sflag, size = 0x4, scoped, tag = 'scoped memory for tpu_custom_call.1']
    #allocation6 [shape = 'u8[524288]{0}', space=vmem, size = 0x80000, scoped, tag = 'output window, operand 0, single buffered']
    %9 = vsyncpa [#allocation4], 0
    %10 = vsyncpa [#allocation5], 0
    // Predicated region
    $region2: #{tpu_custom_call.1} parent=1 // pred_check
      _
    $region3: #{tpu_custom_call.1} parent=1 // pred_check_branch
      %12 = sbr.rel (0) target = $region5
    $region4: #{tpu_custom_call.1} parent=1 // pred_region
      %14 = vsyncadd [#allocation4], 0
      %s15 = sshll.u32 %s0, 4
      %s16 = int_to_ptr.hbm [resolvable:$true] %s15
      %s17 = sshll.u32 [#allocation3], 4
      %s18 = int_to_ptr.vmem [resolvable:$true] %s17
      %23 = dma.hbm_to_vmem [thread:$0]  %s16, 256, %s18, [#allocation4], 32, 32, 2
    $region5: #{tpu_custom_call.1} parent=1 // pred_fallthru
      _
    // Predicated region
    $region6: #{tpu_custom_call.1} parent=1 // pred_check
      _
    $region7: #{tpu_custom_call.1} parent=1 // pred_check_branch
      %25 = sbr.rel (0) target = $region9
    $region8: #{tpu_custom_call.1} parent=1 // pred_region
      _
    $region9: #{tpu_custom_call.1} parent=1 // pred_fallthru
      _
    // Predicated region
    $region10: #{tpu_custom_call.1} parent=1 // pred_check
      _
    $region11: #{tpu_custom_call.1} parent=1 // pred_check_branch
      %27 = sbr.rel (0) target = $region13
    $region12: #{tpu_custom_call.1} parent=1 // pred_region
      _
    $region13: #{tpu_custom_call.1} parent=1 // pred_fallthru
      _
    // Predicated region
    $region14: #{tpu_custom_call.1} parent=1 // pred_check
      _
    $region15: #{tpu_custom_call.1} parent=1 // pred_check_branch
      %29 = sbr.rel (0) target = $region17
    $region16: #{tpu_custom_call.1} parent=1 // pred_region
      _
    $region17: #{tpu_custom_call.1} parent=1 // pred_fallthru
      _
    // Predicated region
    $region18: #{tpu_custom_call.1} parent=1 // pred_check
      _
    $region19: #{tpu_custom_call.1} parent=1 // pred_check_branch
      %31 = sbr.rel (0) target = $region21
    $region20: #{tpu_custom_call.1} parent=1 // pred_region
      %33 = dma.done [#allocation4], 256
    $region21: #{tpu_custom_call.1} parent=1 // pred_fallthru
      _
    %v34 = vld [vmem:[#allocation3] sm:$0x3]
    %v35 = vld [vmem:[#allocation3 + $0x2] sm:$0x3]
    %v36 = vld [vmem:[#allocation3 + $0x4] sm:$0x3]
    %v37 = vld [vmem:[#allocation3 + $0x6] sm:$0x3]
    %v38 = vld [vmem:[#allocation3 + $0x8] sm:$0x3]
    %v39 = vld [vmem:[#allocation3 + $0xa] sm:$0x3]
    %v40 = vld [vmem:[#allocation3 + $0xc] sm:$0x3]
    %v41 = vld [vmem:[#allocation3 + $0xe] sm:$0x3]
    %v42 = vld [vmem:[%s1] sm:$0x1]
    %v43 = vld [vmem:[%s1 + $0x1] sm:$0x1]
    %v44 = vld [vmem:[%s1 + $0x2] sm:$0x1]
    %v45 = vld [vmem:[%s1 + $0x3] sm:$0x1]
    %v46 = vld [vmem:[%s1 + $0x4] sm:$0x1]
    %v47 = vld [vmem:[%s1 + $0x5] sm:$0x1]
    %v48 = vld [vmem:[%s1 + $0x6] sm:$0x1]
    %v49 = vld [vmem:[%s1 + $0x7] sm:$0x1]
    %51 = vset.pattern.permute.xlu0 0
    %52 = vperm.xlu0 %51, %v42
    %v53 = vpop.permute.xlu0 %52
    %v55 = vperm.slane %v53, 0
    %57 = vset.pattern.permute.xlu0 0
    %58 = vperm.xlu0 %57, %v43
    %v59 = vpop.permute.xlu0 %58
    %v61 = vperm.slane %v59, 0
    %63 = vset.pattern.permute.xlu0 0
    %64 = vperm.xlu0 %63, %v44
    %v65 = vpop.permute.xlu0 %64
    %v67 = vperm.slane %v65, 0
    %69 = vset.pattern.permute.xlu0 0
    %70 = vperm.xlu0 %69, %v45
    %v71 = vpop.permute.xlu0 %70
    %v73 = vperm.slane %v71, 0
    %75 = vset.pattern.permute.xlu0 0
    %76 = vperm.xlu0 %75, %v46
    %v77 = vpop.permute.xlu0 %76
    %v79 = vperm.slane %v77, 0
    %81 = vset.pattern.permute.xlu0 0
    %82 = vperm.xlu0 %81, %v47
    %v83 = vpop.permute.xlu0 %82
    %v85 = vperm.slane %v83, 0
    %87 = vset.pattern.permute.xlu0 0
    %88 = vperm.xlu0 %87, %v48
    %v89 = vpop.permute.xlu0 %88
    %v91 = vperm.slane %v89, 0
    %93 = vset.pattern.permute.xlu0 0
    %94 = vperm.xlu0 %93, %v49
    %v95 = vpop.permute.xlu0 %94
    %v97 = vperm.slane %v95, 0
    %v98 = vsub.f32 %v34, %v55
    %v99 = vsub.f32 %v35, %v61
    %v100 = vsub.f32 %v36, %v67
    %v101 = vsub.f32 %v37, %v73
    %v102 = vsub.f32 %v38, %v79
    %v103 = vsub.f32 %v39, %v85
    %v104 = vsub.f32 %v40, %v91
    %v105 = vsub.f32 %v41, %v97
    %v106 = vand.u32 2147483647, %v98
    %v107 = vand.u32 2147483647, %v99
    %v108 = vand.u32 2147483647, %v100
    %v109 = vand.u32 2147483647, %v101
    %v110 = vand.u32 2147483647, %v102
    %v111 = vand.u32 2147483647, %v103
    %v112 = vand.u32 2147483647, %v104
    %v113 = vand.u32 2147483647, %v105
    %114 = vset.pattern.permute.xlu0 1
    %115 = vperm.xlu0 %114, %v42
    %v116 = vpop.permute.xlu0 %115
    %v118 = vperm.slane %v116, 0
    %119 = vset.pattern.permute.xlu0 1
    %120 = vperm.xlu0 %119, %v43
    %v121 = vpop.permute.xlu0 %120
    %v123 = vperm.slane %v121, 0
    %124 = vset.pattern.permute.xlu0 1
    %125 = vperm.xlu0 %124, %v44
    %v126 = vpop.permute.xlu0 %125
    %v128 = vperm.slane %v126, 0
    %129 = vset.pattern.permute.xlu0 1
    %130 = vperm.xlu0 %129, %v45
    %v131 = vpop.permute.xlu0 %130
    %v133 = vperm.slane %v131, 0
    %134 = vset.pattern.permute.xlu0 1
    %135 = vperm.xlu0 %134, %v46
    %v136 = vpop.permute.xlu0 %135
    %v138 = vperm.slane %v136, 0
    %139 = vset.pattern.permute.xlu0 1
    %140 = vperm.xlu0 %139, %v47
    %v141 = vpop.permute.xlu0 %140
    %v143 = vperm.slane %v141, 0
    %144 = vset.pattern.permute.xlu0 1
    %145 = vperm.xlu0 %144, %v48
    %v146 = vpop.permute.xlu0 %145
    %v148 = vperm.slane %v146, 0
    %149 = vset.pattern.permute.xlu0 1
    %150 = vperm.xlu0 %149, %v49
    %v151 = vpop.permute.xlu0 %150
    %v153 = vperm.slane %v151, 0
    %v154 = vsub.f32 %v34, %v118
    %v155 = vsub.f32 %v35, %v123
    %v156 = vsub.f32 %v36, %v128
    %v157 = vsub.f32 %v37, %v133
    %v158 = vsub.f32 %v38, %v138
    %v159 = vsub.f32 %v39, %v143
    %v160 = vsub.f32 %v40, %v148
    %v161 = vsub.f32 %v41, %v153
    %v162 = vand.u32 2147483647, %v154
    %v163 = vand.u32 2147483647, %v155
    %v164 = vand.u32 2147483647, %v156
    %v165 = vand.u32 2147483647, %v157
    %v166 = vand.u32 2147483647, %v158
    %v167 = vand.u32 2147483647, %v159
    %v168 = vand.u32 2147483647, %v160
    %v169 = vand.u32 2147483647, %v161
    %v178 = vrot.slane %v162, 1
    %v179 = vrot.slane %v163, 1
    %v180 = vrot.slane %v164, 1
    %v181 = vrot.slane %v165, 1
    %v182 = vrot.slane %v166, 1
    %v183 = vrot.slane %v167, 1
    %v184 = vrot.slane %v168, 1
    %v185 = vrot.slane %v169, 1
    %v194 = vadd.f32 %v106, %v178
    %v195 = vadd.f32 %v107, %v179
    %v196 = vadd.f32 %v108, %v180
    %v197 = vadd.f32 %v109, %v181
    %v198 = vadd.f32 %v110, %v182
    %v199 = vadd.f32 %v111, %v183
    %v200 = vadd.f32 %v112, %v184
    %v201 = vadd.f32 %v113, %v185
    %202 = vst [vmem:[#allocation2 + $0x3] sm:$0x1f] 0.0
    %203 = vst [vmem:[#allocation2 + $0xb] sm:$0x1f] 0.0
    %204 = vst [vmem:[#allocation2 + $0x13] sm:$0x1f] 0.0
    %205 = vst [vmem:[#allocation2 + $0x1b] sm:$0x1f] 0.0
    %206 = vst [vmem:[#allocation2 + $0x23] sm:$0x1f] 0.0
    %207 = vst [vmem:[#allocation2 + $0x2b] sm:$0x1f] 0.0
    %208 = vst [vmem:[#allocation2 + $0x33] sm:$0x1f] 0.0
    %209 = vst [vmem:[#allocation2 + $0x3b] sm:$0x1f] 0.0
    %210 = vst [vmem:[#allocation2] sm:$0x3] %v34
    %211 = vst [vmem:[#allocation2 + $0x8] sm:$0x3] %v35
    %212 = vst [vmem:[#allocation2 + $0x10] sm:$0x3] %v36
    %213 = vst [vmem:[#allocation2 + $0x18] sm:$0x3] %v37
    %214 = vst [vmem:[#allocation2 + $0x20] sm:$0x3] %v38
    %215 = vst [vmem:[#allocation2 + $0x28] sm:$0x3] %v39
    %216 = vst [vmem:[#allocation2 + $0x30] sm:$0x3] %v40
    %217 = vst [vmem:[#allocation2 + $0x38] sm:$0x3] %v41
    %218 = vst [vmem:[#allocation2 + $0x2] sm:$0x1] %v194
    %219 = vst [vmem:[#allocation2 + $0xa] sm:$0x1] %v195
    %220 = vst [vmem:[#allocation2 + $0x12] sm:$0x1] %v196
    %221 = vst [vmem:[#allocation2 + $0x1a] sm:$0x1] %v197
    %222 = vst [vmem:[#allocation2 + $0x22] sm:$0x1] %v198
    %223 = vst [vmem:[#allocation2 + $0x2a] sm:$0x1] %v199
    %224 = vst [vmem:[#allocation2 + $0x32] sm:$0x1] %v200
    %225 = vst [vmem:[#allocation2 + $0x3a] sm:$0x1] %v201
    %v226 = vld [vmem:[%s2] sm:$0xff]
    %v227 = vld [vmem:[%s3] sm:$0x1]
    %v228 = vld [vmem:[#allocation2] sm:$0xff]
    %v230 = vperm.slane %v227, 0
    %232 = vxpose.xlu0.b32.start [1/16] %v228, 128
    %233 = vxpose.xlu0.b32.cont [2/16] 0.0, 128
    %234 = vxpose.xlu0.b32.cont [3/16] 0.0, 128
    %235 = vxpose.xlu0.b32.cont [4/16] 0.0, 128
    %236 = vxpose.xlu0.b32.cont [5/16] 0.0, 128
    %237 = vxpose.xlu0.b32.cont [6/16] 0.0, 128
    %238 = vxpose.xlu0.b32.cont [7/16] 0.0, 128
    %239 = vxpose.xlu0.b32.cont [8/16] 0.0, 128
    %240 = vxpose.xlu0.b32.cont [9/16] 0.0, 128
    %241 = vxpose.xlu0.b32.cont [10/16] 0.0, 128
    %242 = vxpose.xlu0.b32.cont [11/16] 0.0, 128
    %243 = vxpose.xlu0.b32.cont [12/16] 0.0, 128
    %244 = vxpose.xlu0.b32.cont [13/16] 0.0, 128
    %245 = vxpose.xlu0.b32.cont [14/16] 0.0, 128
    %246 = vxpose.xlu0.b32.cont [15/16] 0.0, 128
    %247 = vxpose.xlu0.b32.end [16/16] 0.0, 128
    %v248 = vpop.trf.xlu0
    %v249 = vpop.trf.xlu0
    %v250 = vpop.trf.xlu0
    %v251 = vpop.trf.xlu0
    %v252 = vpop.trf.xlu0
    %v253 = vpop.trf.xlu0
    %v254 = vpop.trf.xlu0
    %v255 = vpop.trf.xlu0
    %v256 = vpop.trf.xlu0
    %v257 = vpop.trf.xlu0
    %v258 = vpop.trf.xlu0
    %v259 = vpop.trf.xlu0
    %v260 = vpop.trf.xlu0
    %v261 = vpop.trf.xlu0
    %v262 = vpop.trf.xlu0
    %v263 = vpop.trf.xlu0
    %vm264 = vcmask 64512
    %v266 = vsel %vm264, %v248, 0
    %v269 = vsel %vm264, %v249, 0
    %v272 = vsel %vm264, %v250, 0
    %v275 = vsel %vm264, %v251, 0
    %v278 = vsel %vm264, %v252, 0
    %v281 = vsel %vm264, %v253, 0
    %v284 = vsel %vm264, %v254, 0
    %v287 = vsel %vm264, %v255, 0
    %v290 = vsel %vm264, %v256, 0
    %v293 = vsel %vm264, %v257, 0
    %v296 = vsel %vm264, %v258, 0
    %v299 = vsel %vm264, %v259, 0
    %v302 = vsel %vm264, %v260, 0
    %v305 = vsel %vm264, %v261, 0
    %v308 = vsel %vm264, %v262, 0
    %v311 = vsel %vm264, %v263, 0
    %313 = vmatpush.msra.mxu0 0.0
    %314 = vmatpush.msra.mxu0 0.0
    %315 = vmatpush.msra.mxu0 0.0
    %316 = vmatpush.msra.mxu0 0.0
    %317 = vmatpush.msra.mxu0 0.0
    %318 = vmatpush.msra.mxu0 0.0
    %319 = vmatpush.msra.mxu0 0.0
    %320 = vmatpush.msra.mxu0 0.0
    %321 = vmatpush.msra.mxu0 0.0
    %322 = vmatpush.msra.mxu0 0.0
    %323 = vmatpush.msra.mxu0 0.0
    %324 = vmatpush.msra.mxu0 0.0
    %325 = vmatpush.msra.mxu0 0.0
    %326 = vmatpush.msra.mxu0 0.0
    %327 = vmatpush.msra.mxu0 0.0
    %v328 = vand.u32 %v226, 4294901760
    %329 = vmatpush.msra.mxu0 %v328
    %v330 = vand.u32 %v266, 4294901760
    %v331 = vsub.f32 %v266, %v330
    %v332 = vand.u32 %v331, 4294901760
    %v333 = vsub.f32 %v331, %v332
    %v334 = vand.u32 %v333, 4294901760
    %335 = vmatmul.f32.gmra.mxu0 %v334
    %v336 = vpop.f32.mrf.mxu0
    %v337 = vadd.f32 %v230, %v336
    %v338 = vand.u32 %v269, 4294901760
    %v339 = vsub.f32 %v269, %v338
    %v340 = vand.u32 %v339, 4294901760
    %v341 = vsub.f32 %v339, %v340
    %v342 = vand.u32 %v341, 4294901760
    %343 = vmatmul.f32.gmra.mxu0 %v342
    %v344 = vpop.f32.mrf.mxu0
    %v345 = vadd.f32 %v230, %v344
    %v346 = vand.u32 %v272, 4294901760
    %v347 = vsub.f32 %v272, %v346
    %v348 = vand.u32 %v347, 4294901760
    %v349 = vsub.f32 %v347, %v348
    %v350 = vand.u32 %v349, 4294901760
    %351 = vmatmul.f32.gmra.mxu0 %v350
    %v352 = vpop.f32.mrf.mxu0
    %v353 = vadd.f32 %v230, %v352
    %v354 = vand.u32 %v275, 4294901760
    %v355 = vsub.f32 %v275, %v354
    %v356 = vand.u32 %v355, 4294901760
    %v357 = vsub.f32 %v355, %v356
    %v358 = vand.u32 %v357, 4294901760
    %359 = vmatmul.f32.gmra.mxu0 %v358
    %v360 = vpop.f32.mrf.mxu0
    %v361 = vadd.f32 %v230, %v360
    %v362 = vand.u32 %v278, 4294901760
    %v363 = vsub.f32 %v278, %v362
    %v364 = vand.u32 %v363, 4294901760
    %v365 = vsub.f32 %v363, %v364
    %v366 = vand.u32 %v365, 4294901760
    %367 = vmatmul.f32.gmra.mxu0 %v366
    %v368 = vpop.f32.mrf.mxu0
    %v369 = vadd.f32 %v230, %v368
    %v370 = vand.u32 %v281, 4294901760
    %v371 = vsub.f32 %v281, %v370
    %v372 = vand.u32 %v371, 4294901760
    %v373 = vsub.f32 %v371, %v372
    %v374 = vand.u32 %v373, 4294901760
    %375 = vmatmul.f32.gmra.mxu0 %v374
    %v376 = vpop.f32.mrf.mxu0
    %v377 = vadd.f32 %v230, %v376
    %v378 = vand.u32 %v284, 4294901760
    %v379 = vsub.f32 %v284, %v378
    %v380 = vand.u32 %v379, 4294901760
    %v381 = vsub.f32 %v379, %v380
    %v382 = vand.u32 %v381, 4294901760
    %383 = vmatmul.f32.gmra.mxu0 %v382
    %v384 = vpop.f32.mrf.mxu0
    %v385 = vadd.f32 %v230, %v384
    %v386 = vand.u32 %v287, 4294901760
    %v387 = vsub.f32 %v287, %v386
    %v388 = vand.u32 %v387, 4294901760
    %v389 = vsub.f32 %v387, %v388
    %v390 = vand.u32 %v389, 4294901760
    %391 = vmatmul.f32.gmra.mxu0 %v390
    %v392 = vpop.f32.mrf.mxu0
    %v393 = vadd.f32 %v230, %v392
    %v394 = vand.u32 %v290, 4294901760
    %v395 = vsub.f32 %v290, %v394
    %v396 = vand.u32 %v395, 4294901760
    %v397 = vsub.f32 %v395, %v396
    %v398 = vand.u32 %v397, 4294901760
    %399 = vmatmul.f32.gmra.mxu0 %v398
    %v400 = vpop.f32.mrf.mxu0
    %v401 = vadd.f32 %v230, %v400
    %v402 = vand.u32 %v293, 4294901760
    %v403 = vsub.f32 %v293, %v402
    %v404 = vand.u32 %v403, 4294901760
    %v405 = vsub.f32 %v403, %v404
    %v406 = vand.u32 %v405, 4294901760
    %407 = vmatmul.f32.gmra.mxu0 %v406
    %v408 = vpop.f32.mrf.mxu0
    %v409 = vadd.f32 %v230, %v408
    %v410 = vand.u32 %v296, 4294901760
    %v411 = vsub.f32 %v296, %v410
    %v412 = vand.u32 %v411, 4294901760
    %v413 = vsub.f32 %v411, %v412
    %v414 = vand.u32 %v413, 4294901760
    %415 = vmatmul.f32.gmra.mxu0 %v414
    %v416 = vpop.f32.mrf.mxu0
    %v417 = vadd.f32 %v230, %v416
    %v418 = vand.u32 %v299, 4294901760
    %v419 = vsub.f32 %v299, %v418
    %v420 = vand.u32 %v419, 4294901760
    %v421 = vsub.f32 %v419, %v420
    %v422 = vand.u32 %v421, 4294901760
    %423 = vmatmul.f32.gmra.mxu0 %v422
    %v424 = vpop.f32.mrf.mxu0
    %v425 = vadd.f32 %v230, %v424
    %v426 = vand.u32 %v302, 4294901760
    %v427 = vsub.f32 %v302, %v426
    %v428 = vand.u32 %v427, 4294901760
    %v429 = vsub.f32 %v427, %v428
    %v430 = vand.u32 %v429, 4294901760
    %431 = vmatmul.f32.gmra.mxu0 %v430
    %v432 = vpop.f32.mrf.mxu0
    %v433 = vadd.f32 %v230, %v432
    %v434 = vand.u32 %v305, 4294901760
    %v435 = vsub.f32 %v305, %v434
    %v436 = vand.u32 %v435, 4294901760
    %v437 = vsub.f32 %v435, %v436
    %v438 = vand.u32 %v437, 4294901760
    %439 = vmatmul.f32.gmra.mxu0 %v438
    %v440 = vpop.f32.mrf.mxu0
    %v441 = vadd.f32 %v230, %v440
    %v442 = vand.u32 %v308, 4294901760
    %v443 = vsub.f32 %v308, %v442
    %v444 = vand.u32 %v443, 4294901760
    %v445 = vsub.f32 %v443, %v444
    %v446 = vand.u32 %v445, 4294901760
    %447 = vmatmul.f32.gmra.mxu0 %v446
    %v448 = vpop.f32.mrf.mxu0
    %v449 = vadd.f32 %v230, %v448
    %v450 = vand.u32 %v311, 4294901760
    %v451 = vsub.f32 %v311, %v450
    %v452 = vand.u32 %v451, 4294901760
    %v453 = vsub.f32 %v451, %v452
    %v454 = vand.u32 %v453, 4294901760
    %455 = vmatmul.f32.gmra.mxu0 %v454
    %v456 = vpop.f32.mrf.mxu0
    %v457 = vadd.f32 %v230, %v456
    %458 = vdwg.mxu0
    %459 = vmatpush.msra.mxu0 0.0
    %460 = vmatpush.msra.mxu0 0.0
    %461 = vmatpush.msra.mxu0 0.0
    %462 = vmatpush.msra.mxu0 0.0
    %463 = vmatpush.msra.mxu0 0.0
    %464 = vmatpush.msra.mxu0 0.0
    %465 = vmatpush.msra.mxu0 0.0
    %466 = vmatpush.msra.mxu0 0.0
    %467 = vmatpush.msra.mxu0 0.0
    %468 = vmatpush.msra.mxu0 0.0
    %469 = vmatpush.msra.mxu0 0.0
    %470 = vmatpush.msra.mxu0 0.0
    %471 = vmatpush.msra.mxu0 0.0
    %472 = vmatpush.msra.mxu0 0.0
    %473 = vmatpush.msra.mxu0 0.0
    %v474 = vand.u32 %v226, 4294901760
    %v475 = vsub.f32 %v226, %v474
    %v476 = vand.u32 %v475, 4294901760
    %v477 = vsub.f32 %v475, %v476
    %v478 = vand.u32 %v477, 4294901760
    %479 = vmatpush.msra.mxu0 %v478
    %v480 = vand.u32 %v266, 4294901760
    %481 = vmatmul.f32.gmra.mxu0 %v480
    %v482 = vpop.f32.mrf.mxu0
    %v483 = vadd.f32 %v337, %v482
    %v484 = vand.u32 %v269, 4294901760
    %485 = vmatmul.f32.gmra.mxu0 %v484
    %v486 = vpop.f32.mrf.mxu0
    %v487 = vadd.f32 %v345, %v486
    %v488 = vand.u32 %v272, 4294901760
    %489 = vmatmul.f32.gmra.mxu0 %v488
    %v490 = vpop.f32.mrf.mxu0
    %v491 = vadd.f32 %v353, %v490
    %v492 = vand.u32 %v275, 4294901760
    %493 = vmatmul.f32.gmra.mxu0 %v492
    %v494 = vpop.f32.mrf.mxu0
    %v495 = vadd.f32 %v361, %v494
    %v496 = vand.u32 %v278, 4294901760
    %497 = vmatmul.f32.gmra.mxu0 %v496
    %v498 = vpop.f32.mrf.mxu0
    %v499 = vadd.f32 %v369, %v498
    %v500 = vand.u32 %v281, 4294901760
    %501 = vmatmul.f32.gmra.mxu0 %v500
    %v502 = vpop.f32.mrf.mxu0
    %v503 = vadd.f32 %v377, %v502
    %v504 = vand.u32 %v284, 4294901760
    %505 = vmatmul.f32.gmra.mxu0 %v504
    %v506 = vpop.f32.mrf.mxu0
    %v507 = vadd.f32 %v385, %v506
    %v508 = vand.u32 %v287, 4294901760
    %509 = vmatmul.f32.gmra.mxu0 %v508
    %v510 = vpop.f32.mrf.mxu0
    %v511 = vadd.f32 %v393, %v510
    %v512 = vand.u32 %v290, 4294901760
    %513 = vmatmul.f32.gmra.mxu0 %v512
    %v514 = vpop.f32.mrf.mxu0
    %v515 = vadd.f32 %v401, %v514
    %v516 = vand.u32 %v293, 4294901760
    %517 = vmatmul.f32.gmra.mxu0 %v516
    %v518 = vpop.f32.mrf.mxu0
    %v519 = vadd.f32 %v409, %v518
    %v520 = vand.u32 %v296, 4294901760
    %521 = vmatmul.f32.gmra.mxu0 %v520
    %v522 = vpop.f32.mrf.mxu0
    %v523 = vadd.f32 %v417, %v522
    %v524 = vand.u32 %v299, 4294901760
    %525 = vmatmul.f32.gmra.mxu0 %v524
    %v526 = vpop.f32.mrf.mxu0
    %v527 = vadd.f32 %v425, %v526
    %v528 = vand.u32 %v302, 4294901760
    %529 = vmatmul.f32.gmra.mxu0 %v528
    %v530 = vpop.f32.mrf.mxu0
    %v531 = vadd.f32 %v433, %v530
    %v532 = vand.u32 %v305, 4294901760
    %533 = vmatmul.f32.gmra.mxu0 %v532
    %v534 = vpop.f32.mrf.mxu0
    %v535 = vadd.f32 %v441, %v534
    %v536 = vand.u32 %v308, 4294901760
    %537 = vmatmul.f32.gmra.mxu0 %v536
    %v538 = vpop.f32.mrf.mxu0
    %v539 = vadd.f32 %v449, %v538
    %v540 = vand.u32 %v311, 4294901760
    %541 = vmatmul.f32.gmra.mxu0 %v540
    %v542 = vpop.f32.mrf.mxu0
    %v543 = vadd.f32 %v457, %v542
    %544 = vdwg.mxu0
    %545 = vmatpush.msra.mxu0 0.0
    %546 = vmatpush.msra.mxu0 0.0
    %547 = vmatpush.msra.mxu0 0.0
    %548 = vmatpush.msra.mxu0 0.0
    %549 = vmatpush.msra.mxu0 0.0
    %550 = vmatpush.msra.mxu0 0.0
    %551 = vmatpush.msra.mxu0 0.0
    %552 = vmatpush.msra.mxu0 0.0
    %553 = vmatpush.msra.mxu0 0.0
    %554 = vmatpush.msra.mxu0 0.0
    %555 = vmatpush.msra.mxu0 0.0
    %556 = vmatpush.msra.mxu0 0.0
    %557 = vmatpush.msra.mxu0 0.0
    %558 = vmatpush.msra.mxu0 0.0
    %559 = vmatpush.msra.mxu0 0.0
    %v560 = vand.u32 %v226, 4294901760
    %v561 = vsub.f32 %v226, %v560
    %562 = vmatpush.msra.mxu0 %v561
    %v563 = vand.u32 %v266, 4294901760
    %v564 = vsub.f32 %v266, %v563
    %565 = vmatmul.f32.gmra.mxu0 %v564
    %v566 = vpop.f32.mrf.mxu0
    %v567 = vadd.f32 %v483, %v566
    %v568 = vand.u32 %v269, 4294901760
    %v569 = vsub.f32 %v269, %v568
    %570 = vmatmul.f32.gmra.mxu0 %v569
    %v571 = vpop.f32.mrf.mxu0
    %v572 = vadd.f32 %v487, %v571
    %v573 = vand.u32 %v272, 4294901760
    %v574 = vsub.f32 %v272, %v573
    %575 = vmatmul.f32.gmra.mxu0 %v574
    %v576 = vpop.f32.mrf.mxu0
    %v577 = vadd.f32 %v491, %v576
    %v578 = vand.u32 %v275, 4294901760
    %v579 = vsub.f32 %v275, %v578
    %580 = vmatmul.f32.gmra.mxu0 %v579
    %v581 = vpop.f32.mrf.mxu0
    %v582 = vadd.f32 %v495, %v581
    %v583 = vand.u32 %v278, 4294901760
    %v584 = vsub.f32 %v278, %v583
    %585 = vmatmul.f32.gmra.mxu0 %v584
    %v586 = vpop.f32.mrf.mxu0
    %v587 = vadd.f32 %v499, %v586
    %v588 = vand.u32 %v281, 4294901760
    %v589 = vsub.f32 %v281, %v588
    %590 = vmatmul.f32.gmra.mxu0 %v589
    %v591 = vpop.f32.mrf.mxu0
    %v592 = vadd.f32 %v503, %v591
    %v593 = vand.u32 %v284, 4294901760
    %v594 = vsub.f32 %v284, %v593
    %595 = vmatmul.f32.gmra.mxu0 %v594
    %v596 = vpop.f32.mrf.mxu0
    %v597 = vadd.f32 %v507, %v596
    %v598 = vand.u32 %v287, 4294901760
    %v599 = vsub.f32 %v287, %v598
    %600 = vmatmul.f32.gmra.mxu0 %v599
    %v601 = vpop.f32.mrf.mxu0
    %v602 = vadd.f32 %v511, %v601
    %v603 = vand.u32 %v290, 4294901760
    %v604 = vsub.f32 %v290, %v603
    %605 = vmatmul.f32.gmra.mxu0 %v604
    %v606 = vpop.f32.mrf.mxu0
    %v607 = vadd.f32 %v515, %v606
    %v608 = vand.u32 %v293, 4294901760
    %v609 = vsub.f32 %v293, %v608
    %610 = vmatmul.f32.gmra.mxu0 %v609
    %v611 = vpop.f32.mrf.mxu0
    %v612 = vadd.f32 %v519, %v611
    %v613 = vand.u32 %v296, 4294901760
    %v614 = vsub.f32 %v296, %v613
    %615 = vmatmul.f32.gmra.mxu0 %v614
    %v616 = vpop.f32.mrf.mxu0
    %v617 = vadd.f32 %v523, %v616
    %v618 = vand.u32 %v299, 4294901760
    %v619 = vsub.f32 %v299, %v618
    %620 = vmatmul.f32.gmra.mxu0 %v619
    %v621 = vpop.f32.mrf.mxu0
    %v622 = vadd.f32 %v527, %v621
    %v623 = vand.u32 %v302, 4294901760
    %v624 = vsub.f32 %v302, %v623
    %625 = vmatmul.f32.gmra.mxu0 %v624
    %v626 = vpop.f32.mrf.mxu0
    %v627 = vadd.f32 %v531, %v626
    %v628 = vand.u32 %v305, 4294901760
    %v629 = vsub.f32 %v305, %v628
    %630 = vmatmul.f32.gmra.mxu0 %v629
    %v631 = vpop.f32.mrf.mxu0
    %v632 = vadd.f32 %v535, %v631
    %v633 = vand.u32 %v308, 4294901760
    %v634 = vsub.f32 %v308, %v633
    %635 = vmatmul.f32.gmra.mxu0 %v634
    %v636 = vpop.f32.mrf.mxu0
    %v637 = vadd.f32 %v539, %v636
    %v638 = vand.u32 %v311, 4294901760
    %v639 = vsub.f32 %v311, %v638
    %640 = vmatmul.f32.gmra.mxu0 %v639
    %v641 = vpop.f32.mrf.mxu0
    %v642 = vadd.f32 %v543, %v641
    %643 = vdwg.mxu0
    %644 = vmatpush.msra.mxu0 0.0
    %645 = vmatpush.msra.mxu0 0.0
    %646 = vmatpush.msra.mxu0 0.0
    %647 = vmatpush.msra.mxu0 0.0
    %648 = vmatpush.msra.mxu0 0.0
    %649 = vmatpush.msra.mxu0 0.0
    %650 = vmatpush.msra.mxu0 0.0
    %651 = vmatpush.msra.mxu0 0.0
    %652 = vmatpush.msra.mxu0 0.0
    %653 = vmatpush.msra.mxu0 0.0
    %654 = vmatpush.msra.mxu0 0.0
    %655 = vmatpush.msra.mxu0 0.0
    %656 = vmatpush.msra.mxu0 0.0
    %657 = vmatpush.msra.mxu0 0.0
    %658 = vmatpush.msra.mxu0 0.0
    %v659 = vand.u32 %v226, 4294901760
    %660 = vmatpush.msra.mxu0 %v659
    %v661 = vand.u32 %v266, 4294901760
    %v662 = vsub.f32 %v266, %v661
    %v663 = vand.u32 %v662, 4294901760
    %664 = vmatmul.f32.gmra.mxu0 %v663
    %v665 = vpop.f32.mrf.mxu0
    %v666 = vadd.f32 %v567, %v665
    %v667 = vand.u32 %v269, 4294901760
    %v668 = vsub.f32 %v269, %v667
    %v669 = vand.u32 %v668, 4294901760
    %670 = vmatmul.f32.gmra.mxu0 %v669
    %v671 = vpop.f32.mrf.mxu0
    %v672 = vadd.f32 %v572, %v671
    %v673 = vand.u32 %v272, 4294901760
    %v674 = vsub.f32 %v272, %v673
    %v675 = vand.u32 %v674, 4294901760
    %676 = vmatmul.f32.gmra.mxu0 %v675
    %v677 = vpop.f32.mrf.mxu0
    %v678 = vadd.f32 %v577, %v677
    %v679 = vand.u32 %v275, 4294901760
    %v680 = vsub.f32 %v275, %v679
    %v681 = vand.u32 %v680, 4294901760
    %682 = vmatmul.f32.gmra.mxu0 %v681
    %v683 = vpop.f32.mrf.mxu0
    %v684 = vadd.f32 %v582, %v683
    %v685 = vand.u32 %v278, 4294901760
    %v686 = vsub.f32 %v278, %v685
    %v687 = vand.u32 %v686, 4294901760
    %688 = vmatmul.f32.gmra.mxu0 %v687
    %v689 = vpop.f32.mrf.mxu0
    %v690 = vadd.f32 %v587, %v689
    %v691 = vand.u32 %v281, 4294901760
    %v692 = vsub.f32 %v281, %v691
    %v693 = vand.u32 %v692, 4294901760
    %694 = vmatmul.f32.gmra.mxu0 %v693
    %v695 = vpop.f32.mrf.mxu0
    %v696 = vadd.f32 %v592, %v695
    %v697 = vand.u32 %v284, 4294901760
    %v698 = vsub.f32 %v284, %v697
    %v699 = vand.u32 %v698, 4294901760
    %700 = vmatmul.f32.gmra.mxu0 %v699
    %v701 = vpop.f32.mrf.mxu0
    %v702 = vadd.f32 %v597, %v701
    %v703 = vand.u32 %v287, 4294901760
    %v704 = vsub.f32 %v287, %v703
    %v705 = vand.u32 %v704, 4294901760
    %706 = vmatmul.f32.gmra.mxu0 %v705
    %v707 = vpop.f32.mrf.mxu0
    %v708 = vadd.f32 %v602, %v707
    %v709 = vand.u32 %v290, 4294901760
    %v710 = vsub.f32 %v290, %v709
    %v711 = vand.u32 %v710, 4294901760
    %712 = vmatmul.f32.gmra.mxu0 %v711
    %v713 = vpop.f32.mrf.mxu0
    %v714 = vadd.f32 %v607, %v713
    %v715 = vand.u32 %v293, 4294901760
    %v716 = vsub.f32 %v293, %v715
    %v717 = vand.u32 %v716, 4294901760
    %718 = vmatmul.f32.gmra.mxu0 %v717
    %v719 = vpop.f32.mrf.mxu0
    %v720 = vadd.f32 %v612, %v719
    %v721 = vand.u32 %v296, 4294901760
    %v722 = vsub.f32 %v296, %v721
    %v723 = vand.u32 %v722, 4294901760
    %724 = vmatmul.f32.gmra.mxu0 %v723
    %v725 = vpop.f32.mrf.mxu0
    %v726 = vadd.f32 %v617, %v725
    %v727 = vand.u32 %v299, 4294901760
    %v728 = vsub.f32 %v299, %v727
    %v729 = vand.u32 %v728, 4294901760
    %730 = vmatmul.f32.gmra.mxu0 %v729
    %v731 = vpop.f32.mrf.mxu0
    %v732 = vadd.f32 %v622, %v731
    %v733 = vand.u32 %v302, 4294901760
    %v734 = vsub.f32 %v302, %v733
    %v735 = vand.u32 %v734, 4294901760
    %736 = vmatmul.f32.gmra.mxu0 %v735
    %v737 = vpop.f32.mrf.mxu0
    %v738 = vadd.f32 %v627, %v737
    %v739 = vand.u32 %v305, 4294901760
    %v740 = vsub.f32 %v305, %v739
    %v741 = vand.u32 %v740, 4294901760
    %742 = vmatmul.f32.gmra.mxu0 %v741
    %v743 = vpop.f32.mrf.mxu0
    %v744 = vadd.f32 %v632, %v743
    %v745 = vand.u32 %v308, 4294901760
    %v746 = vsub.f32 %v308, %v745
    %v747 = vand.u32 %v746, 4294901760
    %748 = vmatmul.f32.gmra.mxu0 %v747
    %v749 = vpop.f32.mrf.mxu0
    %v750 = vadd.f32 %v637, %v749
    %v751 = vand.u32 %v311, 4294901760
    %v752 = vsub.f32 %v311, %v751
    %v753 = vand.u32 %v752, 4294901760
    %754 = vmatmul.f32.gmra.mxu0 %v753
    %v755 = vpop.f32.mrf.mxu0
    %v756 = vadd.f32 %v642, %v755
    %757 = vdwg.mxu0
    %758 = vmatpush.msra.mxu0 0.0
    %759 = vmatpush.msra.mxu0 0.0
    %760 = vmatpush.msra.mxu0 0.0
    %761 = vmatpush.msra.mxu0 0.0
    %762 = vmatpush.msra.mxu0 0.0
    %763 = vmatpush.msra.mxu0 0.0
    %764 = vmatpush.msra.mxu0 0.0
    %765 = vmatpush.msra.mxu0 0.0
    %766 = vmatpush.msra.mxu0 0.0
    %767 = vmatpush.msra.mxu0 0.0
    %768 = vmatpush.msra.mxu0 0.0
    %769 = vmatpush.msra.mxu0 0.0
    %770 = vmatpush.msra.mxu0 0.0
    %771 = vmatpush.msra.mxu0 0.0
    %772 = vmatpush.msra.mxu0 0.0
    %v773 = vand.u32 %v226, 4294901760
    %v774 = vsub.f32 %v226, %v773
    %v775 = vand.u32 %v774, 4294901760
    %776 = vmatpush.msra.mxu0 %v775
    %v777 = vand.u32 %v266, 4294901760
    %778 = vmatmul.f32.gmra.mxu0 %v777
    %v779 = vpop.f32.mrf.mxu0
    %v780 = vadd.f32 %v666, %v779
    %v781 = vand.u32 %v269, 4294901760
    %782 = vmatmul.f32.gmra.mxu0 %v781
    %v783 = vpop.f32.mrf.mxu0
    %v784 = vadd.f32 %v672, %v783
    %v785 = vand.u32 %v272, 4294901760
    %786 = vmatmul.f32.gmra.mxu0 %v785
    %v787 = vpop.f32.mrf.mxu0
    %v788 = vadd.f32 %v678, %v787
    %v789 = vand.u32 %v275, 4294901760
    %790 = vmatmul.f32.gmra.mxu0 %v789
    %v791 = vpop.f32.mrf.mxu0
    %v792 = vadd.f32 %v684, %v791
    %v793 = vand.u32 %v278, 4294901760
    %794 = vmatmul.f32.gmra.mxu0 %v793
    %v795 = vpop.f32.mrf.mxu0
    %v796 = vadd.f32 %v690, %v795
    %v797 = vand.u32 %v281, 4294901760
    %798 = vmatmul.f32.gmra.mxu0 %v797
    %v799 = vpop.f32.mrf.mxu0
    %v800 = vadd.f32 %v696, %v799
    %v801 = vand.u32 %v284, 4294901760
    %802 = vmatmul.f32.gmra.mxu0 %v801
    %v803 = vpop.f32.mrf.mxu0
    %v804 = vadd.f32 %v702, %v803
    %v805 = vand.u32 %v287, 4294901760
    %806 = vmatmul.f32.gmra.mxu0 %v805
    %v807 = vpop.f32.mrf.mxu0
    %v808 = vadd.f32 %v708, %v807
    %v809 = vand.u32 %v290, 4294901760
    %810 = vmatmul.f32.gmra.mxu0 %v809
    %v811 = vpop.f32.mrf.mxu0
    %v812 = vadd.f32 %v714, %v811
    %v813 = vand.u32 %v293, 4294901760
    %814 = vmatmul.f32.gmra.mxu0 %v813
    %v815 = vpop.f32.mrf.mxu0
    %v816 = vadd.f32 %v720, %v815
    %v817 = vand.u32 %v296, 4294901760
    %818 = vmatmul.f32.gmra.mxu0 %v817
    %v819 = vpop.f32.mrf.mxu0
    %v820 = vadd.f32 %v726, %v819
    %v821 = vand.u32 %v299, 4294901760
    %822 = vmatmul.f32.gmra.mxu0 %v821
    %v823 = vpop.f32.mrf.mxu0
    %v824 = vadd.f32 %v732, %v823
    %v825 = vand.u32 %v302, 4294901760
    %826 = vmatmul.f32.gmra.mxu0 %v825
    %v827 = vpop.f32.mrf.mxu0
    %v828 = vadd.f32 %v738, %v827
    %v829 = vand.u32 %v305, 4294901760
    %830 = vmatmul.f32.gmra.mxu0 %v829
    %v831 = vpop.f32.mrf.mxu0
    %v832 = vadd.f32 %v744, %v831
    %v833 = vand.u32 %v308, 4294901760
    %834 = vmatmul.f32.gmra.mxu0 %v833
    %v835 = vpop.f32.mrf.mxu0
    %v836 = vadd.f32 %v750, %v835
    %v837 = vand.u32 %v311, 4294901760
    %838 = vmatmul.f32.gmra.mxu0 %v837
    %v839 = vpop.f32.mrf.mxu0
    %v840 = vadd.f32 %v756, %v839
    %841 = vdwg.mxu0
    %842 = vmatpush.msra.mxu0 0.0
    %843 = vmatpush.msra.mxu0 0.0
    %844 = vmatpush.msra.mxu0 0.0
    %845 = vmatpush.msra.mxu0 0.0
    %846 = vmatpush.msra.mxu0 0.0
    %847 = vmatpush.msra.mxu0 0.0
    %848 = vmatpush.msra.mxu0 0.0
    %849 = vmatpush.msra.mxu0 0.0
    %850 = vmatpush.msra.mxu0 0.0
    %851 = vmatpush.msra.mxu0 0.0
    %852 = vmatpush.msra.mxu0 0.0
    %853 = vmatpush.msra.mxu0 0.0
    %854 = vmatpush.msra.mxu0 0.0
    %855 = vmatpush.msra.mxu0 0.0
    %856 = vmatpush.msra.mxu0 0.0
    %v857 = vand.u32 %v226, 4294901760
    %858 = vmatpush.msra.mxu0 %v857
    %v859 = vand.u32 %v266, 4294901760
    %860 = vmatmul.f32.gmra.mxu0 %v859
    %v861 = vpop.f32.mrf.mxu0
    %v862 = vadd.f32 %v780, %v861
    %v863 = vand.u32 %v269, 4294901760
    %864 = vmatmul.f32.gmra.mxu0 %v863
    %v865 = vpop.f32.mrf.mxu0
    %v866 = vadd.f32 %v784, %v865
    %v867 = vand.u32 %v272, 4294901760
    %868 = vmatmul.f32.gmra.mxu0 %v867
    %v869 = vpop.f32.mrf.mxu0
    %v870 = vadd.f32 %v788, %v869
    %v871 = vand.u32 %v275, 4294901760
    %872 = vmatmul.f32.gmra.mxu0 %v871
    %v873 = vpop.f32.mrf.mxu0
    %v874 = vadd.f32 %v792, %v873
    %v875 = vand.u32 %v278, 4294901760
    %876 = vmatmul.f32.gmra.mxu0 %v875
    %v877 = vpop.f32.mrf.mxu0
    %v878 = vadd.f32 %v796, %v877
    %v879 = vand.u32 %v281, 4294901760
    %880 = vmatmul.f32.gmra.mxu0 %v879
    %v881 = vpop.f32.mrf.mxu0
    %v882 = vadd.f32 %v800, %v881
    %v883 = vand.u32 %v284, 4294901760
    %884 = vmatmul.f32.gmra.mxu0 %v883
    %v885 = vpop.f32.mrf.mxu0
    %v886 = vadd.f32 %v804, %v885
    %v887 = vand.u32 %v287, 4294901760
    %888 = vmatmul.f32.gmra.mxu0 %v887
    %v889 = vpop.f32.mrf.mxu0
    %v890 = vadd.f32 %v808, %v889
    %v891 = vand.u32 %v290, 4294901760
    %892 = vmatmul.f32.gmra.mxu0 %v891
    %v893 = vpop.f32.mrf.mxu0
    %v894 = vadd.f32 %v812, %v893
    %v895 = vand.u32 %v293, 4294901760
    %896 = vmatmul.f32.gmra.mxu0 %v895
    %v897 = vpop.f32.mrf.mxu0
    %v898 = vadd.f32 %v816, %v897
    %v899 = vand.u32 %v296, 4294901760
    %900 = vmatmul.f32.gmra.mxu0 %v899
    %v901 = vpop.f32.mrf.mxu0
    %v902 = vadd.f32 %v820, %v901
    %v903 = vand.u32 %v299, 4294901760
    %904 = vmatmul.f32.gmra.mxu0 %v903
    %v905 = vpop.f32.mrf.mxu0
    %v906 = vadd.f32 %v824, %v905
    %v907 = vand.u32 %v302, 4294901760
    %908 = vmatmul.f32.gmra.mxu0 %v907
    %v909 = vpop.f32.mrf.mxu0
    %v910 = vadd.f32 %v828, %v909
    %v911 = vand.u32 %v305, 4294901760
    %912 = vmatmul.f32.gmra.mxu0 %v911
    %v913 = vpop.f32.mrf.mxu0
    %v914 = vadd.f32 %v832, %v913
    %v915 = vand.u32 %v308, 4294901760
    %916 = vmatmul.f32.gmra.mxu0 %v915
    %v917 = vpop.f32.mrf.mxu0
    %v918 = vadd.f32 %v836, %v917
    %v919 = vand.u32 %v311, 4294901760
    %920 = vmatmul.f32.gmra.mxu0 %v919
    %v921 = vpop.f32.mrf.mxu0
    %v922 = vadd.f32 %v840, %v921
    %923 = vdwg.mxu0
    %924 = vst [vmem:[#allocation6] sm:$0xff] %v862
    %925 = vst [vmem:[#allocation6 + $0x8] sm:$0xff] %v866
    %926 = vst [vmem:[#allocation6 + $0x10] sm:$0xff] %v870
    %927 = vst [vmem:[#allocation6 + $0x18] sm:$0xff] %v874
    %928 = vst [vmem:[#allocation6 + $0x20] sm:$0xff] %v878
    %929 = vst [vmem:[#allocation6 + $0x28] sm:$0xff] %v882
    %930 = vst [vmem:[#allocation6 + $0x30] sm:$0xff] %v886
    %931 = vst [vmem:[#allocation6 + $0x38] sm:$0xff] %v890
    %932 = vst [vmem:[#allocation6 + $0x40] sm:$0xff] %v894
    %933 = vst [vmem:[#allocation6 + $0x48] sm:$0xff] %v898
    %934 = vst [vmem:[#allocation6 + $0x50] sm:$0xff] %v902
    %935 = vst [vmem:[#allocation6 + $0x58] sm:$0xff] %v906
    %936 = vst [vmem:[#allocation6 + $0x60] sm:$0xff] %v910
    %937 = vst [vmem:[#allocation6 + $0x68] sm:$0xff] %v914
    %938 = vst [vmem:[#allocation6 + $0x70] sm:$0xff] %v918
    %939 = vst [vmem:[#allocation6 + $0x78] sm:$0xff] %v922
    %s940 = scalar_lea.vmem [#allocation2], 8
    %v941 = vld [vmem:[%s940] sm:$0xff]
    %942 = vxpose.xlu0.b32.start [1/16] %v941, 128
    %943 = vxpose.xlu0.b32.cont [2/16] 0.0, 128
    %944 = vxpose.xlu0.b32.cont [3/16] 0.0, 128
    %945 = vxpose.xlu0.b32.cont [4/16] 0.0, 128
    %946 = vxpose.xlu0.b32.cont [5/16] 0.0, 128
    %947 = vxpose.xlu0.b32.cont [6/16] 0.0, 128
    %948 = vxpose.xlu0.b32.cont [7/16] 0.0, 128
    %949 = vxpose.xlu0.b32.cont [8/16] 0.0, 128
    %950 = vxpose.xlu0.b32.cont [9/16] 0.0, 128
    %951 = vxpose.xlu0.b32.cont [10/16] 0.0, 128
    %952 = vxpose.xlu0.b32.cont [11/16] 0.0, 128
    %953 = vxpose.xlu0.b32.cont [12/16] 0.0, 128
    %954 = vxpose.xlu0.b32.cont [13/16] 0.0, 128
    %955 = vxpose.xlu0.b32.cont [14/16] 0.0, 128
    %956 = vxpose.xlu0.b32.cont [15/16] 0.0, 128
    %957 = vxpose.xlu0.b32.end [16/16] 0.0, 128
    %v958 = vpop.trf.xlu0
    %v959 = vpop.trf.xlu0
    %v960 = vpop.trf.xlu0
    %v961 = vpop.trf.xlu0
    %v962 = vpop.trf.xlu0
    %v963 = vpop.trf.xlu0
    %v964 = vpop.trf.xlu0
    %v965 = vpop.trf.xlu0
    %v966 = vpop.trf.xlu0
    %v967 = vpop.trf.xlu0
    %v968 = vpop.trf.xlu0
    %v969 = vpop.trf.xlu0
    %v970 = vpop.trf.xlu0
    %v971 = vpop.trf.xlu0
    %v972 = vpop.trf.xlu0
    %v973 = vpop.trf.xlu0
    %v975 = vsel %vm264, %v958, 0
    %v978 = vsel %vm264, %v959, 0
    %v981 = vsel %vm264, %v960, 0
    %v984 = vsel %vm264, %v961, 0
    %v987 = vsel %vm264, %v962, 0
    %v990 = vsel %vm264, %v963, 0
    %v993 = vsel %vm264, %v964, 0
    %v996 = vsel %vm264, %v965, 0
    %v999 = vsel %vm264, %v966, 0
    %v1002 = vsel %vm264, %v967, 0
    %v1005 = vsel %vm264, %v968, 0
    %v1008 = vsel %vm264, %v969, 0
    %v1011 = vsel %vm264, %v970, 0
    %v1014 = vsel %vm264, %v971, 0
    %v1017 = vsel %vm264, %v972, 0
    %v1020 = vsel %vm264, %v973, 0
    %1022 = vmatpush.msra.mxu0 0.0
    %1023 = vmatpush.msra.mxu0 0.0
    %1024 = vmatpush.msra.mxu0 0.0
    %1025 = vmatpush.msra.mxu0 0.0
    %1026 = vmatpush.msra.mxu0 0.0
    %1027 = vmatpush.msra.mxu0 0.0
    %1028 = vmatpush.msra.mxu0 0.0
    %1029 = vmatpush.msra.mxu0 0.0
    %1030 = vmatpush.msra.mxu0 0.0
    %1031 = vmatpush.msra.mxu0 0.0
    %1032 = vmatpush.msra.mxu0 0.0
    %1033 = vmatpush.msra.mxu0 0.0
    %1034 = vmatpush.msra.mxu0 0.0
    %1035 = vmatpush.msra.mxu0 0.0
    %1036 = vmatpush.msra.mxu0 0.0
    %v1037 = vand.u32 %v226, 4294901760
    %1038 = vmatpush.msra.mxu0 %v1037
    %v1039 = vand.u32 %v975, 4294901760
    %v1040 = vsub.f32 %v975, %v1039
    %v1041 = vand.u32 %v1040, 4294901760
    %v1042 = vsub.f32 %v1040, %v1041
    %v1043 = vand.u32 %v1042, 4294901760
    %1044 = vmatmul.f32.gmra.mxu0 %v1043
    %v1045 = vpop.f32.mrf.mxu0
    %v1046 = vadd.f32 %v230, %v1045
    %v1047 = vand.u32 %v978, 4294901760
    %v1048 = vsub.f32 %v978, %v1047
    %v1049 = vand.u32 %v1048, 4294901760
    %v1050 = vsub.f32 %v1048, %v1049
    %v1051 = vand.u32 %v1050, 4294901760
    %1052 = vmatmul.f32.gmra.mxu0 %v1051
    %v1053 = vpop.f32.mrf.mxu0
    %v1054 = vadd.f32 %v230, %v1053
    %v1055 = vand.u32 %v981, 4294901760
    %v1056 = vsub.f32 %v981, %v1055
    %v1057 = vand.u32 %v1056, 4294901760
    %v1058 = vsub.f32 %v1056, %v1057
    %v1059 = vand.u32 %v1058, 4294901760
    %1060 = vmatmul.f32.gmra.mxu0 %v1059
    %v1061 = vpop.f32.mrf.mxu0
    %v1062 = vadd.f32 %v230, %v1061
    %v1063 = vand.u32 %v984, 4294901760
    %v1064 = vsub.f32 %v984, %v1063
    %v1065 = vand.u32 %v1064, 4294901760
    %v1066 = vsub.f32 %v1064, %v1065
    %v1067 = vand.u32 %v1066, 4294901760
    %1068 = vmatmul.f32.gmra.mxu0 %v1067
    %v1069 = vpop.f32.mrf.mxu0
    %v1070 = vadd.f32 %v230, %v1069
    %v1071 = vand.u32 %v987, 4294901760
    %v1072 = vsub.f32 %v987, %v1071
    %v1073 = vand.u32 %v1072, 4294901760
    %v1074 = vsub.f32 %v1072, %v1073
    %v1075 = vand.u32 %v1074, 4294901760
    %1076 = vmatmul.f32.gmra.mxu0 %v1075
    %v1077 = vpop.f32.mrf.mxu0
    %v1078 = vadd.f32 %v230, %v1077
    %v1079 = vand.u32 %v990, 4294901760
    %v1080 = vsub.f32 %v990, %v1079
    %v1081 = vand.u32 %v1080, 4294901760
    %v1082 = vsub.f32 %v1080, %v1081
    %v1083 = vand.u32 %v1082, 4294901760
    %1084 = vmatmul.f32.gmra.mxu0 %v1083
    %v1085 = vpop.f32.mrf.mxu0
    %v1086 = vadd.f32 %v230, %v1085
    %v1087 = vand.u32 %v993, 4294901760
    %v1088 = vsub.f32 %v993, %v1087
    %v1089 = vand.u32 %v1088, 4294901760
    %v1090 = vsub.f32 %v1088, %v1089
    %v1091 = vand.u32 %v1090, 4294901760
    %1092 = vmatmul.f32.gmra.mxu0 %v1091
    %v1093 = vpop.f32.mrf.mxu0
    %v1094 = vadd.f32 %v230, %v1093
    %v1095 = vand.u32 %v996, 4294901760
    %v1096 = vsub.f32 %v996, %v1095
    %v1097 = vand.u32 %v1096, 4294901760
    %v1098 = vsub.f32 %v1096, %v1097
    %v1099 = vand.u32 %v1098, 4294901760
    %1100 = vmatmul.f32.gmra.mxu0 %v1099
    %v1101 = vpop.f32.mrf.mxu0
    %v1102 = vadd.f32 %v230, %v1101
    %v1103 = vand.u32 %v999, 4294901760
    %v1104 = vsub.f32 %v999, %v1103
    %v1105 = vand.u32 %v1104, 4294901760
    %v1106 = vsub.f32 %v1104, %v1105
    %v1107 = vand.u32 %v1106, 4294901760
    %1108 = vmatmul.f32.gmra.mxu0 %v1107
    %v1109 = vpop.f32.mrf.mxu0
    %v1110 = vadd.f32 %v230, %v1109
    %v1111 = vand.u32 %v1002, 4294901760
    %v1112 = vsub.f32 %v1002, %v1111
    %v1113 = vand.u32 %v1112, 4294901760
    %v1114 = vsub.f32 %v1112, %v1113
    %v1115 = vand.u32 %v1114, 4294901760
    %1116 = vmatmul.f32.gmra.mxu0 %v1115
    %v1117 = vpop.f32.mrf.mxu0
    %v1118 = vadd.f32 %v230, %v1117
    %v1119 = vand.u32 %v1005, 4294901760
    %v1120 = vsub.f32 %v1005, %v1119
    %v1121 = vand.u32 %v1120, 4294901760
    %v1122 = vsub.f32 %v1120, %v1121
    %v1123 = vand.u32 %v1122, 4294901760
    %1124 = vmatmul.f32.gmra.mxu0 %v1123
    %v1125 = vpop.f32.mrf.mxu0
    %v1126 = vadd.f32 %v230, %v1125
    %v1127 = vand.u32 %v1008, 4294901760
    %v1128 = vsub.f32 %v1008, %v1127
    %v1129 = vand.u32 %v1128, 4294901760
    %v1130 = vsub.f32 %v1128, %v1129
    %v1131 = vand.u32 %v1130, 4294901760
    %1132 = vmatmul.f32.gmra.mxu0 %v1131
    %v1133 = vpop.f32.mrf.mxu0
    %v1134 = vadd.f32 %v230, %v1133
    %v1135 = vand.u32 %v1011, 4294901760
    %v1136 = vsub.f32 %v1011, %v1135
    %v1137 = vand.u32 %v1136, 4294901760
    %v1138 = vsub.f32 %v1136, %v1137
    %v1139 = vand.u32 %v1138, 4294901760
    %1140 = vmatmul.f32.gmra.mxu0 %v1139
    %v1141 = vpop.f32.mrf.mxu0
    %v1142 = vadd.f32 %v230, %v1141
    %v1143 = vand.u32 %v1014, 4294901760
    %v1144 = vsub.f32 %v1014, %v1143
    %v1145 = vand.u32 %v1144, 4294901760
    %v1146 = vsub.f32 %v1144, %v1145
    %v1147 = vand.u32 %v1146, 4294901760
    %1148 = vmatmul.f32.gmra.mxu0 %v1147
    %v1149 = vpop.f32.mrf.mxu0
    %v1150 = vadd.f32 %v230, %v1149
    %v1151 = vand.u32 %v1017, 4294901760
    %v1152 = vsub.f32 %v1017, %v1151
    %v1153 = vand.u32 %v1152, 4294901760
    %v1154 = vsub.f32 %v1152, %v1153
    %v1155 = vand.u32 %v1154, 4294901760
    %1156 = vmatmul.f32.gmra.mxu0 %v1155
    %v1157 = vpop.f32.mrf.mxu0
    %v1158 = vadd.f32 %v230, %v1157
    %v1159 = vand.u32 %v1020, 4294901760
    %v1160 = vsub.f32 %v1020, %v1159
    %v1161 = vand.u32 %v1160, 4294901760
    %v1162 = vsub.f32 %v1160, %v1161
    %v1163 = vand.u32 %v1162, 4294901760
    %1164 = vmatmul.f32.gmra.mxu0 %v1163
    %v1165 = vpop.f32.mrf.mxu0
    %v1166 = vadd.f32 %v230, %v1165
    %1167 = vdwg.mxu0
    %1168 = vmatpush.msra.mxu0 0.0
    %1169 = vmatpush.msra.mxu0 0.0
    %1170 = vmatpush.msra.mxu0 0.0
    %1171 = vmatpush.msra.mxu0 0.0
    %1172 = vmatpush.msra.mxu0 0.0
    %1173 = vmatpush.msra.mxu0 0.0
    %1174 = vmatpush.msra.mxu0 0.0
    %1175 = vmatpush.msra.mxu0 0.0
    %1176 = vmatpush.msra.mxu0 0.0
    %1177 = vmatpush.msra.mxu0 0.0
    %1178 = vmatpush.msra.mxu0 0.0
    %1179 = vmatpush.msra.mxu0 0.0
    %1180 = vmatpush.msra.mxu0 0.0
    %1181 = vmatpush.msra.mxu0 0.0
    %1182 = vmatpush.msra.mxu0 0.0
    %v1183 = vand.u32 %v226, 4294901760
    %v1184 = vsub.f32 %v226, %v1183
    %v1185 = vand.u32 %v1184, 4294901760
    %v1186 = vsub.f32 %v1184, %v1185
    %v1187 = vand.u32 %v1186, 4294901760
    %1188 = vmatpush.msra.mxu0 %v1187
    %v1189 = vand.u32 %v975, 4294901760
    %1190 = vmatmul.f32.gmra.mxu0 %v1189
    %v1191 = vpop.f32.mrf.mxu0
    %v1192 = vadd.f32 %v1046, %v1191
    %v1193 = vand.u32 %v978, 4294901760
    %1194 = vmatmul.f32.gmra.mxu0 %v1193
    %v1195 = vpop.f32.mrf.mxu0
    %v1196 = vadd.f32 %v1054, %v1195
    %v1197 = vand.u32 %v981, 4294901760
    %1198 = vmatmul.f32.gmra.mxu0 %v1197
    %v1199 = vpop.f32.mrf.mxu0
    %v1200 = vadd.f32 %v1062, %v1199
    %v1201 = vand.u32 %v984, 4294901760
    %1202 = vmatmul.f32.gmra.mxu0 %v1201
    %v1203 = vpop.f32.mrf.mxu0
    %v1204 = vadd.f32 %v1070, %v1203
    %v1205 = vand.u32 %v987, 4294901760
    %1206 = vmatmul.f32.gmra.mxu0 %v1205
    %v1207 = vpop.f32.mrf.mxu0
    %v1208 = vadd.f32 %v1078, %v1207
    %v1209 = vand.u32 %v990, 4294901760
    %1210 = vmatmul.f32.gmra.mxu0 %v1209
    %v1211 = vpop.f32.mrf.mxu0
    %v1212 = vadd.f32 %v1086, %v1211
    %v1213 = vand.u32 %v993, 4294901760
    %1214 = vmatmul.f32.gmra.mxu0 %v1213
    %v1215 = vpop.f32.mrf.mxu0
    %v1216 = vadd.f32 %v1094, %v1215
    %v1217 = vand.u32 %v996, 4294901760
    %1218 = vmatmul.f32.gmra.mxu0 %v1217
    %v1219 = vpop.f32.mrf.mxu0
    %v1220 = vadd.f32 %v1102, %v1219
    %v1221 = vand.u32 %v999, 4294901760
    %1222 = vmatmul.f32.gmra.mxu0 %v1221
    %v1223 = vpop.f32.mrf.mxu0
    %v1224 = vadd.f32 %v1110, %v1223
    %v1225 = vand.u32 %v1002, 4294901760
    %1226 = vmatmul.f32.gmra.mxu0 %v1225
    %v1227 = vpop.f32.mrf.mxu0
    %v1228 = vadd.f32 %v1118, %v1227
    %v1229 = vand.u32 %v1005, 4294901760
    %1230 = vmatmul.f32.gmra.mxu0 %v1229
    %v1231 = vpop.f32.mrf.mxu0
    %v1232 = vadd.f32 %v1126, %v1231
    %v1233 = vand.u32 %v1008, 4294901760
    %1234 = vmatmul.f32.gmra.mxu0 %v1233
    %v1235 = vpop.f32.mrf.mxu0
    %v1236 = vadd.f32 %v1134, %v1235
    %v1237 = vand.u32 %v1011, 4294901760
    %1238 = vmatmul.f32.gmra.mxu0 %v1237
    %v1239 = vpop.f32.mrf.mxu0
    %v1240 = vadd.f32 %v1142, %v1239
    %v1241 = vand.u32 %v1014, 4294901760
    %1242 = vmatmul.f32.gmra.mxu0 %v1241
    %v1243 = vpop.f32.mrf.mxu0
    %v1244 = vadd.f32 %v1150, %v1243
    %v1245 = vand.u32 %v1017, 4294901760
    %1246 = vmatmul.f32.gmra.mxu0 %v1245
    %v1247 = vpop.f32.mrf.mxu0
    %v1248 = vadd.f32 %v1158, %v1247
    %v1249 = vand.u32 %v1020, 4294901760
    %1250 = vmatmul.f32.gmra.mxu0 %v1249
    %v1251 = vpop.f32.mrf.mxu0
    %v1252 = vadd.f32 %v1166, %v1251
    %1253 = vdwg.mxu0
    %1254 = vmatpush.msra.mxu0 0.0
    %1255 = vmatpush.msra.mxu0 0.0
    %1256 = vmatpush.msra.mxu0 0.0
    %1257 = vmatpush.msra.mxu0 0.0
    %1258 = vmatpush.msra.mxu0 0.0
    %1259 = vmatpush.msra.mxu0 0.0
    %1260 = vmatpush.msra.mxu0 0.0
    %1261 = vmatpush.msra.mxu0 0.0
    %1262 = vmatpush.msra.mxu0 0.0
    %1263 = vmatpush.msra.mxu0 0.0
    %1264 = vmatpush.msra.mxu0 0.0
    %1265 = vmatpush.msra.mxu0 0.0
    %1266 = vmatpush.msra.mxu0 0.0
    %1267 = vmatpush.msra.mxu0 0.0
    %1268 = vmatpush.msra.mxu0 0.0
    %v1269 = vand.u32 %v226, 4294901760
    %v1270 = vsub.f32 %v226, %v1269
    %1271 = vmatpush.msra.mxu0 %v1270
    %v1272 = vand.u32 %v975, 4294901760
    %v1273 = vsub.f32 %v975, %v1272
    %1274 = vmatmul.f32.gmra.mxu0 %v1273
    %v1275 = vpop.f32.mrf.mxu0
    %v1276 = vadd.f32 %v1192, %v1275
    %v1277 = vand.u32 %v978, 4294901760
    %v1278 = vsub.f32 %v978, %v1277
    %1279 = vmatmul.f32.gmra.mxu0 %v1278
    %v1280 = vpop.f32.mrf.mxu0
    %v1281 = vadd.f32 %v1196, %v1280
    %v1282 = vand.u32 %v981, 4294901760
    %v1283 = vsub.f32 %v981, %v1282
    %1284 = vmatmul.f32.gmra.mxu0 %v1283
    %v1285 = vpop.f32.mrf.mxu0
    %v1286 = vadd.f32 %v1200, %v1285
    %v1287 = vand.u32 %v984, 4294901760
    %v1288 = vsub.f32 %v984, %v1287
    %1289 = vmatmul.f32.gmra.mxu0 %v1288
    %v1290 = vpop.f32.mrf.mxu0
    %v1291 = vadd.f32 %v1204, %v1290
    %v1292 = vand.u32 %v987, 4294901760
    %v1293 = vsub.f32 %v987, %v1292
    %1294 = vmatmul.f32.gmra.mxu0 %v1293
    %v1295 = vpop.f32.mrf.mxu0
    %v1296 = vadd.f32 %v1208, %v1295
    %v1297 = vand.u32 %v990, 4294901760
    %v1298 = vsub.f32 %v990, %v1297
    %1299 = vmatmul.f32.gmra.mxu0 %v1298
    %v1300 = vpop.f32.mrf.mxu0
    %v1301 = vadd.f32 %v1212, %v1300
    %v1302 = vand.u32 %v993, 4294901760
    %v1303 = vsub.f32 %v993, %v1302
    %1304 = vmatmul.f32.gmra.mxu0 %v1303
    %v1305 = vpop.f32.mrf.mxu0
    %v1306 = vadd.f32 %v1216, %v1305
    %v1307 = vand.u32 %v996, 4294901760
    %v1308 = vsub.f32 %v996, %v1307
    %1309 = vmatmul.f32.gmra.mxu0 %v1308
    %v1310 = vpop.f32.mrf.mxu0
    %v1311 = vadd.f32 %v1220, %v1310
    %v1312 = vand.u32 %v999, 4294901760
    %v1313 = vsub.f32 %v999, %v1312
    %1314 = vmatmul.f32.gmra.mxu0 %v1313
    %v1315 = vpop.f32.mrf.mxu0
    %v1316 = vadd.f32 %v1224, %v1315
    %v1317 = vand.u32 %v1002, 4294901760
    %v1318 = vsub.f32 %v1002, %v1317
    %1319 = vmatmul.f32.gmra.mxu0 %v1318
    %v1320 = vpop.f32.mrf.mxu0
    %v1321 = vadd.f32 %v1228, %v1320
    %v1322 = vand.u32 %v1005, 4294901760
    %v1323 = vsub.f32 %v1005, %v1322
    %1324 = vmatmul.f32.gmra.mxu0 %v1323
    %v1325 = vpop.f32.mrf.mxu0
    %v1326 = vadd.f32 %v1232, %v1325
    %v1327 = vand.u32 %v1008, 4294901760
    %v1328 = vsub.f32 %v1008, %v1327
    %1329 = vmatmul.f32.gmra.mxu0 %v1328
    %v1330 = vpop.f32.mrf.mxu0
    %v1331 = vadd.f32 %v1236, %v1330
    %v1332 = vand.u32 %v1011, 4294901760
    %v1333 = vsub.f32 %v1011, %v1332
    %1334 = vmatmul.f32.gmra.mxu0 %v1333
    %v1335 = vpop.f32.mrf.mxu0
    %v1336 = vadd.f32 %v1240, %v1335
    %v1337 = vand.u32 %v1014, 4294901760
    %v1338 = vsub.f32 %v1014, %v1337
    %1339 = vmatmul.f32.gmra.mxu0 %v1338
    %v1340 = vpop.f32.mrf.mxu0
    %v1341 = vadd.f32 %v1244, %v1340
    %v1342 = vand.u32 %v1017, 4294901760
    %v1343 = vsub.f32 %v1017, %v1342
    %1344 = vmatmul.f32.gmra.mxu0 %v1343
    %v1345 = vpop.f32.mrf.mxu0
    %v1346 = vadd.f32 %v1248, %v1345
    %v1347 = vand.u32 %v1020, 4294901760
    %v1348 = vsub.f32 %v1020, %v1347
    %1349 = vmatmul.f32.gmra.mxu0 %v1348
    %v1350 = vpop.f32.mrf.mxu0
    %v1351 = vadd.f32 %v1252, %v1350
    %1352 = vdwg.mxu0
    %1353 = vmatpush.msra.mxu0 0.0
    %1354 = vmatpush.msra.mxu0 0.0
    %1355 = vmatpush.msra.mxu0 0.0
    %1356 = vmatpush.msra.mxu0 0.0
    %1357 = vmatpush.msra.mxu0 0.0
    %1358 = vmatpush.msra.mxu0 0.0
    %1359 = vmatpush.msra.mxu0 0.0
    %1360 = vmatpush.msra.mxu0 0.0
    %1361 = vmatpush.msra.mxu0 0.0
    %1362 = vmatpush.msra.mxu0 0.0
    %1363 = vmatpush.msra.mxu0 0.0
    %1364 = vmatpush.msra.mxu0 0.0
    %1365 = vmatpush.msra.mxu0 0.0
    %1366 = vmatpush.msra.mxu0 0.0
    %1367 = vmatpush.msra.mxu0 0.0
    %v1368 = vand.u32 %v226, 4294901760
    %1369 = vmatpush.msra.mxu0 %v1368
    %v1370 = vand.u32 %v975, 4294901760
    %v1371 = vsub.f32 %v975, %v1370
    %v1372 = vand.u32 %v1371, 4294901760
    %1373 = vmatmul.f32.gmra.mxu0 %v1372
    %v1374 = vpop.f32.mrf.mxu0
    %v1375 = vadd.f32 %v1276, %v1374
    %v1376 = vand.u32 %v978, 4294901760
    %v1377 = vsub.f32 %v978, %v1376
    %v1378 = vand.u32 %v1377, 4294901760
    %1379 = vmatmul.f32.gmra.mxu0 %v1378
    %v1380 = vpop.f32.mrf.mxu0
    %v1381 = vadd.f32 %v1281, %v1380
    %v1382 = vand.u32 %v981, 4294901760
    %v1383 = vsub.f32 %v981, %v1382
    %v1384 = vand.u32 %v1383, 4294901760
    %1385 = vmatmul.f32.gmra.mxu0 %v1384
    %v1386 = vpop.f32.mrf.mxu0
    %v1387 = vadd.f32 %v1286, %v1386
    %v1388 = vand.u32 %v984, 4294901760
    %v1389 = vsub.f32 %v984, %v1388
    %v1390 = vand.u32 %v1389, 4294901760
    %1391 = vmatmul.f32.gmra.mxu0 %v1390
    %v1392 = vpop.f32.mrf.mxu0
    %v1393 = vadd.f32 %v1291, %v1392
    %v1394 = vand.u32 %v987, 4294901760
    %v1395 = vsub.f32 %v987, %v1394
    %v1396 = vand.u32 %v1395, 4294901760
    %1397 = vmatmul.f32.gmra.mxu0 %v1396
    %v1398 = vpop.f32.mrf.mxu0
    %v1399 = vadd.f32 %v1296, %v1398
    %v1400 = vand.u32 %v990, 4294901760
    %v1401 = vsub.f32 %v990, %v1400
    %v1402 = vand.u32 %v1401, 4294901760
    %1403 = vmatmul.f32.gmra.mxu0 %v1402
    %v1404 = vpop.f32.mrf.mxu0
    %v1405 = vadd.f32 %v1301, %v1404
    %v1406 = vand.u32 %v993, 4294901760
    %v1407 = vsub.f32 %v993, %v1406
    %v1408 = vand.u32 %v1407, 4294901760
    %1409 = vmatmul.f32.gmra.mxu0 %v1408
    %v1410 = vpop.f32.mrf.mxu0
    %v1411 = vadd.f32 %v1306, %v1410
    %v1412 = vand.u32 %v996, 4294901760
    %v1413 = vsub.f32 %v996, %v1412
    %v1414 = vand.u32 %v1413, 4294901760
    %1415 = vmatmul.f32.gmra.mxu0 %v1414
    %v1416 = vpop.f32.mrf.mxu0
    %v1417 = vadd.f32 %v1311, %v1416
    %v1418 = vand.u32 %v999, 4294901760
    %v1419 = vsub.f32 %v999, %v1418
    %v1420 = vand.u32 %v1419, 4294901760
    %1421 = vmatmul.f32.gmra.mxu0 %v1420
    %v1422 = vpop.f32.mrf.mxu0
    %v1423 = vadd.f32 %v1316, %v1422
    %v1424 = vand.u32 %v1002, 4294901760
    %v1425 = vsub.f32 %v1002, %v1424
    %v1426 = vand.u32 %v1425, 4294901760
    %1427 = vmatmul.f32.gmra.mxu0 %v1426
    %v1428 = vpop.f32.mrf.mxu0
    %v1429 = vadd.f32 %v1321, %v1428
    %v1430 = vand.u32 %v1005, 4294901760
    %v1431 = vsub.f32 %v1005, %v1430
    %v1432 = vand.u32 %v1431, 4294901760
    %1433 = vmatmul.f32.gmra.mxu0 %v1432
    %v1434 = vpop.f32.mrf.mxu0
    %v1435 = vadd.f32 %v1326, %v1434
    %v1436 = vand.u32 %v1008, 4294901760
    %v1437 = vsub.f32 %v1008, %v1436
    %v1438 = vand.u32 %v1437, 4294901760
    %1439 = vmatmul.f32.gmra.mxu0 %v1438
    %v1440 = vpop.f32.mrf.mxu0
    %v1441 = vadd.f32 %v1331, %v1440
    %v1442 = vand.u32 %v1011, 4294901760
    %v1443 = vsub.f32 %v1011, %v1442
    %v1444 = vand.u32 %v1443, 4294901760
    %1445 = vmatmul.f32.gmra.mxu0 %v1444
    %v1446 = vpop.f32.mrf.mxu0
    %v1447 = vadd.f32 %v1336, %v1446
    %v1448 = vand.u32 %v1014, 4294901760
    %v1449 = vsub.f32 %v1014, %v1448
    %v1450 = vand.u32 %v1449, 4294901760
    %1451 = vmatmul.f32.gmra.mxu0 %v1450
    %v1452 = vpop.f32.mrf.mxu0
    %v1453 = vadd.f32 %v1341, %v1452
    %v1454 = vand.u32 %v1017, 4294901760
    %v1455 = vsub.f32 %v1017, %v1454
    %v1456 = vand.u32 %v1455, 4294901760
    %1457 = vmatmul.f32.gmra.mxu0 %v1456
    %v1458 = vpop.f32.mrf.mxu0
    %v1459 = vadd.f32 %v1346, %v1458
    %v1460 = vand.u32 %v1020, 4294901760
    %v1461 = vsub.f32 %v1020, %v1460
    %v1462 = vand.u32 %v1461, 4294901760
    %1463 = vmatmul.f32.gmra.mxu0 %v1462
    %v1464 = vpop.f32.mrf.mxu0
    %v1465 = vadd.f32 %v1351, %v1464
    %1466 = vdwg.mxu0
    %1467 = vmatpush.msra.mxu0 0.0
    %1468 = vmatpush.msra.mxu0 0.0
    %1469 = vmatpush.msra.mxu0 0.0
    %1470 = vmatpush.msra.mxu0 0.0
    %1471 = vmatpush.msra.mxu0 0.0
    %1472 = vmatpush.msra.mxu0 0.0
    %1473 = vmatpush.msra.mxu0 0.0
    %1474 = vmatpush.msra.mxu0 0.0
    %1475 = vmatpush.msra.mxu0 0.0
    %1476 = vmatpush.msra.mxu0 0.0
    %1477 = vmatpush.msra.mxu0 0.0
    %1478 = vmatpush.msra.mxu0 0.0
    %1479 = vmatpush.msra.mxu0 0.0
    %1480 = vmatpush.msra.mxu0 0.0
    %1481 = vmatpush.msra.mxu0 0.0
    %v1482 = vand.u32 %v226, 4294901760
    %v1483 = vsub.f32 %v226, %v1482
    %v1484 = vand.u32 %v1483, 4294901760
    %1485 = vmatpush.msra.mxu0 %v1484
    %v1486 = vand.u32 %v975, 4294901760
    %1487 = vmatmul.f32.gmra.mxu0 %v1486
    %v1488 = vpop.f32.mrf.mxu0
    %v1489 = vadd.f32 %v1375, %v1488
    %v1490 = vand.u32 %v978, 4294901760
    %1491 = vmatmul.f32.gmra.mxu0 %v1490
    %v1492 = vpop.f32.mrf.mxu0
    %v1493 = vadd.f32 %v1381, %v1492
    %v1494 = vand.u32 %v981, 4294901760
    %1495 = vmatmul.f32.gmra.mxu0 %v1494
    %v1496 = vpop.f32.mrf.mxu0
    %v1497 = vadd.f32 %v1387, %v1496
    %v1498 = vand.u32 %v984, 4294901760
    %1499 = vmatmul.f32.gmra.mxu0 %v1498
    %v1500 = vpop.f32.mrf.mxu0
    %v1501 = vadd.f32 %v1393, %v1500
    %v1502 = vand.u32 %v987, 4294901760
    %1503 = vmatmul.f32.gmra.mxu0 %v1502
    %v1504 = vpop.f32.mrf.mxu0
    %v1505 = vadd.f32 %v1399, %v1504
    %v1506 = vand.u32 %v990, 4294901760
    %1507 = vmatmul.f32.gmra.mxu0 %v1506
    %v1508 = vpop.f32.mrf.mxu0
    %v1509 = vadd.f32 %v1405, %v1508
    %v1510 = vand.u32 %v993, 4294901760
    %1511 = vmatmul.f32.gmra.mxu0 %v1510
    %v1512 = vpop.f32.mrf.mxu0
    %v1513 = vadd.f32 %v1411, %v1512
    %v1514 = vand.u32 %v996, 4294901760
    %1515 = vmatmul.f32.gmra.mxu0 %v1514
    %v1516 = vpop.f32.mrf.mxu0
    %v1517 = vadd.f32 %v1417, %v1516
    %v1518 = vand.u32 %v999, 4294901760
    %1519 = vmatmul.f32.gmra.mxu0 %v1518
    %v1520 = vpop.f32.mrf.mxu0
    %v1521 = vadd.f32 %v1423, %v1520
    %v1522 = vand.u32 %v1002, 4294901760
    %1523 = vmatmul.f32.gmra.mxu0 %v1522
    %v1524 = vpop.f32.mrf.mxu0
    %v1525 = vadd.f32 %v1429, %v1524
    %v1526 = vand.u32 %v1005, 4294901760
    %1527 = vmatmul.f32.gmra.mxu0 %v1526
    %v1528 = vpop.f32.mrf.mxu0
    %v1529 = vadd.f32 %v1435, %v1528
    %v1530 = vand.u32 %v1008, 4294901760
    %1531 = vmatmul.f32.gmra.mxu0 %v1530
    %v1532 = vpop.f32.mrf.mxu0
    %v1533 = vadd.f32 %v1441, %v1532
    %v1534 = vand.u32 %v1011, 4294901760
    %1535 = vmatmul.f32.gmra.mxu0 %v1534
    %v1536 = vpop.f32.mrf.mxu0
    %v1537 = vadd.f32 %v1447, %v1536
    %v1538 = vand.u32 %v1014, 4294901760
    %1539 = vmatmul.f32.gmra.mxu0 %v1538
    %v1540 = vpop.f32.mrf.mxu0
    %v1541 = vadd.f32 %v1453, %v1540
    %v1542 = vand.u32 %v1017, 4294901760
    %1543 = vmatmul.f32.gmra.mxu0 %v1542
    %v1544 = vpop.f32.mrf.mxu0
    %v1545 = vadd.f32 %v1459, %v1544
    %v1546 = vand.u32 %v1020, 4294901760
    %1547 = vmatmul.f32.gmra.mxu0 %v1546
    %v1548 = vpop.f32.mrf.mxu0
    %v1549 = vadd.f32 %v1465, %v1548
    %1550 = vdwg.mxu0
    %1551 = vmatpush.msra.mxu0 0.0
    %1552 = vmatpush.msra.mxu0 0.0
    %1553 = vmatpush.msra.mxu0 0.0
    %1554 = vmatpush.msra.mxu0 0.0
    %1555 = vmatpush.msra.mxu0 0.0
    %1556 = vmatpush.msra.mxu0 0.0
    %1557 = vmatpush.msra.mxu0 0.0
    %1558 = vmatpush.msra.mxu0 0.0
    %1559 = vmatpush.msra.mxu0 0.0
    %1560 = vmatpush.msra.mxu0 0.0
    %1561 = vmatpush.msra.mxu0 0.0
    %1562 = vmatpush.msra.mxu0 0.0
    %1563 = vmatpush.msra.mxu0 0.0
    %1564 = vmatpush.msra.mxu0 0.0
    %1565 = vmatpush.msra.mxu0 0.0
    %v1566 = vand.u32 %v226, 4294901760
    %1567 = vmatpush.msra.mxu0 %v1566
    %v1568 = vand.u32 %v975, 4294901760
    %1569 = vmatmul.f32.gmra.mxu0 %v1568
    %v1570 = vpop.f32.mrf.mxu0
    %v1571 = vadd.f32 %v1489, %v1570
    %v1572 = vand.u32 %v978, 4294901760
    %1573 = vmatmul.f32.gmra.mxu0 %v1572
    %v1574 = vpop.f32.mrf.mxu0
    %v1575 = vadd.f32 %v1493, %v1574
    %v1576 = vand.u32 %v981, 4294901760
    %1577 = vmatmul.f32.gmra.mxu0 %v1576
    %v1578 = vpop.f32.mrf.mxu0
    %v1579 = vadd.f32 %v1497, %v1578
    %v1580 = vand.u32 %v984, 4294901760
    %1581 = vmatmul.f32.gmra.mxu0 %v1580
    %v1582 = vpop.f32.mrf.mxu0
    %v1583 = vadd.f32 %v1501, %v1582
    %v1584 = vand.u32 %v987, 4294901760
    %1585 = vmatmul.f32.gmra.mxu0 %v1584
    %v1586 = vpop.f32.mrf.mxu0
    %v1587 = vadd.f32 %v1505, %v1586
    %v1588 = vand.u32 %v990, 4294901760
    %1589 = vmatmul.f32.gmra.mxu0 %v1588
    %v1590 = vpop.f32.mrf.mxu0
    %v1591 = vadd.f32 %v1509, %v1590
    %v1592 = vand.u32 %v993, 4294901760
    %1593 = vmatmul.f32.gmra.mxu0 %v1592
    %v1594 = vpop.f32.mrf.mxu0
    %v1595 = vadd.f32 %v1513, %v1594
    %v1596 = vand.u32 %v996, 4294901760
    %1597 = vmatmul.f32.gmra.mxu0 %v1596
    %v1598 = vpop.f32.mrf.mxu0
    %v1599 = vadd.f32 %v1517, %v1598
    %v1600 = vand.u32 %v999, 4294901760
    %1601 = vmatmul.f32.gmra.mxu0 %v1600
    %v1602 = vpop.f32.mrf.mxu0
    %v1603 = vadd.f32 %v1521, %v1602
    %v1604 = vand.u32 %v1002, 4294901760
    %1605 = vmatmul.f32.gmra.mxu0 %v1604
    %v1606 = vpop.f32.mrf.mxu0
    %v1607 = vadd.f32 %v1525, %v1606
    %v1608 = vand.u32 %v1005, 4294901760
    %1609 = vmatmul.f32.gmra.mxu0 %v1608
    %v1610 = vpop.f32.mrf.mxu0
    %v1611 = vadd.f32 %v1529, %v1610
    %v1612 = vand.u32 %v1008, 4294901760
    %1613 = vmatmul.f32.gmra.mxu0 %v1612
    %v1614 = vpop.f32.mrf.mxu0
    %v1615 = vadd.f32 %v1533, %v1614
    %v1616 = vand.u32 %v1011, 4294901760
    %1617 = vmatmul.f32.gmra.mxu0 %v1616
    %v1618 = vpop.f32.mrf.mxu0
    %v1619 = vadd.f32 %v1537, %v1618
    %v1620 = vand.u32 %v1014, 4294901760
    %1621 = vmatmul.f32.gmra.mxu0 %v1620
    %v1622 = vpop.f32.mrf.mxu0
    %v1623 = vadd.f32 %v1541, %v1622
    %v1624 = vand.u32 %v1017, 4294901760
    %1625 = vmatmul.f32.gmra.mxu0 %v1624
    %v1626 = vpop.f32.mrf.mxu0
    %v1627 = vadd.f32 %v1545, %v1626
    %v1628 = vand.u32 %v1020, 4294901760
    %1629 = vmatmul.f32.gmra.mxu0 %v1628
    %v1630 = vpop.f32.mrf.mxu0
    %v1631 = vadd.f32 %v1549, %v1630
    %1632 = vdwg.mxu0
    %s1633 = scalar_lea.vmem [#allocation6], 128
    %1634 = vst [vmem:[%s1633] sm:$0xff] %v1571
    %1635 = vst [vmem:[%s1633 + $0x8] sm:$0xff] %v1575
    %1636 = vst [vmem:[%s1633 + $0x10] sm:$0xff] %v1579
    %1637 = vst [vmem:[%s1633 + $0x18] sm:$0xff] %v1583
    %1638 = vst [vmem:[%s1633 + $0x20] sm:$0xff] %v1587
    %1639 = vst [vmem:[%s1633 + $0x28] sm:$0xff] %v1591
    %1640 = vst [vmem:[%s1633 + $0x30] sm:$0xff] %v1595
    %1641 = vst [vmem:[%s1633 + $0x38] sm:$0xff] %v1599
    %1642 = vst [vmem:[%s1633 + $0x40] sm:$0xff] %v1603
    %1643 = vst [vmem:[%s1633 + $0x48] sm:$0xff] %v1607
    %1644 = vst [vmem:[%s1633 + $0x50] sm:$0xff] %v1611
    %1645 = vst [vmem:[%s1633 + $0x58] sm:$0xff] %v1615
    %1646 = vst [vmem:[%s1633 + $0x60] sm:$0xff] %v1619
    %1647 = vst [vmem:[%s1633 + $0x68] sm:$0xff] %v1623
    %1648 = vst [vmem:[%s1633 + $0x70] sm:$0xff] %v1627
    %1649 = vst [vmem:[%s1633 + $0x78] sm:$0xff] %v1631
    %s1650 = scalar_lea.vmem [#allocation2], 16
    %v1651 = vld [vmem:[%s1650] sm:$0xff]
    %1652 = vxpose.xlu0.b32.start [1/16] %v1651, 128
    %1653 = vxpose.xlu0.b32.cont [2/16] 0.0, 128
    %1654 = vxpose.xlu0.b32.cont [3/16] 0.0, 128
    %1655 = vxpose.xlu0.b32.cont [4/16] 0.0, 128
    %1656 = vxpose.xlu0.b32.cont [5/16] 0.0, 128
    %1657 = vxpose.xlu0.b32.cont [6/16] 0.0, 128
    %1658 = vxpose.xlu0.b32.cont [7/16] 0.0, 128
    %1659 = vxpose.xlu0.b32.cont [8/16] 0.0, 128
    %1660 = vxpose.xlu0.b32.cont [9/16] 0.0, 128
    %1661 = vxpose.xlu0.b32.cont [10/16] 0.0, 128
    %1662 = vxpose.xlu0.b32.cont [11/16] 0.0, 128
    %1663 = vxpose.xlu0.b32.cont [12/16] 0.0, 128
    %1664 = vxpose.xlu0.b32.cont [13/16] 0.0, 128
    %1665 = vxpose.xlu0.b32.cont [14/16] 0.0, 128
    %1666 = vxpose.xlu0.b32.cont [15/16] 0.0, 128
    %1667 = vxpose.xlu0.b32.end [16/16] 0.0, 128
    %v1668 = vpop.trf.xlu0
    %v1669 = vpop.trf.xlu0
    %v1670 = vpop.trf.xlu0
    %v1671 = vpop.trf.xlu0
    %v1672 = vpop.trf.xlu0
    %v1673 = vpop.trf.xlu0
    %v1674 = vpop.trf.xlu0
    %v1675 = vpop.trf.xlu0
    %v1676 = vpop.trf.xlu0
    %v1677 = vpop.trf.xlu0
    %v1678 = vpop.trf.xlu0
    %v1679 = vpop.trf.xlu0
    %v1680 = vpop.trf.xlu0
    %v1681 = vpop.trf.xlu0
    %v1682 = vpop.trf.xlu0
    %v1683 = vpop.trf.xlu0
    %v1685 = vsel %vm264, %v1668, 0
    %v1688 = vsel %vm264, %v1669, 0
    %v1691 = vsel %vm264, %v1670, 0
    %v1694 = vsel %vm264, %v1671, 0
    %v1697 = vsel %vm264, %v1672, 0
    %v1700 = vsel %vm264, %v1673, 0
    %v1703 = vsel %vm264, %v1674, 0
    %v1706 = vsel %vm264, %v1675, 0
    %v1709 = vsel %vm264, %v1676, 0
    %v1712 = vsel %vm264, %v1677, 0
    %v1715 = vsel %vm264, %v1678, 0
    %v1718 = vsel %vm264, %v1679, 0
    %v1721 = vsel %vm264, %v1680, 0
    %v1724 = vsel %vm264, %v1681, 0
    %v1727 = vsel %vm264, %v1682, 0
    %v1730 = vsel %vm264, %v1683, 0
    %1732 = vmatpush.msra.mxu0 0.0
    %1733 = vmatpush.msra.mxu0 0.0
    %1734 = vmatpush.msra.mxu0 0.0
    %1735 = vmatpush.msra.mxu0 0.0
    %1736 = vmatpush.msra.mxu0 0.0
    %1737 = vmatpush.msra.mxu0 0.0
    %1738 = vmatpush.msra.mxu0 0.0
    %1739 = vmatpush.msra.mxu0 0.0
    %1740 = vmatpush.msra.mxu0 0.0
    %1741 = vmatpush.msra.mxu0 0.0
    %1742 = vmatpush.msra.mxu0 0.0
    %1743 = vmatpush.msra.mxu0 0.0
    %1744 = vmatpush.msra.mxu0 0.0
    %1745 = vmatpush.msra.mxu0 0.0
    %1746 = vmatpush.msra.mxu0 0.0
    %v1747 = vand.u32 %v226, 4294901760
    %1748 = vmatpush.msra.mxu0 %v1747
    %v1749 = vand.u32 %v1685, 4294901760
    %v1750 = vsub.f32 %v1685, %v1749
    %v1751 = vand.u32 %v1750, 4294901760
    %v1752 = vsub.f32 %v1750, %v1751
    %v1753 = vand.u32 %v1752, 4294901760
    %1754 = vmatmul.f32.gmra.mxu0 %v1753
    %v1755 = vpop.f32.mrf.mxu0
    %v1756 = vadd.f32 %v230, %v1755
    %v1757 = vand.u32 %v1688, 4294901760
    %v1758 = vsub.f32 %v1688, %v1757
    %v1759 = vand.u32 %v1758, 4294901760
    %v1760 = vsub.f32 %v1758, %v1759
    %v1761 = vand.u32 %v1760, 4294901760
    %1762 = vmatmul.f32.gmra.mxu0 %v1761
    %v1763 = vpop.f32.mrf.mxu0
    %v1764 = vadd.f32 %v230, %v1763
    %v1765 = vand.u32 %v1691, 4294901760
    %v1766 = vsub.f32 %v1691, %v1765
    %v1767 = vand.u32 %v1766, 4294901760
    %v1768 = vsub.f32 %v1766, %v1767
    %v1769 = vand.u32 %v1768, 4294901760
    %1770 = vmatmul.f32.gmra.mxu0 %v1769
    %v1771 = vpop.f32.mrf.mxu0
    %v1772 = vadd.f32 %v230, %v1771
    %v1773 = vand.u32 %v1694, 4294901760
    %v1774 = vsub.f32 %v1694, %v1773
    %v1775 = vand.u32 %v1774, 4294901760
    %v1776 = vsub.f32 %v1774, %v1775
    %v1777 = vand.u32 %v1776, 4294901760
    %1778 = vmatmul.f32.gmra.mxu0 %v1777
    %v1779 = vpop.f32.mrf.mxu0
    %v1780 = vadd.f32 %v230, %v1779
    %v1781 = vand.u32 %v1697, 4294901760
    %v1782 = vsub.f32 %v1697, %v1781
    %v1783 = vand.u32 %v1782, 4294901760
    %v1784 = vsub.f32 %v1782, %v1783
    %v1785 = vand.u32 %v1784, 4294901760
    %1786 = vmatmul.f32.gmra.mxu0 %v1785
    %v1787 = vpop.f32.mrf.mxu0
    %v1788 = vadd.f32 %v230, %v1787
    %v1789 = vand.u32 %v1700, 4294901760
    %v1790 = vsub.f32 %v1700, %v1789
    %v1791 = vand.u32 %v1790, 4294901760
    %v1792 = vsub.f32 %v1790, %v1791
    %v1793 = vand.u32 %v1792, 4294901760
    %1794 = vmatmul.f32.gmra.mxu0 %v1793
    %v1795 = vpop.f32.mrf.mxu0
    %v1796 = vadd.f32 %v230, %v1795
    %v1797 = vand.u32 %v1703, 4294901760
    %v1798 = vsub.f32 %v1703, %v1797
    %v1799 = vand.u32 %v1798, 4294901760
    %v1800 = vsub.f32 %v1798, %v1799
    %v1801 = vand.u32 %v1800, 4294901760
    %1802 = vmatmul.f32.gmra.mxu0 %v1801
    %v1803 = vpop.f32.mrf.mxu0
    %v1804 = vadd.f32 %v230, %v1803
    %v1805 = vand.u32 %v1706, 4294901760
    %v1806 = vsub.f32 %v1706, %v1805
    %v1807 = vand.u32 %v1806, 4294901760
    %v1808 = vsub.f32 %v1806, %v1807
    %v1809 = vand.u32 %v1808, 4294901760
    %1810 = vmatmul.f32.gmra.mxu0 %v1809
    %v1811 = vpop.f32.mrf.mxu0
    %v1812 = vadd.f32 %v230, %v1811
    %v1813 = vand.u32 %v1709, 4294901760
    %v1814 = vsub.f32 %v1709, %v1813
    %v1815 = vand.u32 %v1814, 4294901760
    %v1816 = vsub.f32 %v1814, %v1815
    %v1817 = vand.u32 %v1816, 4294901760
    %1818 = vmatmul.f32.gmra.mxu0 %v1817
    %v1819 = vpop.f32.mrf.mxu0
    %v1820 = vadd.f32 %v230, %v1819
    %v1821 = vand.u32 %v1712, 4294901760
    %v1822 = vsub.f32 %v1712, %v1821
    %v1823 = vand.u32 %v1822, 4294901760
    %v1824 = vsub.f32 %v1822, %v1823
    %v1825 = vand.u32 %v1824, 4294901760
    %1826 = vmatmul.f32.gmra.mxu0 %v1825
    %v1827 = vpop.f32.mrf.mxu0
    %v1828 = vadd.f32 %v230, %v1827
    %v1829 = vand.u32 %v1715, 4294901760
    %v1830 = vsub.f32 %v1715, %v1829
    %v1831 = vand.u32 %v1830, 4294901760
    %v1832 = vsub.f32 %v1830, %v1831
    %v1833 = vand.u32 %v1832, 4294901760
    %1834 = vmatmul.f32.gmra.mxu0 %v1833
    %v1835 = vpop.f32.mrf.mxu0
    %v1836 = vadd.f32 %v230, %v1835
    %v1837 = vand.u32 %v1718, 4294901760
    %v1838 = vsub.f32 %v1718, %v1837
    %v1839 = vand.u32 %v1838, 4294901760
    %v1840 = vsub.f32 %v1838, %v1839
    %v1841 = vand.u32 %v1840, 4294901760
    %1842 = vmatmul.f32.gmra.mxu0 %v1841
    %v1843 = vpop.f32.mrf.mxu0
    %v1844 = vadd.f32 %v230, %v1843
    %v1845 = vand.u32 %v1721, 4294901760
    %v1846 = vsub.f32 %v1721, %v1845
    %v1847 = vand.u32 %v1846, 4294901760
    %v1848 = vsub.f32 %v1846, %v1847
    %v1849 = vand.u32 %v1848, 4294901760
    %1850 = vmatmul.f32.gmra.mxu0 %v1849
    %v1851 = vpop.f32.mrf.mxu0
    %v1852 = vadd.f32 %v230, %v1851
    %v1853 = vand.u32 %v1724, 4294901760
    %v1854 = vsub.f32 %v1724, %v1853
    %v1855 = vand.u32 %v1854, 4294901760
    %v1856 = vsub.f32 %v1854, %v1855
    %v1857 = vand.u32 %v1856, 4294901760
    %1858 = vmatmul.f32.gmra.mxu0 %v1857
    %v1859 = vpop.f32.mrf.mxu0
    %v1860 = vadd.f32 %v230, %v1859
    %v1861 = vand.u32 %v1727, 4294901760
    %v1862 = vsub.f32 %v1727, %v1861
    %v1863 = vand.u32 %v1862, 4294901760
    %v1864 = vsub.f32 %v1862, %v1863
    %v1865 = vand.u32 %v1864, 4294901760
    %1866 = vmatmul.f32.gmra.mxu0 %v1865
    %v1867 = vpop.f32.mrf.mxu0
    %v1868 = vadd.f32 %v230, %v1867
    %v1869 = vand.u32 %v1730, 4294901760
    %v1870 = vsub.f32 %v1730, %v1869
    %v1871 = vand.u32 %v1870, 4294901760
    %v1872 = vsub.f32 %v1870, %v1871
    %v1873 = vand.u32 %v1872, 4294901760
    %1874 = vmatmul.f32.gmra.mxu0 %v1873
    %v1875 = vpop.f32.mrf.mxu0
    %v1876 = vadd.f32 %v230, %v1875
    %1877 = vdwg.mxu0
    %1878 = vmatpush.msra.mxu0 0.0
    %1879 = vmatpush.msra.mxu0 0.0
    %1880 = vmatpush.msra.mxu0 0.0
    %1881 = vmatpush.msra.mxu0 0.0
    %1882 = vmatpush.msra.mxu0 0.0
    %1883 = vmatpush.msra.mxu0 0.0
    %1884 = vmatpush.msra.mxu0 0.0
    %1885 = vmatpush.msra.mxu0 0.0
    %1886 = vmatpush.msra.mxu0 0.0
    %1887 = vmatpush.msra.mxu0 0.0
    %1888 = vmatpush.msra.mxu0 0.0
    %1889 = vmatpush.msra.mxu0 0.0
    %1890 = vmatpush.msra.mxu0 0.0
    %1891 = vmatpush.msra.mxu0 0.0
    %1892 = vmatpush.msra.mxu0 0.0
    %v1893 = vand.u32 %v226, 4294901760
    %v1894 = vsub.f32 %v226, %v1893
    %v1895 = vand.u32 %v1894, 4294901760
    %v1896 = vsub.f32 %v1894, %v1895
    %v1897 = vand.u32 %v1896, 4294901760
    %1898 = vmatpush.msra.mxu0 %v1897
    %v1899 = vand.u32 %v1685, 4294901760
    %1900 = vmatmul.f32.gmra.mxu0 %v1899
    %v1901 = vpop.f32.mrf.mxu0
    %v1902 = vadd.f32 %v1756, %v1901
    %v1903 = vand.u32 %v1688, 4294901760
    %1904 = vmatmul.f32.gmra.mxu0 %v1903
    %v1905 = vpop.f32.mrf.mxu0
    %v1906 = vadd.f32 %v1764, %v1905
    %v1907 = vand.u32 %v1691, 4294901760
    %1908 = vmatmul.f32.gmra.mxu0 %v1907
    %v1909 = vpop.f32.mrf.mxu0
    %v1910 = vadd.f32 %v1772, %v1909
    %v1911 = vand.u32 %v1694, 4294901760
    %1912 = vmatmul.f32.gmra.mxu0 %v1911
    %v1913 = vpop.f32.mrf.mxu0
    %v1914 = vadd.f32 %v1780, %v1913
    %v1915 = vand.u32 %v1697, 4294901760
    %1916 = vmatmul.f32.gmra.mxu0 %v1915
    %v1917 = vpop.f32.mrf.mxu0
    %v1918 = vadd.f32 %v1788, %v1917
    %v1919 = vand.u32 %v1700, 4294901760
    %1920 = vmatmul.f32.gmra.mxu0 %v1919
    %v1921 = vpop.f32.mrf.mxu0
    %v1922 = vadd.f32 %v1796, %v1921
    %v1923 = vand.u32 %v1703, 4294901760
    %1924 = vmatmul.f32.gmra.mxu0 %v1923
    %v1925 = vpop.f32.mrf.mxu0
    %v1926 = vadd.f32 %v1804, %v1925
    %v1927 = vand.u32 %v1706, 4294901760
    %1928 = vmatmul.f32.gmra.mxu0 %v1927
    %v1929 = vpop.f32.mrf.mxu0
    %v1930 = vadd.f32 %v1812, %v1929
    %v1931 = vand.u32 %v1709, 4294901760
    %1932 = vmatmul.f32.gmra.mxu0 %v1931
    %v1933 = vpop.f32.mrf.mxu0
    %v1934 = vadd.f32 %v1820, %v1933
    %v1935 = vand.u32 %v1712, 4294901760
    %1936 = vmatmul.f32.gmra.mxu0 %v1935
    %v1937 = vpop.f32.mrf.mxu0
    %v1938 = vadd.f32 %v1828, %v1937
    %v1939 = vand.u32 %v1715, 4294901760
    %1940 = vmatmul.f32.gmra.mxu0 %v1939
    %v1941 = vpop.f32.mrf.mxu0
    %v1942 = vadd.f32 %v1836, %v1941
    %v1943 = vand.u32 %v1718, 4294901760
    %1944 = vmatmul.f32.gmra.mxu0 %v1943
    %v1945 = vpop.f32.mrf.mxu0
    %v1946 = vadd.f32 %v1844, %v1945
    %v1947 = vand.u32 %v1721, 4294901760
    %1948 = vmatmul.f32.gmra.mxu0 %v1947
    %v1949 = vpop.f32.mrf.mxu0
    %v1950 = vadd.f32 %v1852, %v1949
    %v1951 = vand.u32 %v1724, 4294901760
    %1952 = vmatmul.f32.gmra.mxu0 %v1951
    %v1953 = vpop.f32.mrf.mxu0
    %v1954 = vadd.f32 %v1860, %v1953
    %v1955 = vand.u32 %v1727, 4294901760
    %1956 = vmatmul.f32.gmra.mxu0 %v1955
    %v1957 = vpop.f32.mrf.mxu0
    %v1958 = vadd.f32 %v1868, %v1957
    %v1959 = vand.u32 %v1730, 4294901760
    %1960 = vmatmul.f32.gmra.mxu0 %v1959
    %v1961 = vpop.f32.mrf.mxu0
    %v1962 = vadd.f32 %v1876, %v1961
    %1963 = vdwg.mxu0
    %1964 = vmatpush.msra.mxu0 0.0
    %1965 = vmatpush.msra.mxu0 0.0
    %1966 = vmatpush.msra.mxu0 0.0
    %1967 = vmatpush.msra.mxu0 0.0
    %1968 = vmatpush.msra.mxu0 0.0
    %1969 = vmatpush.msra.mxu0 0.0
    %1970 = vmatpush.msra.mxu0 0.0
    %1971 = vmatpush.msra.mxu0 0.0
    %1972 = vmatpush.msra.mxu0 0.0
    %1973 = vmatpush.msra.mxu0 0.0
    %1974 = vmatpush.msra.mxu0 0.0
    %1975 = vmatpush.msra.mxu0 0.0
    %1976 = vmatpush.msra.mxu0 0.0
    %1977 = vmatpush.msra.mxu0 0.0
    %1978 = vmatpush.msra.mxu0 0.0
    %v1979 = vand.u32 %v226, 4294901760
    %v1980 = vsub.f32 %v226, %v1979
    %1981 = vmatpush.msra.mxu0 %v1980
    %v1982 = vand.u32 %v1685, 4294901760
    %v1983 = vsub.f32 %v1685, %v1982
    %1984 = vmatmul.f32.gmra.mxu0 %v1983
    %v1985 = vpop.f32.mrf.mxu0
    %v1986 = vadd.f32 %v1902, %v1985
    %v1987 = vand.u32 %v1688, 4294901760
    %v1988 = vsub.f32 %v1688, %v1987
    %1989 = vmatmul.f32.gmra.mxu0 %v1988
    %v1990 = vpop.f32.mrf.mxu0
    %v1991 = vadd.f32 %v1906, %v1990
    %v1992 = vand.u32 %v1691, 4294901760
    %v1993 = vsub.f32 %v1691, %v1992
    %1994 = vmatmul.f32.gmra.mxu0 %v1993
    %v1995 = vpop.f32.mrf.mxu0
    %v1996 = vadd.f32 %v1910, %v1995
    %v1997 = vand.u32 %v1694, 4294901760
    %v1998 = vsub.f32 %v1694, %v1997
    %1999 = vmatmul.f32.gmra.mxu0 %v1998
    %v2000 = vpop.f32.mrf.mxu0
    %v2001 = vadd.f32 %v1914, %v2000
    %v2002 = vand.u32 %v1697, 4294901760
    %v2003 = vsub.f32 %v1697, %v2002
    %2004 = vmatmul.f32.gmra.mxu0 %v2003
    %v2005 = vpop.f32.mrf.mxu0
    %v2006 = vadd.f32 %v1918, %v2005
    %v2007 = vand.u32 %v1700, 4294901760
    %v2008 = vsub.f32 %v1700, %v2007
    %2009 = vmatmul.f32.gmra.mxu0 %v2008
    %v2010 = vpop.f32.mrf.mxu0
    %v2011 = vadd.f32 %v1922, %v2010
    %v2012 = vand.u32 %v1703, 4294901760
    %v2013 = vsub.f32 %v1703, %v2012
    %2014 = vmatmul.f32.gmra.mxu0 %v2013
    %v2015 = vpop.f32.mrf.mxu0
    %v2016 = vadd.f32 %v1926, %v2015
    %v2017 = vand.u32 %v1706, 4294901760
    %v2018 = vsub.f32 %v1706, %v2017
    %2019 = vmatmul.f32.gmra.mxu0 %v2018
    %v2020 = vpop.f32.mrf.mxu0
    %v2021 = vadd.f32 %v1930, %v2020
    %v2022 = vand.u32 %v1709, 4294901760
    %v2023 = vsub.f32 %v1709, %v2022
    %2024 = vmatmul.f32.gmra.mxu0 %v2023
    %v2025 = vpop.f32.mrf.mxu0
    %v2026 = vadd.f32 %v1934, %v2025
    %v2027 = vand.u32 %v1712, 4294901760
    %v2028 = vsub.f32 %v1712, %v2027
    %2029 = vmatmul.f32.gmra.mxu0 %v2028
    %v2030 = vpop.f32.mrf.mxu0
    %v2031 = vadd.f32 %v1938, %v2030
    %v2032 = vand.u32 %v1715, 4294901760
    %v2033 = vsub.f32 %v1715, %v2032
    %2034 = vmatmul.f32.gmra.mxu0 %v2033
    %v2035 = vpop.f32.mrf.mxu0
    %v2036 = vadd.f32 %v1942, %v2035
    %v2037 = vand.u32 %v1718, 4294901760
    %v2038 = vsub.f32 %v1718, %v2037
    %2039 = vmatmul.f32.gmra.mxu0 %v2038
    %v2040 = vpop.f32.mrf.mxu0
    %v2041 = vadd.f32 %v1946, %v2040
    %v2042 = vand.u32 %v1721, 4294901760
    %v2043 = vsub.f32 %v1721, %v2042
    %2044 = vmatmul.f32.gmra.mxu0 %v2043
    %v2045 = vpop.f32.mrf.mxu0
    %v2046 = vadd.f32 %v1950, %v2045
    %v2047 = vand.u32 %v1724, 4294901760
    %v2048 = vsub.f32 %v1724, %v2047
    %2049 = vmatmul.f32.gmra.mxu0 %v2048
    %v2050 = vpop.f32.mrf.mxu0
    %v2051 = vadd.f32 %v1954, %v2050
    %v2052 = vand.u32 %v1727, 4294901760
    %v2053 = vsub.f32 %v1727, %v2052
    %2054 = vmatmul.f32.gmra.mxu0 %v2053
    %v2055 = vpop.f32.mrf.mxu0
    %v2056 = vadd.f32 %v1958, %v2055
    %v2057 = vand.u32 %v1730, 4294901760
    %v2058 = vsub.f32 %v1730, %v2057
    %2059 = vmatmul.f32.gmra.mxu0 %v2058
    %v2060 = vpop.f32.mrf.mxu0
    %v2061 = vadd.f32 %v1962, %v2060
    %2062 = vdwg.mxu0
    %2063 = vmatpush.msra.mxu0 0.0
    %2064 = vmatpush.msra.mxu0 0.0
    %2065 = vmatpush.msra.mxu0 0.0
    %2066 = vmatpush.msra.mxu0 0.0
    %2067 = vmatpush.msra.mxu0 0.0
    %2068 = vmatpush.msra.mxu0 0.0
    %2069 = vmatpush.msra.mxu0 0.0
    %2070 = vmatpush.msra.mxu0 0.0
    %2071 = vmatpush.msra.mxu0 0.0
    %2072 = vmatpush.msra.mxu0 0.0
    %2073 = vmatpush.msra.mxu0 0.0
    %2074 = vmatpush.msra.mxu0 0.0
    %2075 = vmatpush.msra.mxu0 0.0
    %2076 = vmatpush.msra.mxu0 0.0
    %2077 = vmatpush.msra.mxu0 0.0
    %v2078 = vand.u32 %v226, 4294901760
    %2079 = vmatpush.msra.mxu0 %v2078
    %v2080 = vand.u32 %v1685, 4294901760
    %v2081 = vsub.f32 %v1685, %v2080
    %v2082 = vand.u32 %v2081, 4294901760
    %2083 = vmatmul.f32.gmra.mxu0 %v2082
    %v2084 = vpop.f32.mrf.mxu0
    %v2085 = vadd.f32 %v1986, %v2084
    %v2086 = vand.u32 %v1688, 4294901760
    %v2087 = vsub.f32 %v1688, %v2086
    %v2088 = vand.u32 %v2087, 4294901760
    %2089 = vmatmul.f32.gmra.mxu0 %v2088
    %v2090 = vpop.f32.mrf.mxu0
    %v2091 = vadd.f32 %v1991, %v2090
    %v2092 = vand.u32 %v1691, 4294901760
    %v2093 = vsub.f32 %v1691, %v2092
    %v2094 = vand.u32 %v2093, 4294901760
    %2095 = vmatmul.f32.gmra.mxu0 %v2094
    %v2096 = vpop.f32.mrf.mxu0
    %v2097 = vadd.f32 %v1996, %v2096
    %v2098 = vand.u32 %v1694, 4294901760
    %v2099 = vsub.f32 %v1694, %v2098
    %v2100 = vand.u32 %v2099, 4294901760
    %2101 = vmatmul.f32.gmra.mxu0 %v2100
    %v2102 = vpop.f32.mrf.mxu0
    %v2103 = vadd.f32 %v2001, %v2102
    %v2104 = vand.u32 %v1697, 4294901760
    %v2105 = vsub.f32 %v1697, %v2104
    %v2106 = vand.u32 %v2105, 4294901760
    %2107 = vmatmul.f32.gmra.mxu0 %v2106
    %v2108 = vpop.f32.mrf.mxu0
    %v2109 = vadd.f32 %v2006, %v2108
    %v2110 = vand.u32 %v1700, 4294901760
    %v2111 = vsub.f32 %v1700, %v2110
    %v2112 = vand.u32 %v2111, 4294901760
    %2113 = vmatmul.f32.gmra.mxu0 %v2112
    %v2114 = vpop.f32.mrf.mxu0
    %v2115 = vadd.f32 %v2011, %v2114
    %v2116 = vand.u32 %v1703, 4294901760
    %v2117 = vsub.f32 %v1703, %v2116
    %v2118 = vand.u32 %v2117, 4294901760
    %2119 = vmatmul.f32.gmra.mxu0 %v2118
    %v2120 = vpop.f32.mrf.mxu0
    %v2121 = vadd.f32 %v2016, %v2120
    %v2122 = vand.u32 %v1706, 4294901760
    %v2123 = vsub.f32 %v1706, %v2122
    %v2124 = vand.u32 %v2123, 4294901760
    %2125 = vmatmul.f32.gmra.mxu0 %v2124
    %v2126 = vpop.f32.mrf.mxu0
    %v2127 = vadd.f32 %v2021, %v2126
    %v2128 = vand.u32 %v1709, 4294901760
    %v2129 = vsub.f32 %v1709, %v2128
    %v2130 = vand.u32 %v2129, 4294901760
    %2131 = vmatmul.f32.gmra.mxu0 %v2130
    %v2132 = vpop.f32.mrf.mxu0
    %v2133 = vadd.f32 %v2026, %v2132
    %v2134 = vand.u32 %v1712, 4294901760
    %v2135 = vsub.f32 %v1712, %v2134
    %v2136 = vand.u32 %v2135, 4294901760
    %2137 = vmatmul.f32.gmra.mxu0 %v2136
    %v2138 = vpop.f32.mrf.mxu0
    %v2139 = vadd.f32 %v2031, %v2138
    %v2140 = vand.u32 %v1715, 4294901760
    %v2141 = vsub.f32 %v1715, %v2140
    %v2142 = vand.u32 %v2141, 4294901760
    %2143 = vmatmul.f32.gmra.mxu0 %v2142
    %v2144 = vpop.f32.mrf.mxu0
    %v2145 = vadd.f32 %v2036, %v2144
    %v2146 = vand.u32 %v1718, 4294901760
    %v2147 = vsub.f32 %v1718, %v2146
    %v2148 = vand.u32 %v2147, 4294901760
    %2149 = vmatmul.f32.gmra.mxu0 %v2148
    %v2150 = vpop.f32.mrf.mxu0
    %v2151 = vadd.f32 %v2041, %v2150
    %v2152 = vand.u32 %v1721, 4294901760
    %v2153 = vsub.f32 %v1721, %v2152
    %v2154 = vand.u32 %v2153, 4294901760
    %2155 = vmatmul.f32.gmra.mxu0 %v2154
    %v2156 = vpop.f32.mrf.mxu0
    %v2157 = vadd.f32 %v2046, %v2156
    %v2158 = vand.u32 %v1724, 4294901760
    %v2159 = vsub.f32 %v1724, %v2158
    %v2160 = vand.u32 %v2159, 4294901760
    %2161 = vmatmul.f32.gmra.mxu0 %v2160
    %v2162 = vpop.f32.mrf.mxu0
    %v2163 = vadd.f32 %v2051, %v2162
    %v2164 = vand.u32 %v1727, 4294901760
    %v2165 = vsub.f32 %v1727, %v2164
    %v2166 = vand.u32 %v2165, 4294901760
    %2167 = vmatmul.f32.gmra.mxu0 %v2166
    %v2168 = vpop.f32.mrf.mxu0
    %v2169 = vadd.f32 %v2056, %v2168
    %v2170 = vand.u32 %v1730, 4294901760
    %v2171 = vsub.f32 %v1730, %v2170
    %v2172 = vand.u32 %v2171, 4294901760
    %2173 = vmatmul.f32.gmra.mxu0 %v2172
    %v2174 = vpop.f32.mrf.mxu0
    %v2175 = vadd.f32 %v2061, %v2174
    %2176 = vdwg.mxu0
    %2177 = vmatpush.msra.mxu0 0.0
    %2178 = vmatpush.msra.mxu0 0.0
    %2179 = vmatpush.msra.mxu0 0.0
    %2180 = vmatpush.msra.mxu0 0.0
    %2181 = vmatpush.msra.mxu0 0.0
    %2182 = vmatpush.msra.mxu0 0.0
    %2183 = vmatpush.msra.mxu0 0.0
    %2184 = vmatpush.msra.mxu0 0.0
    %2185 = vmatpush.msra.mxu0 0.0
    %2186 = vmatpush.msra.mxu0 0.0
    %2187 = vmatpush.msra.mxu0 0.0
    %2188 = vmatpush.msra.mxu0 0.0
    %2189 = vmatpush.msra.mxu0 0.0
    %2190 = vmatpush.msra.mxu0 0.0
    %2191 = vmatpush.msra.mxu0 0.0
    %v2192 = vand.u32 %v226, 4294901760
    %v2193 = vsub.f32 %v226, %v2192
    %v2194 = vand.u32 %v2193, 4294901760
    %2195 = vmatpush.msra.mxu0 %v2194
    %v2196 = vand.u32 %v1685, 4294901760
    %2197 = vmatmul.f32.gmra.mxu0 %v2196
    %v2198 = vpop.f32.mrf.mxu0
    %v2199 = vadd.f32 %v2085, %v2198
    %v2200 = vand.u32 %v1688, 4294901760
    %2201 = vmatmul.f32.gmra.mxu0 %v2200
    %v2202 = vpop.f32.mrf.mxu0
    %v2203 = vadd.f32 %v2091, %v2202
    %v2204 = vand.u32 %v1691, 4294901760
    %2205 = vmatmul.f32.gmra.mxu0 %v2204
    %v2206 = vpop.f32.mrf.mxu0
    %v2207 = vadd.f32 %v2097, %v2206
    %v2208 = vand.u32 %v1694, 4294901760
    %2209 = vmatmul.f32.gmra.mxu0 %v2208
    %v2210 = vpop.f32.mrf.mxu0
    %v2211 = vadd.f32 %v2103, %v2210
    %v2212 = vand.u32 %v1697, 4294901760
    %2213 = vmatmul.f32.gmra.mxu0 %v2212
    %v2214 = vpop.f32.mrf.mxu0
    %v2215 = vadd.f32 %v2109, %v2214
    %v2216 = vand.u32 %v1700, 4294901760
    %2217 = vmatmul.f32.gmra.mxu0 %v2216
    %v2218 = vpop.f32.mrf.mxu0
    %v2219 = vadd.f32 %v2115, %v2218
    %v2220 = vand.u32 %v1703, 4294901760
    %2221 = vmatmul.f32.gmra.mxu0 %v2220
    %v2222 = vpop.f32.mrf.mxu0
    %v2223 = vadd.f32 %v2121, %v2222
    %v2224 = vand.u32 %v1706, 4294901760
    %2225 = vmatmul.f32.gmra.mxu0 %v2224
    %v2226 = vpop.f32.mrf.mxu0
    %v2227 = vadd.f32 %v2127, %v2226
    %v2228 = vand.u32 %v1709, 4294901760
    %2229 = vmatmul.f32.gmra.mxu0 %v2228
    %v2230 = vpop.f32.mrf.mxu0
    %v2231 = vadd.f32 %v2133, %v2230
    %v2232 = vand.u32 %v1712, 4294901760
    %2233 = vmatmul.f32.gmra.mxu0 %v2232
    %v2234 = vpop.f32.mrf.mxu0
    %v2235 = vadd.f32 %v2139, %v2234
    %v2236 = vand.u32 %v1715, 4294901760
    %2237 = vmatmul.f32.gmra.mxu0 %v2236
    %v2238 = vpop.f32.mrf.mxu0
    %v2239 = vadd.f32 %v2145, %v2238
    %v2240 = vand.u32 %v1718, 4294901760
    %2241 = vmatmul.f32.gmra.mxu0 %v2240
    %v2242 = vpop.f32.mrf.mxu0
    %v2243 = vadd.f32 %v2151, %v2242
    %v2244 = vand.u32 %v1721, 4294901760
    %2245 = vmatmul.f32.gmra.mxu0 %v2244
    %v2246 = vpop.f32.mrf.mxu0
    %v2247 = vadd.f32 %v2157, %v2246
    %v2248 = vand.u32 %v1724, 4294901760
    %2249 = vmatmul.f32.gmra.mxu0 %v2248
    %v2250 = vpop.f32.mrf.mxu0
    %v2251 = vadd.f32 %v2163, %v2250
    %v2252 = vand.u32 %v1727, 4294901760
    %2253 = vmatmul.f32.gmra.mxu0 %v2252
    %v2254 = vpop.f32.mrf.mxu0
    %v2255 = vadd.f32 %v2169, %v2254
    %v2256 = vand.u32 %v1730, 4294901760
    %2257 = vmatmul.f32.gmra.mxu0 %v2256
    %v2258 = vpop.f32.mrf.mxu0
    %v2259 = vadd.f32 %v2175, %v2258
    %2260 = vdwg.mxu0
    %2261 = vmatpush.msra.mxu0 0.0
    %2262 = vmatpush.msra.mxu0 0.0
    %2263 = vmatpush.msra.mxu0 0.0
    %2264 = vmatpush.msra.mxu0 0.0
    %2265 = vmatpush.msra.mxu0 0.0
    %2266 = vmatpush.msra.mxu0 0.0
    %2267 = vmatpush.msra.mxu0 0.0
    %2268 = vmatpush.msra.mxu0 0.0
    %2269 = vmatpush.msra.mxu0 0.0
    %2270 = vmatpush.msra.mxu0 0.0
    %2271 = vmatpush.msra.mxu0 0.0
    %2272 = vmatpush.msra.mxu0 0.0
    %2273 = vmatpush.msra.mxu0 0.0
    %2274 = vmatpush.msra.mxu0 0.0
    %2275 = vmatpush.msra.mxu0 0.0
    %v2276 = vand.u32 %v226, 4294901760
    %2277 = vmatpush.msra.mxu0 %v2276
    %v2278 = vand.u32 %v1685, 4294901760
    %2279 = vmatmul.f32.gmra.mxu0 %v2278
    %v2280 = vpop.f32.mrf.mxu0
    %v2281 = vadd.f32 %v2199, %v2280
    %v2282 = vand.u32 %v1688, 4294901760
    %2283 = vmatmul.f32.gmra.mxu0 %v2282
    %v2284 = vpop.f32.mrf.mxu0
    %v2285 = vadd.f32 %v2203, %v2284
    %v2286 = vand.u32 %v1691, 4294901760
    %2287 = vmatmul.f32.gmra.mxu0 %v2286
    %v2288 = vpop.f32.mrf.mxu0
    %v2289 = vadd.f32 %v2207, %v2288
    %v2290 = vand.u32 %v1694, 4294901760
    %2291 = vmatmul.f32.gmra.mxu0 %v2290
    %v2292 = vpop.f32.mrf.mxu0
    %v2293 = vadd.f32 %v2211, %v2292
    %v2294 = vand.u32 %v1697, 4294901760
    %2295 = vmatmul.f32.gmra.mxu0 %v2294
    %v2296 = vpop.f32.mrf.mxu0
    %v2297 = vadd.f32 %v2215, %v2296
    %v2298 = vand.u32 %v1700, 4294901760
    %2299 = vmatmul.f32.gmra.mxu0 %v2298
    %v2300 = vpop.f32.mrf.mxu0
    %v2301 = vadd.f32 %v2219, %v2300
    %v2302 = vand.u32 %v1703, 4294901760
    %2303 = vmatmul.f32.gmra.mxu0 %v2302
    %v2304 = vpop.f32.mrf.mxu0
    %v2305 = vadd.f32 %v2223, %v2304
    %v2306 = vand.u32 %v1706, 4294901760
    %2307 = vmatmul.f32.gmra.mxu0 %v2306
    %v2308 = vpop.f32.mrf.mxu0
    %v2309 = vadd.f32 %v2227, %v2308
    %v2310 = vand.u32 %v1709, 4294901760
    %2311 = vmatmul.f32.gmra.mxu0 %v2310
    %v2312 = vpop.f32.mrf.mxu0
    %v2313 = vadd.f32 %v2231, %v2312
    %v2314 = vand.u32 %v1712, 4294901760
    %2315 = vmatmul.f32.gmra.mxu0 %v2314
    %v2316 = vpop.f32.mrf.mxu0
    %v2317 = vadd.f32 %v2235, %v2316
    %v2318 = vand.u32 %v1715, 4294901760
    %2319 = vmatmul.f32.gmra.mxu0 %v2318
    %v2320 = vpop.f32.mrf.mxu0
    %v2321 = vadd.f32 %v2239, %v2320
    %v2322 = vand.u32 %v1718, 4294901760
    %2323 = vmatmul.f32.gmra.mxu0 %v2322
    %v2324 = vpop.f32.mrf.mxu0
    %v2325 = vadd.f32 %v2243, %v2324
    %v2326 = vand.u32 %v1721, 4294901760
    %2327 = vmatmul.f32.gmra.mxu0 %v2326
    %v2328 = vpop.f32.mrf.mxu0
    %v2329 = vadd.f32 %v2247, %v2328
    %v2330 = vand.u32 %v1724, 4294901760
    %2331 = vmatmul.f32.gmra.mxu0 %v2330
    %v2332 = vpop.f32.mrf.mxu0
    %v2333 = vadd.f32 %v2251, %v2332
    %v2334 = vand.u32 %v1727, 4294901760
    %2335 = vmatmul.f32.gmra.mxu0 %v2334
    %v2336 = vpop.f32.mrf.mxu0
    %v2337 = vadd.f32 %v2255, %v2336
    %v2338 = vand.u32 %v1730, 4294901760
    %2339 = vmatmul.f32.gmra.mxu0 %v2338
    %v2340 = vpop.f32.mrf.mxu0
    %v2341 = vadd.f32 %v2259, %v2340
    %2342 = vdwg.mxu0
    %s2343 = scalar_lea.vmem [#allocation6], 256
    %2344 = vst [vmem:[%s2343] sm:$0xff] %v2281
    %2345 = vst [vmem:[%s2343 + $0x8] sm:$0xff] %v2285
    %2346 = vst [vmem:[%s2343 + $0x10] sm:$0xff] %v2289
    %2347 = vst [vmem:[%s2343 + $0x18] sm:$0xff] %v2293
    %2348 = vst [vmem:[%s2343 + $0x20] sm:$0xff] %v2297
    %2349 = vst [vmem:[%s2343 + $0x28] sm:$0xff] %v2301
    %2350 = vst [vmem:[%s2343 + $0x30] sm:$0xff] %v2305
    %2351 = vst [vmem:[%s2343 + $0x38] sm:$0xff] %v2309
    %2352 = vst [vmem:[%s2343 + $0x40] sm:$0xff] %v2313
    %2353 = vst [vmem:[%s2343 + $0x48] sm:$0xff] %v2317
    %2354 = vst [vmem:[%s2343 + $0x50] sm:$0xff] %v2321
    %2355 = vst [vmem:[%s2343 + $0x58] sm:$0xff] %v2325
    %2356 = vst [vmem:[%s2343 + $0x60] sm:$0xff] %v2329
    %2357 = vst [vmem:[%s2343 + $0x68] sm:$0xff] %v2333
    %2358 = vst [vmem:[%s2343 + $0x70] sm:$0xff] %v2337
    %2359 = vst [vmem:[%s2343 + $0x78] sm:$0xff] %v2341
    %s2360 = scalar_lea.vmem [#allocation2], 24
    %v2361 = vld [vmem:[%s2360] sm:$0xff]
    %2362 = vxpose.xlu0.b32.start [1/16] %v2361, 128
    %2363 = vxpose.xlu0.b32.cont [2/16] 0.0, 128
    %2364 = vxpose.xlu0.b32.cont [3/16] 0.0, 128
    %2365 = vxpose.xlu0.b32.cont [4/16] 0.0, 128
    %2366 = vxpose.xlu0.b32.cont [5/16] 0.0, 128
    %2367 = vxpose.xlu0.b32.cont [6/16] 0.0, 128
    %2368 = vxpose.xlu0.b32.cont [7/16] 0.0, 128
    %2369 = vxpose.xlu0.b32.cont [8/16] 0.0, 128
    %2370 = vxpose.xlu0.b32.cont [9/16] 0.0, 128
    %2371 = vxpose.xlu0.b32.cont [10/16] 0.0, 128
    %2372 = vxpose.xlu0.b32.cont [11/16] 0.0, 128
    %2373 = vxpose.xlu0.b32.cont [12/16] 0.0, 128
    %2374 = vxpose.xlu0.b32.cont [13/16] 0.0, 128
    %2375 = vxpose.xlu0.b32.cont [14/16] 0.0, 128
    %2376 = vxpose.xlu0.b32.cont [15/16] 0.0, 128
    %2377 = vxpose.xlu0.b32.end [16/16] 0.0, 128
    %v2378 = vpop.trf.xlu0
    %v2379 = vpop.trf.xlu0
    %v2380 = vpop.trf.xlu0
    %v2381 = vpop.trf.xlu0
    %v2382 = vpop.trf.xlu0
    %v2383 = vpop.trf.xlu0
    %v2384 = vpop.trf.xlu0
    %v2385 = vpop.trf.xlu0
    %v2386 = vpop.trf.xlu0
    %v2387 = vpop.trf.xlu0
    %v2388 = vpop.trf.xlu0
    %v2389 = vpop.trf.xlu0
    %v2390 = vpop.trf.xlu0
    %v2391 = vpop.trf.xlu0
    %v2392 = vpop.trf.xlu0
    %v2393 = vpop.trf.xlu0
    %v2395 = vsel %vm264, %v2378, 0
    %v2398 = vsel %vm264, %v2379, 0
    %v2401 = vsel %vm264, %v2380, 0
    %v2404 = vsel %vm264, %v2381, 0
    %v2407 = vsel %vm264, %v2382, 0
    %v2410 = vsel %vm264, %v2383, 0
    %v2413 = vsel %vm264, %v2384, 0
    %v2416 = vsel %vm264, %v2385, 0
    %v2419 = vsel %vm264, %v2386, 0
    %v2422 = vsel %vm264, %v2387, 0
    %v2425 = vsel %vm264, %v2388, 0
    %v2428 = vsel %vm264, %v2389, 0
    %v2431 = vsel %vm264, %v2390, 0
    %v2434 = vsel %vm264, %v2391, 0
    %v2437 = vsel %vm264, %v2392, 0
    %v2440 = vsel %vm264, %v2393, 0
    %2442 = vmatpush.msra.mxu0 0.0
    %2443 = vmatpush.msra.mxu0 0.0
    %2444 = vmatpush.msra.mxu0 0.0
    %2445 = vmatpush.msra.mxu0 0.0
    %2446 = vmatpush.msra.mxu0 0.0
    %2447 = vmatpush.msra.mxu0 0.0
    %2448 = vmatpush.msra.mxu0 0.0
    %2449 = vmatpush.msra.mxu0 0.0
    %2450 = vmatpush.msra.mxu0 0.0
    %2451 = vmatpush.msra.mxu0 0.0
    %2452 = vmatpush.msra.mxu0 0.0
    %2453 = vmatpush.msra.mxu0 0.0
    %2454 = vmatpush.msra.mxu0 0.0
    %2455 = vmatpush.msra.mxu0 0.0
    %2456 = vmatpush.msra.mxu0 0.0
    %v2457 = vand.u32 %v226, 4294901760
    %2458 = vmatpush.msra.mxu0 %v2457
    %v2459 = vand.u32 %v2395, 4294901760
    %v2460 = vsub.f32 %v2395, %v2459
    %v2461 = vand.u32 %v2460, 4294901760
    %v2462 = vsub.f32 %v2460, %v2461
    %v2463 = vand.u32 %v2462, 4294901760
    %2464 = vmatmul.f32.gmra.mxu0 %v2463
    %v2465 = vpop.f32.mrf.mxu0
    %v2466 = vadd.f32 %v230, %v2465
    %v2467 = vand.u32 %v2398, 4294901760
    %v2468 = vsub.f32 %v2398, %v2467
    %v2469 = vand.u32 %v2468, 4294901760
    %v2470 = vsub.f32 %v2468, %v2469
    %v2471 = vand.u32 %v2470, 4294901760
    %2472 = vmatmul.f32.gmra.mxu0 %v2471
    %v2473 = vpop.f32.mrf.mxu0
    %v2474 = vadd.f32 %v230, %v2473
    %v2475 = vand.u32 %v2401, 4294901760
    %v2476 = vsub.f32 %v2401, %v2475
    %v2477 = vand.u32 %v2476, 4294901760
    %v2478 = vsub.f32 %v2476, %v2477
    %v2479 = vand.u32 %v2478, 4294901760
    %2480 = vmatmul.f32.gmra.mxu0 %v2479
    %v2481 = vpop.f32.mrf.mxu0
    %v2482 = vadd.f32 %v230, %v2481
    %v2483 = vand.u32 %v2404, 4294901760
    %v2484 = vsub.f32 %v2404, %v2483
    %v2485 = vand.u32 %v2484, 4294901760
    %v2486 = vsub.f32 %v2484, %v2485
    %v2487 = vand.u32 %v2486, 4294901760
    %2488 = vmatmul.f32.gmra.mxu0 %v2487
    %v2489 = vpop.f32.mrf.mxu0
    %v2490 = vadd.f32 %v230, %v2489
    %v2491 = vand.u32 %v2407, 4294901760
    %v2492 = vsub.f32 %v2407, %v2491
    %v2493 = vand.u32 %v2492, 4294901760
    %v2494 = vsub.f32 %v2492, %v2493
    %v2495 = vand.u32 %v2494, 4294901760
    %2496 = vmatmul.f32.gmra.mxu0 %v2495
    %v2497 = vpop.f32.mrf.mxu0
    %v2498 = vadd.f32 %v230, %v2497
    %v2499 = vand.u32 %v2410, 4294901760
    %v2500 = vsub.f32 %v2410, %v2499
    %v2501 = vand.u32 %v2500, 4294901760
    %v2502 = vsub.f32 %v2500, %v2501
    %v2503 = vand.u32 %v2502, 4294901760
    %2504 = vmatmul.f32.gmra.mxu0 %v2503
    %v2505 = vpop.f32.mrf.mxu0
    %v2506 = vadd.f32 %v230, %v2505
    %v2507 = vand.u32 %v2413, 4294901760
    %v2508 = vsub.f32 %v2413, %v2507
    %v2509 = vand.u32 %v2508, 4294901760
    %v2510 = vsub.f32 %v2508, %v2509
    %v2511 = vand.u32 %v2510, 4294901760
    %2512 = vmatmul.f32.gmra.mxu0 %v2511
    %v2513 = vpop.f32.mrf.mxu0
    %v2514 = vadd.f32 %v230, %v2513
    %v2515 = vand.u32 %v2416, 4294901760
    %v2516 = vsub.f32 %v2416, %v2515
    %v2517 = vand.u32 %v2516, 4294901760
    %v2518 = vsub.f32 %v2516, %v2517
    %v2519 = vand.u32 %v2518, 4294901760
    %2520 = vmatmul.f32.gmra.mxu0 %v2519
    %v2521 = vpop.f32.mrf.mxu0
    %v2522 = vadd.f32 %v230, %v2521
    %v2523 = vand.u32 %v2419, 4294901760
    %v2524 = vsub.f32 %v2419, %v2523
    %v2525 = vand.u32 %v2524, 4294901760
    %v2526 = vsub.f32 %v2524, %v2525
    %v2527 = vand.u32 %v2526, 4294901760
    %2528 = vmatmul.f32.gmra.mxu0 %v2527
    %v2529 = vpop.f32.mrf.mxu0
    %v2530 = vadd.f32 %v230, %v2529
    %v2531 = vand.u32 %v2422, 4294901760
    %v2532 = vsub.f32 %v2422, %v2531
    %v2533 = vand.u32 %v2532, 4294901760
    %v2534 = vsub.f32 %v2532, %v2533
    %v2535 = vand.u32 %v2534, 4294901760
    %2536 = vmatmul.f32.gmra.mxu0 %v2535
    %v2537 = vpop.f32.mrf.mxu0
    %v2538 = vadd.f32 %v230, %v2537
    %v2539 = vand.u32 %v2425, 4294901760
    %v2540 = vsub.f32 %v2425, %v2539
    %v2541 = vand.u32 %v2540, 4294901760
    %v2542 = vsub.f32 %v2540, %v2541
    %v2543 = vand.u32 %v2542, 4294901760
    %2544 = vmatmul.f32.gmra.mxu0 %v2543
    %v2545 = vpop.f32.mrf.mxu0
    %v2546 = vadd.f32 %v230, %v2545
    %v2547 = vand.u32 %v2428, 4294901760
    %v2548 = vsub.f32 %v2428, %v2547
    %v2549 = vand.u32 %v2548, 4294901760
    %v2550 = vsub.f32 %v2548, %v2549
    %v2551 = vand.u32 %v2550, 4294901760
    %2552 = vmatmul.f32.gmra.mxu0 %v2551
    %v2553 = vpop.f32.mrf.mxu0
    %v2554 = vadd.f32 %v230, %v2553
    %v2555 = vand.u32 %v2431, 4294901760
    %v2556 = vsub.f32 %v2431, %v2555
    %v2557 = vand.u32 %v2556, 4294901760
    %v2558 = vsub.f32 %v2556, %v2557
    %v2559 = vand.u32 %v2558, 4294901760
    %2560 = vmatmul.f32.gmra.mxu0 %v2559
    %v2561 = vpop.f32.mrf.mxu0
    %v2562 = vadd.f32 %v230, %v2561
    %v2563 = vand.u32 %v2434, 4294901760
    %v2564 = vsub.f32 %v2434, %v2563
    %v2565 = vand.u32 %v2564, 4294901760
    %v2566 = vsub.f32 %v2564, %v2565
    %v2567 = vand.u32 %v2566, 4294901760
    %2568 = vmatmul.f32.gmra.mxu0 %v2567
    %v2569 = vpop.f32.mrf.mxu0
    %v2570 = vadd.f32 %v230, %v2569
    %v2571 = vand.u32 %v2437, 4294901760
    %v2572 = vsub.f32 %v2437, %v2571
    %v2573 = vand.u32 %v2572, 4294901760
    %v2574 = vsub.f32 %v2572, %v2573
    %v2575 = vand.u32 %v2574, 4294901760
    %2576 = vmatmul.f32.gmra.mxu0 %v2575
    %v2577 = vpop.f32.mrf.mxu0
    %v2578 = vadd.f32 %v230, %v2577
    %v2579 = vand.u32 %v2440, 4294901760
    %v2580 = vsub.f32 %v2440, %v2579
    %v2581 = vand.u32 %v2580, 4294901760
    %v2582 = vsub.f32 %v2580, %v2581
    %v2583 = vand.u32 %v2582, 4294901760
    %2584 = vmatmul.f32.gmra.mxu0 %v2583
    %v2585 = vpop.f32.mrf.mxu0
    %v2586 = vadd.f32 %v230, %v2585
    %2587 = vdwg.mxu0
    %2588 = vmatpush.msra.mxu0 0.0
    %2589 = vmatpush.msra.mxu0 0.0
    %2590 = vmatpush.msra.mxu0 0.0
    %2591 = vmatpush.msra.mxu0 0.0
    %2592 = vmatpush.msra.mxu0 0.0
    %2593 = vmatpush.msra.mxu0 0.0
    %2594 = vmatpush.msra.mxu0 0.0
    %2595 = vmatpush.msra.mxu0 0.0
    %2596 = vmatpush.msra.mxu0 0.0
    %2597 = vmatpush.msra.mxu0 0.0
    %2598 = vmatpush.msra.mxu0 0.0
    %2599 = vmatpush.msra.mxu0 0.0
    %2600 = vmatpush.msra.mxu0 0.0
    %2601 = vmatpush.msra.mxu0 0.0
    %2602 = vmatpush.msra.mxu0 0.0
    %v2603 = vand.u32 %v226, 4294901760
    %v2604 = vsub.f32 %v226, %v2603
    %v2605 = vand.u32 %v2604, 4294901760
    %v2606 = vsub.f32 %v2604, %v2605
    %v2607 = vand.u32 %v2606, 4294901760
    %2608 = vmatpush.msra.mxu0 %v2607
    %v2609 = vand.u32 %v2395, 4294901760
    %2610 = vmatmul.f32.gmra.mxu0 %v2609
    %v2611 = vpop.f32.mrf.mxu0
    %v2612 = vadd.f32 %v2466, %v2611
    %v2613 = vand.u32 %v2398, 4294901760
    %2614 = vmatmul.f32.gmra.mxu0 %v2613
    %v2615 = vpop.f32.mrf.mxu0
    %v2616 = vadd.f32 %v2474, %v2615
    %v2617 = vand.u32 %v2401, 4294901760
    %2618 = vmatmul.f32.gmra.mxu0 %v2617
    %v2619 = vpop.f32.mrf.mxu0
    %v2620 = vadd.f32 %v2482, %v2619
    %v2621 = vand.u32 %v2404, 4294901760
    %2622 = vmatmul.f32.gmra.mxu0 %v2621
    %v2623 = vpop.f32.mrf.mxu0
    %v2624 = vadd.f32 %v2490, %v2623
    %v2625 = vand.u32 %v2407, 4294901760
    %2626 = vmatmul.f32.gmra.mxu0 %v2625
    %v2627 = vpop.f32.mrf.mxu0
    %v2628 = vadd.f32 %v2498, %v2627
    %v2629 = vand.u32 %v2410, 4294901760
    %2630 = vmatmul.f32.gmra.mxu0 %v2629
    %v2631 = vpop.f32.mrf.mxu0
    %v2632 = vadd.f32 %v2506, %v2631
    %v2633 = vand.u32 %v2413, 4294901760
    %2634 = vmatmul.f32.gmra.mxu0 %v2633
    %v2635 = vpop.f32.mrf.mxu0
    %v2636 = vadd.f32 %v2514, %v2635
    %v2637 = vand.u32 %v2416, 4294901760
    %2638 = vmatmul.f32.gmra.mxu0 %v2637
    %v2639 = vpop.f32.mrf.mxu0
    %v2640 = vadd.f32 %v2522, %v2639
    %v2641 = vand.u32 %v2419, 4294901760
    %2642 = vmatmul.f32.gmra.mxu0 %v2641
    %v2643 = vpop.f32.mrf.mxu0
    %v2644 = vadd.f32 %v2530, %v2643
    %v2645 = vand.u32 %v2422, 4294901760
    %2646 = vmatmul.f32.gmra.mxu0 %v2645
    %v2647 = vpop.f32.mrf.mxu0
    %v2648 = vadd.f32 %v2538, %v2647
    %v2649 = vand.u32 %v2425, 4294901760
    %2650 = vmatmul.f32.gmra.mxu0 %v2649
    %v2651 = vpop.f32.mrf.mxu0
    %v2652 = vadd.f32 %v2546, %v2651
    %v2653 = vand.u32 %v2428, 4294901760
    %2654 = vmatmul.f32.gmra.mxu0 %v2653
    %v2655 = vpop.f32.mrf.mxu0
    %v2656 = vadd.f32 %v2554, %v2655
    %v2657 = vand.u32 %v2431, 4294901760
    %2658 = vmatmul.f32.gmra.mxu0 %v2657
    %v2659 = vpop.f32.mrf.mxu0
    %v2660 = vadd.f32 %v2562, %v2659
    %v2661 = vand.u32 %v2434, 4294901760
    %2662 = vmatmul.f32.gmra.mxu0 %v2661
    %v2663 = vpop.f32.mrf.mxu0
    %v2664 = vadd.f32 %v2570, %v2663
    %v2665 = vand.u32 %v2437, 4294901760
    %2666 = vmatmul.f32.gmra.mxu0 %v2665
    %v2667 = vpop.f32.mrf.mxu0
    %v2668 = vadd.f32 %v2578, %v2667
    %v2669 = vand.u32 %v2440, 4294901760
    %2670 = vmatmul.f32.gmra.mxu0 %v2669
    %v2671 = vpop.f32.mrf.mxu0
    %v2672 = vadd.f32 %v2586, %v2671
    %2673 = vdwg.mxu0
    %2674 = vmatpush.msra.mxu0 0.0
    %2675 = vmatpush.msra.mxu0 0.0
    %2676 = vmatpush.msra.mxu0 0.0
    %2677 = vmatpush.msra.mxu0 0.0
    %2678 = vmatpush.msra.mxu0 0.0
    %2679 = vmatpush.msra.mxu0 0.0
    %2680 = vmatpush.msra.mxu0 0.0
    %2681 = vmatpush.msra.mxu0 0.0
    %2682 = vmatpush.msra.mxu0 0.0
    %2683 = vmatpush.msra.mxu0 0.0
    %2684 = vmatpush.msra.mxu0 0.0
    %2685 = vmatpush.msra.mxu0 0.0
    %2686 = vmatpush.msra.mxu0 0.0
    %2687 = vmatpush.msra.mxu0 0.0
    %2688 = vmatpush.msra.mxu0 0.0
    %v2689 = vand.u32 %v226, 4294901760
    %v2690 = vsub.f32 %v226, %v2689
    %2691 = vmatpush.msra.mxu0 %v2690
    %v2692 = vand.u32 %v2395, 4294901760
    %v2693 = vsub.f32 %v2395, %v2692
    %2694 = vmatmul.f32.gmra.mxu0 %v2693
    %v2695 = vpop.f32.mrf.mxu0
    %v2696 = vadd.f32 %v2612, %v2695
    %v2697 = vand.u32 %v2398, 4294901760
    %v2698 = vsub.f32 %v2398, %v2697
    %2699 = vmatmul.f32.gmra.mxu0 %v2698
    %v2700 = vpop.f32.mrf.mxu0
    %v2701 = vadd.f32 %v2616, %v2700
    %v2702 = vand.u32 %v2401, 4294901760
    %v2703 = vsub.f32 %v2401, %v2702
    %2704 = vmatmul.f32.gmra.mxu0 %v2703
    %v2705 = vpop.f32.mrf.mxu0
    %v2706 = vadd.f32 %v2620, %v2705
    %v2707 = vand.u32 %v2404, 4294901760
    %v2708 = vsub.f32 %v2404, %v2707
    %2709 = vmatmul.f32.gmra.mxu0 %v2708
    %v2710 = vpop.f32.mrf.mxu0
    %v2711 = vadd.f32 %v2624, %v2710
    %v2712 = vand.u32 %v2407, 4294901760
    %v2713 = vsub.f32 %v2407, %v2712
    %2714 = vmatmul.f32.gmra.mxu0 %v2713
    %v2715 = vpop.f32.mrf.mxu0
    %v2716 = vadd.f32 %v2628, %v2715
    %v2717 = vand.u32 %v2410, 4294901760
    %v2718 = vsub.f32 %v2410, %v2717
    %2719 = vmatmul.f32.gmra.mxu0 %v2718
    %v2720 = vpop.f32.mrf.mxu0
    %v2721 = vadd.f32 %v2632, %v2720
    %v2722 = vand.u32 %v2413, 4294901760
    %v2723 = vsub.f32 %v2413, %v2722
    %2724 = vmatmul.f32.gmra.mxu0 %v2723
    %v2725 = vpop.f32.mrf.mxu0
    %v2726 = vadd.f32 %v2636, %v2725
    %v2727 = vand.u32 %v2416, 4294901760
    %v2728 = vsub.f32 %v2416, %v2727
    %2729 = vmatmul.f32.gmra.mxu0 %v2728
    %v2730 = vpop.f32.mrf.mxu0
    %v2731 = vadd.f32 %v2640, %v2730
    %v2732 = vand.u32 %v2419, 4294901760
    %v2733 = vsub.f32 %v2419, %v2732
    %2734 = vmatmul.f32.gmra.mxu0 %v2733
    %v2735 = vpop.f32.mrf.mxu0
    %v2736 = vadd.f32 %v2644, %v2735
    %v2737 = vand.u32 %v2422, 4294901760
    %v2738 = vsub.f32 %v2422, %v2737
    %2739 = vmatmul.f32.gmra.mxu0 %v2738
    %v2740 = vpop.f32.mrf.mxu0
    %v2741 = vadd.f32 %v2648, %v2740
    %v2742 = vand.u32 %v2425, 4294901760
    %v2743 = vsub.f32 %v2425, %v2742
    %2744 = vmatmul.f32.gmra.mxu0 %v2743
    %v2745 = vpop.f32.mrf.mxu0
    %v2746 = vadd.f32 %v2652, %v2745
    %v2747 = vand.u32 %v2428, 4294901760
    %v2748 = vsub.f32 %v2428, %v2747
    %2749 = vmatmul.f32.gmra.mxu0 %v2748
    %v2750 = vpop.f32.mrf.mxu0
    %v2751 = vadd.f32 %v2656, %v2750
    %v2752 = vand.u32 %v2431, 4294901760
    %v2753 = vsub.f32 %v2431, %v2752
    %2754 = vmatmul.f32.gmra.mxu0 %v2753
    %v2755 = vpop.f32.mrf.mxu0
    %v2756 = vadd.f32 %v2660, %v2755
    %v2757 = vand.u32 %v2434, 4294901760
    %v2758 = vsub.f32 %v2434, %v2757
    %2759 = vmatmul.f32.gmra.mxu0 %v2758
    %v2760 = vpop.f32.mrf.mxu0
    %v2761 = vadd.f32 %v2664, %v2760
    %v2762 = vand.u32 %v2437, 4294901760
    %v2763 = vsub.f32 %v2437, %v2762
    %2764 = vmatmul.f32.gmra.mxu0 %v2763
    %v2765 = vpop.f32.mrf.mxu0
    %v2766 = vadd.f32 %v2668, %v2765
    %v2767 = vand.u32 %v2440, 4294901760
    %v2768 = vsub.f32 %v2440, %v2767
    %2769 = vmatmul.f32.gmra.mxu0 %v2768
    %v2770 = vpop.f32.mrf.mxu0
    %v2771 = vadd.f32 %v2672, %v2770
    %2772 = vdwg.mxu0
    %2773 = vmatpush.msra.mxu0 0.0
    %2774 = vmatpush.msra.mxu0 0.0
    %2775 = vmatpush.msra.mxu0 0.0
    %2776 = vmatpush.msra.mxu0 0.0
    %2777 = vmatpush.msra.mxu0 0.0
    %2778 = vmatpush.msra.mxu0 0.0
    %2779 = vmatpush.msra.mxu0 0.0
    %2780 = vmatpush.msra.mxu0 0.0
    %2781 = vmatpush.msra.mxu0 0.0
    %2782 = vmatpush.msra.mxu0 0.0
    %2783 = vmatpush.msra.mxu0 0.0
    %2784 = vmatpush.msra.mxu0 0.0
    %2785 = vmatpush.msra.mxu0 0.0
    %2786 = vmatpush.msra.mxu0 0.0
    %2787 = vmatpush.msra.mxu0 0.0
    %v2788 = vand.u32 %v226, 4294901760
    %2789 = vmatpush.msra.mxu0 %v2788
    %v2790 = vand.u32 %v2395, 4294901760
    %v2791 = vsub.f32 %v2395, %v2790
    %v2792 = vand.u32 %v2791, 4294901760
    %2793 = vmatmul.f32.gmra.mxu0 %v2792
    %v2794 = vpop.f32.mrf.mxu0
    %v2795 = vadd.f32 %v2696, %v2794
    %v2796 = vand.u32 %v2398, 4294901760
    %v2797 = vsub.f32 %v2398, %v2796
    %v2798 = vand.u32 %v2797, 4294901760
    %2799 = vmatmul.f32.gmra.mxu0 %v2798
    %v2800 = vpop.f32.mrf.mxu0
    %v2801 = vadd.f32 %v2701, %v2800
    %v2802 = vand.u32 %v2401, 4294901760
    %v2803 = vsub.f32 %v2401, %v2802
    %v2804 = vand.u32 %v2803, 4294901760
    %2805 = vmatmul.f32.gmra.mxu0 %v2804
    %v2806 = vpop.f32.mrf.mxu0
    %v2807 = vadd.f32 %v2706, %v2806
    %v2808 = vand.u32 %v2404, 4294901760
    %v2809 = vsub.f32 %v2404, %v2808
    %v2810 = vand.u32 %v2809, 4294901760
    %2811 = vmatmul.f32.gmra.mxu0 %v2810
    %v2812 = vpop.f32.mrf.mxu0
    %v2813 = vadd.f32 %v2711, %v2812
    %v2814 = vand.u32 %v2407, 4294901760
    %v2815 = vsub.f32 %v2407, %v2814
    %v2816 = vand.u32 %v2815, 4294901760
    %2817 = vmatmul.f32.gmra.mxu0 %v2816
    %v2818 = vpop.f32.mrf.mxu0
    %v2819 = vadd.f32 %v2716, %v2818
    %v2820 = vand.u32 %v2410, 4294901760
    %v2821 = vsub.f32 %v2410, %v2820
    %v2822 = vand.u32 %v2821, 4294901760
    %2823 = vmatmul.f32.gmra.mxu0 %v2822
    %v2824 = vpop.f32.mrf.mxu0
    %v2825 = vadd.f32 %v2721, %v2824
    %v2826 = vand.u32 %v2413, 4294901760
    %v2827 = vsub.f32 %v2413, %v2826
    %v2828 = vand.u32 %v2827, 4294901760
    %2829 = vmatmul.f32.gmra.mxu0 %v2828
    %v2830 = vpop.f32.mrf.mxu0
    %v2831 = vadd.f32 %v2726, %v2830
    %v2832 = vand.u32 %v2416, 4294901760
    %v2833 = vsub.f32 %v2416, %v2832
    %v2834 = vand.u32 %v2833, 4294901760
    %2835 = vmatmul.f32.gmra.mxu0 %v2834
    %v2836 = vpop.f32.mrf.mxu0
    %v2837 = vadd.f32 %v2731, %v2836
    %v2838 = vand.u32 %v2419, 4294901760
    %v2839 = vsub.f32 %v2419, %v2838
    %v2840 = vand.u32 %v2839, 4294901760
    %2841 = vmatmul.f32.gmra.mxu0 %v2840
    %v2842 = vpop.f32.mrf.mxu0
    %v2843 = vadd.f32 %v2736, %v2842
    %v2844 = vand.u32 %v2422, 4294901760
    %v2845 = vsub.f32 %v2422, %v2844
    %v2846 = vand.u32 %v2845, 4294901760
    %2847 = vmatmul.f32.gmra.mxu0 %v2846
    %v2848 = vpop.f32.mrf.mxu0
    %v2849 = vadd.f32 %v2741, %v2848
    %v2850 = vand.u32 %v2425, 4294901760
    %v2851 = vsub.f32 %v2425, %v2850
    %v2852 = vand.u32 %v2851, 4294901760
    %2853 = vmatmul.f32.gmra.mxu0 %v2852
    %v2854 = vpop.f32.mrf.mxu0
    %v2855 = vadd.f32 %v2746, %v2854
    %v2856 = vand.u32 %v2428, 4294901760
    %v2857 = vsub.f32 %v2428, %v2856
    %v2858 = vand.u32 %v2857, 4294901760
    %2859 = vmatmul.f32.gmra.mxu0 %v2858
    %v2860 = vpop.f32.mrf.mxu0
    %v2861 = vadd.f32 %v2751, %v2860
    %v2862 = vand.u32 %v2431, 4294901760
    %v2863 = vsub.f32 %v2431, %v2862
    %v2864 = vand.u32 %v2863, 4294901760
    %2865 = vmatmul.f32.gmra.mxu0 %v2864
    %v2866 = vpop.f32.mrf.mxu0
    %v2867 = vadd.f32 %v2756, %v2866
    %v2868 = vand.u32 %v2434, 4294901760
    %v2869 = vsub.f32 %v2434, %v2868
    %v2870 = vand.u32 %v2869, 4294901760
    %2871 = vmatmul.f32.gmra.mxu0 %v2870
    %v2872 = vpop.f32.mrf.mxu0
    %v2873 = vadd.f32 %v2761, %v2872
    %v2874 = vand.u32 %v2437, 4294901760
    %v2875 = vsub.f32 %v2437, %v2874
    %v2876 = vand.u32 %v2875, 4294901760
    %2877 = vmatmul.f32.gmra.mxu0 %v2876
    %v2878 = vpop.f32.mrf.mxu0
    %v2879 = vadd.f32 %v2766, %v2878
    %v2880 = vand.u32 %v2440, 4294901760
    %v2881 = vsub.f32 %v2440, %v2880
    %v2882 = vand.u32 %v2881, 4294901760
    %2883 = vmatmul.f32.gmra.mxu0 %v2882
    %v2884 = vpop.f32.mrf.mxu0
    %v2885 = vadd.f32 %v2771, %v2884
    %2886 = vdwg.mxu0
    %2887 = vmatpush.msra.mxu0 0.0
    %2888 = vmatpush.msra.mxu0 0.0
    %2889 = vmatpush.msra.mxu0 0.0
    %2890 = vmatpush.msra.mxu0 0.0
    %2891 = vmatpush.msra.mxu0 0.0
    %2892 = vmatpush.msra.mxu0 0.0
    %2893 = vmatpush.msra.mxu0 0.0
    %2894 = vmatpush.msra.mxu0 0.0
    %2895 = vmatpush.msra.mxu0 0.0
    %2896 = vmatpush.msra.mxu0 0.0
    %2897 = vmatpush.msra.mxu0 0.0
    %2898 = vmatpush.msra.mxu0 0.0
    %2899 = vmatpush.msra.mxu0 0.0
    %2900 = vmatpush.msra.mxu0 0.0
    %2901 = vmatpush.msra.mxu0 0.0
    %v2902 = vand.u32 %v226, 4294901760
    %v2903 = vsub.f32 %v226, %v2902
    %v2904 = vand.u32 %v2903, 4294901760
    %2905 = vmatpush.msra.mxu0 %v2904
    %v2906 = vand.u32 %v2395, 4294901760
    %2907 = vmatmul.f32.gmra.mxu0 %v2906
    %v2908 = vpop.f32.mrf.mxu0
    %v2909 = vadd.f32 %v2795, %v2908
    %v2910 = vand.u32 %v2398, 4294901760
    %2911 = vmatmul.f32.gmra.mxu0 %v2910
    %v2912 = vpop.f32.mrf.mxu0
    %v2913 = vadd.f32 %v2801, %v2912
    %v2914 = vand.u32 %v2401, 4294901760
    %2915 = vmatmul.f32.gmra.mxu0 %v2914
    %v2916 = vpop.f32.mrf.mxu0
    %v2917 = vadd.f32 %v2807, %v2916
    %v2918 = vand.u32 %v2404, 4294901760
    %2919 = vmatmul.f32.gmra.mxu0 %v2918
    %v2920 = vpop.f32.mrf.mxu0
    %v2921 = vadd.f32 %v2813, %v2920
    %v2922 = vand.u32 %v2407, 4294901760
    %2923 = vmatmul.f32.gmra.mxu0 %v2922
    %v2924 = vpop.f32.mrf.mxu0
    %v2925 = vadd.f32 %v2819, %v2924
    %v2926 = vand.u32 %v2410, 4294901760
    %2927 = vmatmul.f32.gmra.mxu0 %v2926
    %v2928 = vpop.f32.mrf.mxu0
    %v2929 = vadd.f32 %v2825, %v2928
    %v2930 = vand.u32 %v2413, 4294901760
    %2931 = vmatmul.f32.gmra.mxu0 %v2930
    %v2932 = vpop.f32.mrf.mxu0
    %v2933 = vadd.f32 %v2831, %v2932
    %v2934 = vand.u32 %v2416, 4294901760
    %2935 = vmatmul.f32.gmra.mxu0 %v2934
    %v2936 = vpop.f32.mrf.mxu0
    %v2937 = vadd.f32 %v2837, %v2936
    %v2938 = vand.u32 %v2419, 4294901760
    %2939 = vmatmul.f32.gmra.mxu0 %v2938
    %v2940 = vpop.f32.mrf.mxu0
    %v2941 = vadd.f32 %v2843, %v2940
    %v2942 = vand.u32 %v2422, 4294901760
    %2943 = vmatmul.f32.gmra.mxu0 %v2942
    %v2944 = vpop.f32.mrf.mxu0
    %v2945 = vadd.f32 %v2849, %v2944
    %v2946 = vand.u32 %v2425, 4294901760
    %2947 = vmatmul.f32.gmra.mxu0 %v2946
    %v2948 = vpop.f32.mrf.mxu0
    %v2949 = vadd.f32 %v2855, %v2948
    %v2950 = vand.u32 %v2428, 4294901760
    %2951 = vmatmul.f32.gmra.mxu0 %v2950
    %v2952 = vpop.f32.mrf.mxu0
    %v2953 = vadd.f32 %v2861, %v2952
    %v2954 = vand.u32 %v2431, 4294901760
    %2955 = vmatmul.f32.gmra.mxu0 %v2954
    %v2956 = vpop.f32.mrf.mxu0
    %v2957 = vadd.f32 %v2867, %v2956
    %v2958 = vand.u32 %v2434, 4294901760
    %2959 = vmatmul.f32.gmra.mxu0 %v2958
    %v2960 = vpop.f32.mrf.mxu0
    %v2961 = vadd.f32 %v2873, %v2960
    %v2962 = vand.u32 %v2437, 4294901760
    %2963 = vmatmul.f32.gmra.mxu0 %v2962
    %v2964 = vpop.f32.mrf.mxu0
    %v2965 = vadd.f32 %v2879, %v2964
    %v2966 = vand.u32 %v2440, 4294901760
    %2967 = vmatmul.f32.gmra.mxu0 %v2966
    %v2968 = vpop.f32.mrf.mxu0
    %v2969 = vadd.f32 %v2885, %v2968
    %2970 = vdwg.mxu0
    %2971 = vmatpush.msra.mxu0 0.0
    %2972 = vmatpush.msra.mxu0 0.0
    %2973 = vmatpush.msra.mxu0 0.0
    %2974 = vmatpush.msra.mxu0 0.0
    %2975 = vmatpush.msra.mxu0 0.0
    %2976 = vmatpush.msra.mxu0 0.0
    %2977 = vmatpush.msra.mxu0 0.0
    %2978 = vmatpush.msra.mxu0 0.0
    %2979 = vmatpush.msra.mxu0 0.0
    %2980 = vmatpush.msra.mxu0 0.0
    %2981 = vmatpush.msra.mxu0 0.0
    %2982 = vmatpush.msra.mxu0 0.0
    %2983 = vmatpush.msra.mxu0 0.0
    %2984 = vmatpush.msra.mxu0 0.0
    %2985 = vmatpush.msra.mxu0 0.0
    %v2986 = vand.u32 %v226, 4294901760
    %2987 = vmatpush.msra.mxu0 %v2986
    %v2988 = vand.u32 %v2395, 4294901760
    %2989 = vmatmul.f32.gmra.mxu0 %v2988
    %v2990 = vpop.f32.mrf.mxu0
    %v2991 = vadd.f32 %v2909, %v2990
    %v2992 = vand.u32 %v2398, 4294901760
    %2993 = vmatmul.f32.gmra.mxu0 %v2992
    %v2994 = vpop.f32.mrf.mxu0
    %v2995 = vadd.f32 %v2913, %v2994
    %v2996 = vand.u32 %v2401, 4294901760
    %2997 = vmatmul.f32.gmra.mxu0 %v2996
    %v2998 = vpop.f32.mrf.mxu0
    %v2999 = vadd.f32 %v2917, %v2998
    %v3000 = vand.u32 %v2404, 4294901760
    %3001 = vmatmul.f32.gmra.mxu0 %v3000
    %v3002 = vpop.f32.mrf.mxu0
    %v3003 = vadd.f32 %v2921, %v3002
    %v3004 = vand.u32 %v2407, 4294901760
    %3005 = vmatmul.f32.gmra.mxu0 %v3004
    %v3006 = vpop.f32.mrf.mxu0
    %v3007 = vadd.f32 %v2925, %v3006
    %v3008 = vand.u32 %v2410, 4294901760
    %3009 = vmatmul.f32.gmra.mxu0 %v3008
    %v3010 = vpop.f32.mrf.mxu0
    %v3011 = vadd.f32 %v2929, %v3010
    %v3012 = vand.u32 %v2413, 4294901760
    %3013 = vmatmul.f32.gmra.mxu0 %v3012
    %v3014 = vpop.f32.mrf.mxu0
    %v3015 = vadd.f32 %v2933, %v3014
    %v3016 = vand.u32 %v2416, 4294901760
    %3017 = vmatmul.f32.gmra.mxu0 %v3016
    %v3018 = vpop.f32.mrf.mxu0
    %v3019 = vadd.f32 %v2937, %v3018
    %v3020 = vand.u32 %v2419, 4294901760
    %3021 = vmatmul.f32.gmra.mxu0 %v3020
    %v3022 = vpop.f32.mrf.mxu0
    %v3023 = vadd.f32 %v2941, %v3022
    %v3024 = vand.u32 %v2422, 4294901760
    %3025 = vmatmul.f32.gmra.mxu0 %v3024
    %v3026 = vpop.f32.mrf.mxu0
    %v3027 = vadd.f32 %v2945, %v3026
    %v3028 = vand.u32 %v2425, 4294901760
    %3029 = vmatmul.f32.gmra.mxu0 %v3028
    %v3030 = vpop.f32.mrf.mxu0
    %v3031 = vadd.f32 %v2949, %v3030
    %v3032 = vand.u32 %v2428, 4294901760
    %3033 = vmatmul.f32.gmra.mxu0 %v3032
    %v3034 = vpop.f32.mrf.mxu0
    %v3035 = vadd.f32 %v2953, %v3034
    %v3036 = vand.u32 %v2431, 4294901760
    %3037 = vmatmul.f32.gmra.mxu0 %v3036
    %v3038 = vpop.f32.mrf.mxu0
    %v3039 = vadd.f32 %v2957, %v3038
    %v3040 = vand.u32 %v2434, 4294901760
    %3041 = vmatmul.f32.gmra.mxu0 %v3040
    %v3042 = vpop.f32.mrf.mxu0
    %v3043 = vadd.f32 %v2961, %v3042
    %v3044 = vand.u32 %v2437, 4294901760
    %3045 = vmatmul.f32.gmra.mxu0 %v3044
    %v3046 = vpop.f32.mrf.mxu0
    %v3047 = vadd.f32 %v2965, %v3046
    %v3048 = vand.u32 %v2440, 4294901760
    %3049 = vmatmul.f32.gmra.mxu0 %v3048
    %v3050 = vpop.f32.mrf.mxu0
    %v3051 = vadd.f32 %v2969, %v3050
    %3052 = vdwg.mxu0
    %s3053 = scalar_lea.vmem [#allocation6], 384
    %3054 = vst [vmem:[%s3053] sm:$0xff] %v2991
    %3055 = vst [vmem:[%s3053 + $0x8] sm:$0xff] %v2995
    %3056 = vst [vmem:[%s3053 + $0x10] sm:$0xff] %v2999
    %3057 = vst [vmem:[%s3053 + $0x18] sm:$0xff] %v3003
    %3058 = vst [vmem:[%s3053 + $0x20] sm:$0xff] %v3007
    %3059 = vst [vmem:[%s3053 + $0x28] sm:$0xff] %v3011
    %3060 = vst [vmem:[%s3053 + $0x30] sm:$0xff] %v3015
    %3061 = vst [vmem:[%s3053 + $0x38] sm:$0xff] %v3019
    %3062 = vst [vmem:[%s3053 + $0x40] sm:$0xff] %v3023
    %3063 = vst [vmem:[%s3053 + $0x48] sm:$0xff] %v3027
    %3064 = vst [vmem:[%s3053 + $0x50] sm:$0xff] %v3031
    %3065 = vst [vmem:[%s3053 + $0x58] sm:$0xff] %v3035
    %3066 = vst [vmem:[%s3053 + $0x60] sm:$0xff] %v3039
    %3067 = vst [vmem:[%s3053 + $0x68] sm:$0xff] %v3043
    %3068 = vst [vmem:[%s3053 + $0x70] sm:$0xff] %v3047
    %3069 = vst [vmem:[%s3053 + $0x78] sm:$0xff] %v3051
    %s3070 = scalar_lea.vmem [#allocation2], 32
    %v3071 = vld [vmem:[%s3070] sm:$0xff]
    %3072 = vxpose.xlu0.b32.start [1/16] %v3071, 128
    %3073 = vxpose.xlu0.b32.cont [2/16] 0.0, 128
    %3074 = vxpose.xlu0.b32.cont [3/16] 0.0, 128
    %3075 = vxpose.xlu0.b32.cont [4/16] 0.0, 128
    %3076 = vxpose.xlu0.b32.cont [5/16] 0.0, 128
    %3077 = vxpose.xlu0.b32.cont [6/16] 0.0, 128
    %3078 = vxpose.xlu0.b32.cont [7/16] 0.0, 128
    %3079 = vxpose.xlu0.b32.cont [8/16] 0.0, 128
    %3080 = vxpose.xlu0.b32.cont [9/16] 0.0, 128
    %3081 = vxpose.xlu0.b32.cont [10/16] 0.0, 128
    %3082 = vxpose.xlu0.b32.cont [11/16] 0.0, 128
    %3083 = vxpose.xlu0.b32.cont [12/16] 0.0, 128
    %3084 = vxpose.xlu0.b32.cont [13/16] 0.0, 128
    %3085 = vxpose.xlu0.b32.cont [14/16] 0.0, 128
    %3086 = vxpose.xlu0.b32.cont [15/16] 0.0, 128
    %3087 = vxpose.xlu0.b32.end [16/16] 0.0, 128
    %v3088 = vpop.trf.xlu0
    %v3089 = vpop.trf.xlu0
    %v3090 = vpop.trf.xlu0
    %v3091 = vpop.trf.xlu0
    %v3092 = vpop.trf.xlu0
    %v3093 = vpop.trf.xlu0
    %v3094 = vpop.trf.xlu0
    %v3095 = vpop.trf.xlu0
    %v3096 = vpop.trf.xlu0
    %v3097 = vpop.trf.xlu0
    %v3098 = vpop.trf.xlu0
    %v3099 = vpop.trf.xlu0
    %v3100 = vpop.trf.xlu0
    %v3101 = vpop.trf.xlu0
    %v3102 = vpop.trf.xlu0
    %v3103 = vpop.trf.xlu0
    %v3105 = vsel %vm264, %v3088, 0
    %v3108 = vsel %vm264, %v3089, 0
    %v3111 = vsel %vm264, %v3090, 0
    %v3114 = vsel %vm264, %v3091, 0
    %v3117 = vsel %vm264, %v3092, 0
    %v3120 = vsel %vm264, %v3093, 0
    %v3123 = vsel %vm264, %v3094, 0
    %v3126 = vsel %vm264, %v3095, 0
    %v3129 = vsel %vm264, %v3096, 0
    %v3132 = vsel %vm264, %v3097, 0
    %v3135 = vsel %vm264, %v3098, 0
    %v3138 = vsel %vm264, %v3099, 0
    %v3141 = vsel %vm264, %v3100, 0
    %v3144 = vsel %vm264, %v3101, 0
    %v3147 = vsel %vm264, %v3102, 0
    %v3150 = vsel %vm264, %v3103, 0
    %3152 = vmatpush.msra.mxu0 0.0
    %3153 = vmatpush.msra.mxu0 0.0
    %3154 = vmatpush.msra.mxu0 0.0
    %3155 = vmatpush.msra.mxu0 0.0
    %3156 = vmatpush.msra.mxu0 0.0
    %3157 = vmatpush.msra.mxu0 0.0
    %3158 = vmatpush.msra.mxu0 0.0
    %3159 = vmatpush.msra.mxu0 0.0
    %3160 = vmatpush.msra.mxu0 0.0
    %3161 = vmatpush.msra.mxu0 0.0
    %3162 = vmatpush.msra.mxu0 0.0
    %3163 = vmatpush.msra.mxu0 0.0
    %3164 = vmatpush.msra.mxu0 0.0
    %3165 = vmatpush.msra.mxu0 0.0
    %3166 = vmatpush.msra.mxu0 0.0
    %v3167 = vand.u32 %v226, 4294901760
    %3168 = vmatpush.msra.mxu0 %v3167
    %v3169 = vand.u32 %v3105, 4294901760
    %v3170 = vsub.f32 %v3105, %v3169
    %v3171 = vand.u32 %v3170, 4294901760
    %v3172 = vsub.f32 %v3170, %v3171
    %v3173 = vand.u32 %v3172, 4294901760
    %3174 = vmatmul.f32.gmra.mxu0 %v3173
    %v3175 = vpop.f32.mrf.mxu0
    %v3176 = vadd.f32 %v230, %v3175
    %v3177 = vand.u32 %v3108, 4294901760
    %v3178 = vsub.f32 %v3108, %v3177
    %v3179 = vand.u32 %v3178, 4294901760
    %v3180 = vsub.f32 %v3178, %v3179
    %v3181 = vand.u32 %v3180, 4294901760
    %3182 = vmatmul.f32.gmra.mxu0 %v3181
    %v3183 = vpop.f32.mrf.mxu0
    %v3184 = vadd.f32 %v230, %v3183
    %v3185 = vand.u32 %v3111, 4294901760
    %v3186 = vsub.f32 %v3111, %v3185
    %v3187 = vand.u32 %v3186, 4294901760
    %v3188 = vsub.f32 %v3186, %v3187
    %v3189 = vand.u32 %v3188, 4294901760
    %3190 = vmatmul.f32.gmra.mxu0 %v3189
    %v3191 = vpop.f32.mrf.mxu0
    %v3192 = vadd.f32 %v230, %v3191
    %v3193 = vand.u32 %v3114, 4294901760
    %v3194 = vsub.f32 %v3114, %v3193
    %v3195 = vand.u32 %v3194, 4294901760
    %v3196 = vsub.f32 %v3194, %v3195
    %v3197 = vand.u32 %v3196, 4294901760
    %3198 = vmatmul.f32.gmra.mxu0 %v3197
    %v3199 = vpop.f32.mrf.mxu0
    %v3200 = vadd.f32 %v230, %v3199
    %v3201 = vand.u32 %v3117, 4294901760
    %v3202 = vsub.f32 %v3117, %v3201
    %v3203 = vand.u32 %v3202, 4294901760
    %v3204 = vsub.f32 %v3202, %v3203
    %v3205 = vand.u32 %v3204, 4294901760
    %3206 = vmatmul.f32.gmra.mxu0 %v3205
    %v3207 = vpop.f32.mrf.mxu0
    %v3208 = vadd.f32 %v230, %v3207
    %v3209 = vand.u32 %v3120, 4294901760
    %v3210 = vsub.f32 %v3120, %v3209
    %v3211 = vand.u32 %v3210, 4294901760
    %v3212 = vsub.f32 %v3210, %v3211
    %v3213 = vand.u32 %v3212, 4294901760
    %3214 = vmatmul.f32.gmra.mxu0 %v3213
    %v3215 = vpop.f32.mrf.mxu0
    %v3216 = vadd.f32 %v230, %v3215
    %v3217 = vand.u32 %v3123, 4294901760
    %v3218 = vsub.f32 %v3123, %v3217
    %v3219 = vand.u32 %v3218, 4294901760
    %v3220 = vsub.f32 %v3218, %v3219
    %v3221 = vand.u32 %v3220, 4294901760
    %3222 = vmatmul.f32.gmra.mxu0 %v3221
    %v3223 = vpop.f32.mrf.mxu0
    %v3224 = vadd.f32 %v230, %v3223
    %v3225 = vand.u32 %v3126, 4294901760
    %v3226 = vsub.f32 %v3126, %v3225
    %v3227 = vand.u32 %v3226, 4294901760
    %v3228 = vsub.f32 %v3226, %v3227
    %v3229 = vand.u32 %v3228, 4294901760
    %3230 = vmatmul.f32.gmra.mxu0 %v3229
    %v3231 = vpop.f32.mrf.mxu0
    %v3232 = vadd.f32 %v230, %v3231
    %v3233 = vand.u32 %v3129, 4294901760
    %v3234 = vsub.f32 %v3129, %v3233
    %v3235 = vand.u32 %v3234, 4294901760
    %v3236 = vsub.f32 %v3234, %v3235
    %v3237 = vand.u32 %v3236, 4294901760
    %3238 = vmatmul.f32.gmra.mxu0 %v3237
    %v3239 = vpop.f32.mrf.mxu0
    %v3240 = vadd.f32 %v230, %v3239
    %v3241 = vand.u32 %v3132, 4294901760
    %v3242 = vsub.f32 %v3132, %v3241
    %v3243 = vand.u32 %v3242, 4294901760
    %v3244 = vsub.f32 %v3242, %v3243
    %v3245 = vand.u32 %v3244, 4294901760
    %3246 = vmatmul.f32.gmra.mxu0 %v3245
    %v3247 = vpop.f32.mrf.mxu0
    %v3248 = vadd.f32 %v230, %v3247
    %v3249 = vand.u32 %v3135, 4294901760
    %v3250 = vsub.f32 %v3135, %v3249
    %v3251 = vand.u32 %v3250, 4294901760
    %v3252 = vsub.f32 %v3250, %v3251
    %v3253 = vand.u32 %v3252, 4294901760
    %3254 = vmatmul.f32.gmra.mxu0 %v3253
    %v3255 = vpop.f32.mrf.mxu0
    %v3256 = vadd.f32 %v230, %v3255
    %v3257 = vand.u32 %v3138, 4294901760
    %v3258 = vsub.f32 %v3138, %v3257
    %v3259 = vand.u32 %v3258, 4294901760
    %v3260 = vsub.f32 %v3258, %v3259
    %v3261 = vand.u32 %v3260, 4294901760
    %3262 = vmatmul.f32.gmra.mxu0 %v3261
    %v3263 = vpop.f32.mrf.mxu0
    %v3264 = vadd.f32 %v230, %v3263
    %v3265 = vand.u32 %v3141, 4294901760
    %v3266 = vsub.f32 %v3141, %v3265
    %v3267 = vand.u32 %v3266, 4294901760
    %v3268 = vsub.f32 %v3266, %v3267
    %v3269 = vand.u32 %v3268, 4294901760
    %3270 = vmatmul.f32.gmra.mxu0 %v3269
    %v3271 = vpop.f32.mrf.mxu0
    %v3272 = vadd.f32 %v230, %v3271
    %v3273 = vand.u32 %v3144, 4294901760
    %v3274 = vsub.f32 %v3144, %v3273
    %v3275 = vand.u32 %v3274, 4294901760
    %v3276 = vsub.f32 %v3274, %v3275
    %v3277 = vand.u32 %v3276, 4294901760
    %3278 = vmatmul.f32.gmra.mxu0 %v3277
    %v3279 = vpop.f32.mrf.mxu0
    %v3280 = vadd.f32 %v230, %v3279
    %v3281 = vand.u32 %v3147, 4294901760
    %v3282 = vsub.f32 %v3147, %v3281
    %v3283 = vand.u32 %v3282, 4294901760
    %v3284 = vsub.f32 %v3282, %v3283
    %v3285 = vand.u32 %v3284, 4294901760
    %3286 = vmatmul.f32.gmra.mxu0 %v3285
    %v3287 = vpop.f32.mrf.mxu0
    %v3288 = vadd.f32 %v230, %v3287
    %v3289 = vand.u32 %v3150, 4294901760
    %v3290 = vsub.f32 %v3150, %v3289
    %v3291 = vand.u32 %v3290, 4294901760
    %v3292 = vsub.f32 %v3290, %v3291
    %v3293 = vand.u32 %v3292, 4294901760
    %3294 = vmatmul.f32.gmra.mxu0 %v3293
    %v3295 = vpop.f32.mrf.mxu0
    %v3296 = vadd.f32 %v230, %v3295
    %3297 = vdwg.mxu0
    %3298 = vmatpush.msra.mxu0 0.0
    %3299 = vmatpush.msra.mxu0 0.0
    %3300 = vmatpush.msra.mxu0 0.0
    %3301 = vmatpush.msra.mxu0 0.0
    %3302 = vmatpush.msra.mxu0 0.0
    %3303 = vmatpush.msra.mxu0 0.0
    %3304 = vmatpush.msra.mxu0 0.0
    %3305 = vmatpush.msra.mxu0 0.0
    %3306 = vmatpush.msra.mxu0 0.0
    %3307 = vmatpush.msra.mxu0 0.0
    %3308 = vmatpush.msra.mxu0 0.0
    %3309 = vmatpush.msra.mxu0 0.0
    %3310 = vmatpush.msra.mxu0 0.0
    %3311 = vmatpush.msra.mxu0 0.0
    %3312 = vmatpush.msra.mxu0 0.0
    %v3313 = vand.u32 %v226, 4294901760
    %v3314 = vsub.f32 %v226, %v3313
    %v3315 = vand.u32 %v3314, 4294901760
    %v3316 = vsub.f32 %v3314, %v3315
    %v3317 = vand.u32 %v3316, 4294901760
    %3318 = vmatpush.msra.mxu0 %v3317
    %v3319 = vand.u32 %v3105, 4294901760
    %3320 = vmatmul.f32.gmra.mxu0 %v3319
    %v3321 = vpop.f32.mrf.mxu0
    %v3322 = vadd.f32 %v3176, %v3321
    %v3323 = vand.u32 %v3108, 4294901760
    %3324 = vmatmul.f32.gmra.mxu0 %v3323
    %v3325 = vpop.f32.mrf.mxu0
    %v3326 = vadd.f32 %v3184, %v3325
    %v3327 = vand.u32 %v3111, 4294901760
    %3328 = vmatmul.f32.gmra.mxu0 %v3327
    %v3329 = vpop.f32.mrf.mxu0
    %v3330 = vadd.f32 %v3192, %v3329
    %v3331 = vand.u32 %v3114, 4294901760
    %3332 = vmatmul.f32.gmra.mxu0 %v3331
    %v3333 = vpop.f32.mrf.mxu0
    %v3334 = vadd.f32 %v3200, %v3333
    %v3335 = vand.u32 %v3117, 4294901760
    %3336 = vmatmul.f32.gmra.mxu0 %v3335
    %v3337 = vpop.f32.mrf.mxu0
    %v3338 = vadd.f32 %v3208, %v3337
    %v3339 = vand.u32 %v3120, 4294901760
    %3340 = vmatmul.f32.gmra.mxu0 %v3339
    %v3341 = vpop.f32.mrf.mxu0
    %v3342 = vadd.f32 %v3216, %v3341
    %v3343 = vand.u32 %v3123, 4294901760
    %3344 = vmatmul.f32.gmra.mxu0 %v3343
    %v3345 = vpop.f32.mrf.mxu0
    %v3346 = vadd.f32 %v3224, %v3345
    %v3347 = vand.u32 %v3126, 4294901760
    %3348 = vmatmul.f32.gmra.mxu0 %v3347
    %v3349 = vpop.f32.mrf.mxu0
    %v3350 = vadd.f32 %v3232, %v3349
    %v3351 = vand.u32 %v3129, 4294901760
    %3352 = vmatmul.f32.gmra.mxu0 %v3351
    %v3353 = vpop.f32.mrf.mxu0
    %v3354 = vadd.f32 %v3240, %v3353
    %v3355 = vand.u32 %v3132, 4294901760
    %3356 = vmatmul.f32.gmra.mxu0 %v3355
    %v3357 = vpop.f32.mrf.mxu0
    %v3358 = vadd.f32 %v3248, %v3357
    %v3359 = vand.u32 %v3135, 4294901760
    %3360 = vmatmul.f32.gmra.mxu0 %v3359
    %v3361 = vpop.f32.mrf.mxu0
    %v3362 = vadd.f32 %v3256, %v3361
    %v3363 = vand.u32 %v3138, 4294901760
    %3364 = vmatmul.f32.gmra.mxu0 %v3363
    %v3365 = vpop.f32.mrf.mxu0
    %v3366 = vadd.f32 %v3264, %v3365
    %v3367 = vand.u32 %v3141, 4294901760
    %3368 = vmatmul.f32.gmra.mxu0 %v3367
    %v3369 = vpop.f32.mrf.mxu0
    %v3370 = vadd.f32 %v3272, %v3369
    %v3371 = vand.u32 %v3144, 4294901760
    %3372 = vmatmul.f32.gmra.mxu0 %v3371
    %v3373 = vpop.f32.mrf.mxu0
    %v3374 = vadd.f32 %v3280, %v3373
    %v3375 = vand.u32 %v3147, 4294901760
    %3376 = vmatmul.f32.gmra.mxu0 %v3375
    %v3377 = vpop.f32.mrf.mxu0
    %v3378 = vadd.f32 %v3288, %v3377
    %v3379 = vand.u32 %v3150, 4294901760
    %3380 = vmatmul.f32.gmra.mxu0 %v3379
    %v3381 = vpop.f32.mrf.mxu0
    %v3382 = vadd.f32 %v3296, %v3381
    %3383 = vdwg.mxu0
    %3384 = vmatpush.msra.mxu0 0.0
    %3385 = vmatpush.msra.mxu0 0.0
    %3386 = vmatpush.msra.mxu0 0.0
    %3387 = vmatpush.msra.mxu0 0.0
    %3388 = vmatpush.msra.mxu0 0.0
    %3389 = vmatpush.msra.mxu0 0.0
    %3390 = vmatpush.msra.mxu0 0.0
    %3391 = vmatpush.msra.mxu0 0.0
    %3392 = vmatpush.msra.mxu0 0.0
    %3393 = vmatpush.msra.mxu0 0.0
    %3394 = vmatpush.msra.mxu0 0.0
    %3395 = vmatpush.msra.mxu0 0.0
    %3396 = vmatpush.msra.mxu0 0.0
    %3397 = vmatpush.msra.mxu0 0.0
    %3398 = vmatpush.msra.mxu0 0.0
    %v3399 = vand.u32 %v226, 4294901760
    %v3400 = vsub.f32 %v226, %v3399
    %3401 = vmatpush.msra.mxu0 %v3400
    %v3402 = vand.u32 %v3105, 4294901760
    %v3403 = vsub.f32 %v3105, %v3402
    %3404 = vmatmul.f32.gmra.mxu0 %v3403
    %v3405 = vpop.f32.mrf.mxu0
    %v3406 = vadd.f32 %v3322, %v3405
    %v3407 = vand.u32 %v3108, 4294901760
    %v3408 = vsub.f32 %v3108, %v3407
    %3409 = vmatmul.f32.gmra.mxu0 %v3408
    %v3410 = vpop.f32.mrf.mxu0
    %v3411 = vadd.f32 %v3326, %v3410
    %v3412 = vand.u32 %v3111, 4294901760
    %v3413 = vsub.f32 %v3111, %v3412
    %3414 = vmatmul.f32.gmra.mxu0 %v3413
    %v3415 = vpop.f32.mrf.mxu0
    %v3416 = vadd.f32 %v3330, %v3415
    %v3417 = vand.u32 %v3114, 4294901760
    %v3418 = vsub.f32 %v3114, %v3417
    %3419 = vmatmul.f32.gmra.mxu0 %v3418
    %v3420 = vpop.f32.mrf.mxu0
    %v3421 = vadd.f32 %v3334, %v3420
    %v3422 = vand.u32 %v3117, 4294901760
    %v3423 = vsub.f32 %v3117, %v3422
    %3424 = vmatmul.f32.gmra.mxu0 %v3423
    %v3425 = vpop.f32.mrf.mxu0
    %v3426 = vadd.f32 %v3338, %v3425
    %v3427 = vand.u32 %v3120, 4294901760
    %v3428 = vsub.f32 %v3120, %v3427
    %3429 = vmatmul.f32.gmra.mxu0 %v3428
    %v3430 = vpop.f32.mrf.mxu0
    %v3431 = vadd.f32 %v3342, %v3430
    %v3432 = vand.u32 %v3123, 4294901760
    %v3433 = vsub.f32 %v3123, %v3432
    %3434 = vmatmul.f32.gmra.mxu0 %v3433
    %v3435 = vpop.f32.mrf.mxu0
    %v3436 = vadd.f32 %v3346, %v3435
    %v3437 = vand.u32 %v3126, 4294901760
    %v3438 = vsub.f32 %v3126, %v3437
    %3439 = vmatmul.f32.gmra.mxu0 %v3438
    %v3440 = vpop.f32.mrf.mxu0
    %v3441 = vadd.f32 %v3350, %v3440
    %v3442 = vand.u32 %v3129, 4294901760
    %v3443 = vsub.f32 %v3129, %v3442
    %3444 = vmatmul.f32.gmra.mxu0 %v3443
    %v3445 = vpop.f32.mrf.mxu0
    %v3446 = vadd.f32 %v3354, %v3445
    %v3447 = vand.u32 %v3132, 4294901760
    %v3448 = vsub.f32 %v3132, %v3447
    %3449 = vmatmul.f32.gmra.mxu0 %v3448
    %v3450 = vpop.f32.mrf.mxu0
    %v3451 = vadd.f32 %v3358, %v3450
    %v3452 = vand.u32 %v3135, 4294901760
    %v3453 = vsub.f32 %v3135, %v3452
    %3454 = vmatmul.f32.gmra.mxu0 %v3453
    %v3455 = vpop.f32.mrf.mxu0
    %v3456 = vadd.f32 %v3362, %v3455
    %v3457 = vand.u32 %v3138, 4294901760
    %v3458 = vsub.f32 %v3138, %v3457
    %3459 = vmatmul.f32.gmra.mxu0 %v3458
    %v3460 = vpop.f32.mrf.mxu0
    %v3461 = vadd.f32 %v3366, %v3460
    %v3462 = vand.u32 %v3141, 4294901760
    %v3463 = vsub.f32 %v3141, %v3462
    %3464 = vmatmul.f32.gmra.mxu0 %v3463
    %v3465 = vpop.f32.mrf.mxu0
    %v3466 = vadd.f32 %v3370, %v3465
    %v3467 = vand.u32 %v3144, 4294901760
    %v3468 = vsub.f32 %v3144, %v3467
    %3469 = vmatmul.f32.gmra.mxu0 %v3468
    %v3470 = vpop.f32.mrf.mxu0
    %v3471 = vadd.f32 %v3374, %v3470
    %v3472 = vand.u32 %v3147, 4294901760
    %v3473 = vsub.f32 %v3147, %v3472
    %3474 = vmatmul.f32.gmra.mxu0 %v3473
    %v3475 = vpop.f32.mrf.mxu0
    %v3476 = vadd.f32 %v3378, %v3475
    %v3477 = vand.u32 %v3150, 4294901760
    %v3478 = vsub.f32 %v3150, %v3477
    %3479 = vmatmul.f32.gmra.mxu0 %v3478
    %v3480 = vpop.f32.mrf.mxu0
    %v3481 = vadd.f32 %v3382, %v3480
    %3482 = vdwg.mxu0
    %3483 = vmatpush.msra.mxu0 0.0
    %3484 = vmatpush.msra.mxu0 0.0
    %3485 = vmatpush.msra.mxu0 0.0
    %3486 = vmatpush.msra.mxu0 0.0
    %3487 = vmatpush.msra.mxu0 0.0
    %3488 = vmatpush.msra.mxu0 0.0
    %3489 = vmatpush.msra.mxu0 0.0
    %3490 = vmatpush.msra.mxu0 0.0
    %3491 = vmatpush.msra.mxu0 0.0
    %3492 = vmatpush.msra.mxu0 0.0
    %3493 = vmatpush.msra.mxu0 0.0
    %3494 = vmatpush.msra.mxu0 0.0
    %3495 = vmatpush.msra.mxu0 0.0
    %3496 = vmatpush.msra.mxu0 0.0
    %3497 = vmatpush.msra.mxu0 0.0
    %v3498 = vand.u32 %v226, 4294901760
    %3499 = vmatpush.msra.mxu0 %v3498
    %v3500 = vand.u32 %v3105, 4294901760
    %v3501 = vsub.f32 %v3105, %v3500
    %v3502 = vand.u32 %v3501, 4294901760
    %3503 = vmatmul.f32.gmra.mxu0 %v3502
    %v3504 = vpop.f32.mrf.mxu0
    %v3505 = vadd.f32 %v3406, %v3504
    %v3506 = vand.u32 %v3108, 4294901760
    %v3507 = vsub.f32 %v3108, %v3506
    %v3508 = vand.u32 %v3507, 4294901760
    %3509 = vmatmul.f32.gmra.mxu0 %v3508
    %v3510 = vpop.f32.mrf.mxu0
    %v3511 = vadd.f32 %v3411, %v3510
    %v3512 = vand.u32 %v3111, 4294901760
    %v3513 = vsub.f32 %v3111, %v3512
    %v3514 = vand.u32 %v3513, 4294901760
    %3515 = vmatmul.f32.gmra.mxu0 %v3514
    %v3516 = vpop.f32.mrf.mxu0
    %v3517 = vadd.f32 %v3416, %v3516
    %v3518 = vand.u32 %v3114, 4294901760
    %v3519 = vsub.f32 %v3114, %v3518
    %v3520 = vand.u32 %v3519, 4294901760
    %3521 = vmatmul.f32.gmra.mxu0 %v3520
    %v3522 = vpop.f32.mrf.mxu0
    %v3523 = vadd.f32 %v3421, %v3522
    %v3524 = vand.u32 %v3117, 4294901760
    %v3525 = vsub.f32 %v3117, %v3524
    %v3526 = vand.u32 %v3525, 4294901760
    %3527 = vmatmul.f32.gmra.mxu0 %v3526
    %v3528 = vpop.f32.mrf.mxu0
    %v3529 = vadd.f32 %v3426, %v3528
    %v3530 = vand.u32 %v3120, 4294901760
    %v3531 = vsub.f32 %v3120, %v3530
    %v3532 = vand.u32 %v3531, 4294901760
    %3533 = vmatmul.f32.gmra.mxu0 %v3532
    %v3534 = vpop.f32.mrf.mxu0
    %v3535 = vadd.f32 %v3431, %v3534
    %v3536 = vand.u32 %v3123, 4294901760
    %v3537 = vsub.f32 %v3123, %v3536
    %v3538 = vand.u32 %v3537, 4294901760
    %3539 = vmatmul.f32.gmra.mxu0 %v3538
    %v3540 = vpop.f32.mrf.mxu0
    %v3541 = vadd.f32 %v3436, %v3540
    %v3542 = vand.u32 %v3126, 4294901760
    %v3543 = vsub.f32 %v3126, %v3542
    %v3544 = vand.u32 %v3543, 4294901760
    %3545 = vmatmul.f32.gmra.mxu0 %v3544
    %v3546 = vpop.f32.mrf.mxu0
    %v3547 = vadd.f32 %v3441, %v3546
    %v3548 = vand.u32 %v3129, 4294901760
    %v3549 = vsub.f32 %v3129, %v3548
    %v3550 = vand.u32 %v3549, 4294901760
    %3551 = vmatmul.f32.gmra.mxu0 %v3550
    %v3552 = vpop.f32.mrf.mxu0
    %v3553 = vadd.f32 %v3446, %v3552
    %v3554 = vand.u32 %v3132, 4294901760
    %v3555 = vsub.f32 %v3132, %v3554
    %v3556 = vand.u32 %v3555, 4294901760
    %3557 = vmatmul.f32.gmra.mxu0 %v3556
    %v3558 = vpop.f32.mrf.mxu0
    %v3559 = vadd.f32 %v3451, %v3558
    %v3560 = vand.u32 %v3135, 4294901760
    %v3561 = vsub.f32 %v3135, %v3560
    %v3562 = vand.u32 %v3561, 4294901760
    %3563 = vmatmul.f32.gmra.mxu0 %v3562
    %v3564 = vpop.f32.mrf.mxu0
    %v3565 = vadd.f32 %v3456, %v3564
    %v3566 = vand.u32 %v3138, 4294901760
    %v3567 = vsub.f32 %v3138, %v3566
    %v3568 = vand.u32 %v3567, 4294901760
    %3569 = vmatmul.f32.gmra.mxu0 %v3568
    %v3570 = vpop.f32.mrf.mxu0
    %v3571 = vadd.f32 %v3461, %v3570
    %v3572 = vand.u32 %v3141, 4294901760
    %v3573 = vsub.f32 %v3141, %v3572
    %v3574 = vand.u32 %v3573, 4294901760
    %3575 = vmatmul.f32.gmra.mxu0 %v3574
    %v3576 = vpop.f32.mrf.mxu0
    %v3577 = vadd.f32 %v3466, %v3576
    %v3578 = vand.u32 %v3144, 4294901760
    %v3579 = vsub.f32 %v3144, %v3578
    %v3580 = vand.u32 %v3579, 4294901760
    %3581 = vmatmul.f32.gmra.mxu0 %v3580
    %v3582 = vpop.f32.mrf.mxu0
    %v3583 = vadd.f32 %v3471, %v3582
    %v3584 = vand.u32 %v3147, 4294901760
    %v3585 = vsub.f32 %v3147, %v3584
    %v3586 = vand.u32 %v3585, 4294901760
    %3587 = vmatmul.f32.gmra.mxu0 %v3586
    %v3588 = vpop.f32.mrf.mxu0
    %v3589 = vadd.f32 %v3476, %v3588
    %v3590 = vand.u32 %v3150, 4294901760
    %v3591 = vsub.f32 %v3150, %v3590
    %v3592 = vand.u32 %v3591, 4294901760
    %3593 = vmatmul.f32.gmra.mxu0 %v3592
    %v3594 = vpop.f32.mrf.mxu0
    %v3595 = vadd.f32 %v3481, %v3594
    %3596 = vdwg.mxu0
    %3597 = vmatpush.msra.mxu0 0.0
    %3598 = vmatpush.msra.mxu0 0.0
    %3599 = vmatpush.msra.mxu0 0.0
    %3600 = vmatpush.msra.mxu0 0.0
    %3601 = vmatpush.msra.mxu0 0.0
    %3602 = vmatpush.msra.mxu0 0.0
    %3603 = vmatpush.msra.mxu0 0.0
    %3604 = vmatpush.msra.mxu0 0.0
    %3605 = vmatpush.msra.mxu0 0.0
    %3606 = vmatpush.msra.mxu0 0.0
    %3607 = vmatpush.msra.mxu0 0.0
    %3608 = vmatpush.msra.mxu0 0.0
    %3609 = vmatpush.msra.mxu0 0.0
    %3610 = vmatpush.msra.mxu0 0.0
    %3611 = vmatpush.msra.mxu0 0.0
    %v3612 = vand.u32 %v226, 4294901760
    %v3613 = vsub.f32 %v226, %v3612
    %v3614 = vand.u32 %v3613, 4294901760
    %3615 = vmatpush.msra.mxu0 %v3614
    %v3616 = vand.u32 %v3105, 4294901760
    %3617 = vmatmul.f32.gmra.mxu0 %v3616
    %v3618 = vpop.f32.mrf.mxu0
    %v3619 = vadd.f32 %v3505, %v3618
    %v3620 = vand.u32 %v3108, 4294901760
    %3621 = vmatmul.f32.gmra.mxu0 %v3620
    %v3622 = vpop.f32.mrf.mxu0
    %v3623 = vadd.f32 %v3511, %v3622
    %v3624 = vand.u32 %v3111, 4294901760
    %3625 = vmatmul.f32.gmra.mxu0 %v3624
    %v3626 = vpop.f32.mrf.mxu0
    %v3627 = vadd.f32 %v3517, %v3626
    %v3628 = vand.u32 %v3114, 4294901760
    %3629 = vmatmul.f32.gmra.mxu0 %v3628
    %v3630 = vpop.f32.mrf.mxu0
    %v3631 = vadd.f32 %v3523, %v3630
    %v3632 = vand.u32 %v3117, 4294901760
    %3633 = vmatmul.f32.gmra.mxu0 %v3632
    %v3634 = vpop.f32.mrf.mxu0
    %v3635 = vadd.f32 %v3529, %v3634
    %v3636 = vand.u32 %v3120, 4294901760
    %3637 = vmatmul.f32.gmra.mxu0 %v3636
    %v3638 = vpop.f32.mrf.mxu0
    %v3639 = vadd.f32 %v3535, %v3638
    %v3640 = vand.u32 %v3123, 4294901760
    %3641 = vmatmul.f32.gmra.mxu0 %v3640
    %v3642 = vpop.f32.mrf.mxu0
    %v3643 = vadd.f32 %v3541, %v3642
    %v3644 = vand.u32 %v3126, 4294901760
    %3645 = vmatmul.f32.gmra.mxu0 %v3644
    %v3646 = vpop.f32.mrf.mxu0
    %v3647 = vadd.f32 %v3547, %v3646
    %v3648 = vand.u32 %v3129, 4294901760
    %3649 = vmatmul.f32.gmra.mxu0 %v3648
    %v3650 = vpop.f32.mrf.mxu0
    %v3651 = vadd.f32 %v3553, %v3650
    %v3652 = vand.u32 %v3132, 4294901760
    %3653 = vmatmul.f32.gmra.mxu0 %v3652
    %v3654 = vpop.f32.mrf.mxu0
    %v3655 = vadd.f32 %v3559, %v3654
    %v3656 = vand.u32 %v3135, 4294901760
    %3657 = vmatmul.f32.gmra.mxu0 %v3656
    %v3658 = vpop.f32.mrf.mxu0
    %v3659 = vadd.f32 %v3565, %v3658
    %v3660 = vand.u32 %v3138, 4294901760
    %3661 = vmatmul.f32.gmra.mxu0 %v3660
    %v3662 = vpop.f32.mrf.mxu0
    %v3663 = vadd.f32 %v3571, %v3662
    %v3664 = vand.u32 %v3141, 4294901760
    %3665 = vmatmul.f32.gmra.mxu0 %v3664
    %v3666 = vpop.f32.mrf.mxu0
    %v3667 = vadd.f32 %v3577, %v3666
    %v3668 = vand.u32 %v3144, 4294901760
    %3669 = vmatmul.f32.gmra.mxu0 %v3668
    %v3670 = vpop.f32.mrf.mxu0
    %v3671 = vadd.f32 %v3583, %v3670
    %v3672 = vand.u32 %v3147, 4294901760
    %3673 = vmatmul.f32.gmra.mxu0 %v3672
    %v3674 = vpop.f32.mrf.mxu0
    %v3675 = vadd.f32 %v3589, %v3674
    %v3676 = vand.u32 %v3150, 4294901760
    %3677 = vmatmul.f32.gmra.mxu0 %v3676
    %v3678 = vpop.f32.mrf.mxu0
    %v3679 = vadd.f32 %v3595, %v3678
    %3680 = vdwg.mxu0
    %3681 = vmatpush.msra.mxu0 0.0
    %3682 = vmatpush.msra.mxu0 0.0
    %3683 = vmatpush.msra.mxu0 0.0
    %3684 = vmatpush.msra.mxu0 0.0
    %3685 = vmatpush.msra.mxu0 0.0
    %3686 = vmatpush.msra.mxu0 0.0
    %3687 = vmatpush.msra.mxu0 0.0
    %3688 = vmatpush.msra.mxu0 0.0
    %3689 = vmatpush.msra.mxu0 0.0
    %3690 = vmatpush.msra.mxu0 0.0
    %3691 = vmatpush.msra.mxu0 0.0
    %3692 = vmatpush.msra.mxu0 0.0
    %3693 = vmatpush.msra.mxu0 0.0
    %3694 = vmatpush.msra.mxu0 0.0
    %3695 = vmatpush.msra.mxu0 0.0
    %v3696 = vand.u32 %v226, 4294901760
    %3697 = vmatpush.msra.mxu0 %v3696
    %v3698 = vand.u32 %v3105, 4294901760
    %3699 = vmatmul.f32.gmra.mxu0 %v3698
    %v3700 = vpop.f32.mrf.mxu0
    %v3701 = vadd.f32 %v3619, %v3700
    %v3702 = vand.u32 %v3108, 4294901760
    %3703 = vmatmul.f32.gmra.mxu0 %v3702
    %v3704 = vpop.f32.mrf.mxu0
    %v3705 = vadd.f32 %v3623, %v3704
    %v3706 = vand.u32 %v3111, 4294901760
    %3707 = vmatmul.f32.gmra.mxu0 %v3706
    %v3708 = vpop.f32.mrf.mxu0
    %v3709 = vadd.f32 %v3627, %v3708
    %v3710 = vand.u32 %v3114, 4294901760
    %3711 = vmatmul.f32.gmra.mxu0 %v3710
    %v3712 = vpop.f32.mrf.mxu0
    %v3713 = vadd.f32 %v3631, %v3712
    %v3714 = vand.u32 %v3117, 4294901760
    %3715 = vmatmul.f32.gmra.mxu0 %v3714
    %v3716 = vpop.f32.mrf.mxu0
    %v3717 = vadd.f32 %v3635, %v3716
    %v3718 = vand.u32 %v3120, 4294901760
    %3719 = vmatmul.f32.gmra.mxu0 %v3718
    %v3720 = vpop.f32.mrf.mxu0
    %v3721 = vadd.f32 %v3639, %v3720
    %v3722 = vand.u32 %v3123, 4294901760
    %3723 = vmatmul.f32.gmra.mxu0 %v3722
    %v3724 = vpop.f32.mrf.mxu0
    %v3725 = vadd.f32 %v3643, %v3724
    %v3726 = vand.u32 %v3126, 4294901760
    %3727 = vmatmul.f32.gmra.mxu0 %v3726
    %v3728 = vpop.f32.mrf.mxu0
    %v3729 = vadd.f32 %v3647, %v3728
    %v3730 = vand.u32 %v3129, 4294901760
    %3731 = vmatmul.f32.gmra.mxu0 %v3730
    %v3732 = vpop.f32.mrf.mxu0
    %v3733 = vadd.f32 %v3651, %v3732
    %v3734 = vand.u32 %v3132, 4294901760
    %3735 = vmatmul.f32.gmra.mxu0 %v3734
    %v3736 = vpop.f32.mrf.mxu0
    %v3737 = vadd.f32 %v3655, %v3736
    %v3738 = vand.u32 %v3135, 4294901760
    %3739 = vmatmul.f32.gmra.mxu0 %v3738
    %v3740 = vpop.f32.mrf.mxu0
    %v3741 = vadd.f32 %v3659, %v3740
    %v3742 = vand.u32 %v3138, 4294901760
    %3743 = vmatmul.f32.gmra.mxu0 %v3742
    %v3744 = vpop.f32.mrf.mxu0
    %v3745 = vadd.f32 %v3663, %v3744
    %v3746 = vand.u32 %v3141, 4294901760
    %3747 = vmatmul.f32.gmra.mxu0 %v3746
    %v3748 = vpop.f32.mrf.mxu0
    %v3749 = vadd.f32 %v3667, %v3748
    %v3750 = vand.u32 %v3144, 4294901760
    %3751 = vmatmul.f32.gmra.mxu0 %v3750
    %v3752 = vpop.f32.mrf.mxu0
    %v3753 = vadd.f32 %v3671, %v3752
    %v3754 = vand.u32 %v3147, 4294901760
    %3755 = vmatmul.f32.gmra.mxu0 %v3754
    %v3756 = vpop.f32.mrf.mxu0
    %v3757 = vadd.f32 %v3675, %v3756
    %v3758 = vand.u32 %v3150, 4294901760
    %3759 = vmatmul.f32.gmra.mxu0 %v3758
    %v3760 = vpop.f32.mrf.mxu0
    %v3761 = vadd.f32 %v3679, %v3760
    %3762 = vdwg.mxu0
    %s3763 = scalar_lea.vmem [#allocation6], 512
    %3764 = vst [vmem:[%s3763] sm:$0xff] %v3701
    %3765 = vst [vmem:[%s3763 + $0x8] sm:$0xff] %v3705
    %3766 = vst [vmem:[%s3763 + $0x10] sm:$0xff] %v3709
    %3767 = vst [vmem:[%s3763 + $0x18] sm:$0xff] %v3713
    %3768 = vst [vmem:[%s3763 + $0x20] sm:$0xff] %v3717
    %3769 = vst [vmem:[%s3763 + $0x28] sm:$0xff] %v3721
    %3770 = vst [vmem:[%s3763 + $0x30] sm:$0xff] %v3725
    %3771 = vst [vmem:[%s3763 + $0x38] sm:$0xff] %v3729
    %3772 = vst [vmem:[%s3763 + $0x40] sm:$0xff] %v3733
    %3773 = vst [vmem:[%s3763 + $0x48] sm:$0xff] %v3737
    %3774 = vst [vmem:[%s3763 + $0x50] sm:$0xff] %v3741
    %3775 = vst [vmem:[%s3763 + $0x58] sm:$0xff] %v3745
    %3776 = vst [vmem:[%s3763 + $0x60] sm:$0xff] %v3749
    %3777 = vst [vmem:[%s3763 + $0x68] sm:$0xff] %v3753
    %3778 = vst [vmem:[%s3763 + $0x70] sm:$0xff] %v3757
    %3779 = vst [vmem:[%s3763 + $0x78] sm:$0xff] %v3761
    %s3780 = scalar_lea.vmem [#allocation2], 40
    %v3781 = vld [vmem:[%s3780] sm:$0xff]
    %3782 = vxpose.xlu0.b32.start [1/16] %v3781, 128
    %3783 = vxpose.xlu0.b32.cont [2/16] 0.0, 128
    %3784 = vxpose.xlu0.b32.cont [3/16] 0.0, 128
    %3785 = vxpose.xlu0.b32.cont [4/16] 0.0, 128
    %3786 = vxpose.xlu0.b32.cont [5/16] 0.0, 128
    %3787 = vxpose.xlu0.b32.cont [6/16] 0.0, 128
    %3788 = vxpose.xlu0.b32.cont [7/16] 0.0, 128
    %3789 = vxpose.xlu0.b32.cont [8/16] 0.0, 128
    %3790 = vxpose.xlu0.b32.cont [9/16] 0.0, 128
    %3791 = vxpose.xlu0.b32.cont [10/16] 0.0, 128
    %3792 = vxpose.xlu0.b32.cont [11/16] 0.0, 128
    %3793 = vxpose.xlu0.b32.cont [12/16] 0.0, 128
    %3794 = vxpose.xlu0.b32.cont [13/16] 0.0, 128
    %3795 = vxpose.xlu0.b32.cont [14/16] 0.0, 128
    %3796 = vxpose.xlu0.b32.cont [15/16] 0.0, 128
    %3797 = vxpose.xlu0.b32.end [16/16] 0.0, 128
    %v3798 = vpop.trf.xlu0
    %v3799 = vpop.trf.xlu0
    %v3800 = vpop.trf.xlu0
    %v3801 = vpop.trf.xlu0
    %v3802 = vpop.trf.xlu0
    %v3803 = vpop.trf.xlu0
    %v3804 = vpop.trf.xlu0
    %v3805 = vpop.trf.xlu0
    %v3806 = vpop.trf.xlu0
    %v3807 = vpop.trf.xlu0
    %v3808 = vpop.trf.xlu0
    %v3809 = vpop.trf.xlu0
    %v3810 = vpop.trf.xlu0
    %v3811 = vpop.trf.xlu0
    %v3812 = vpop.trf.xlu0
    %v3813 = vpop.trf.xlu0
    %v3815 = vsel %vm264, %v3798, 0
    %v3818 = vsel %vm264, %v3799, 0
    %v3821 = vsel %vm264, %v3800, 0
    %v3824 = vsel %vm264, %v3801, 0
    %v3827 = vsel %vm264, %v3802, 0
    %v3830 = vsel %vm264, %v3803, 0
    %v3833 = vsel %vm264, %v3804, 0
    %v3836 = vsel %vm264, %v3805, 0
    %v3839 = vsel %vm264, %v3806, 0
    %v3842 = vsel %vm264, %v3807, 0
    %v3845 = vsel %vm264, %v3808, 0
    %v3848 = vsel %vm264, %v3809, 0
    %v3851 = vsel %vm264, %v3810, 0
    %v3854 = vsel %vm264, %v3811, 0
    %v3857 = vsel %vm264, %v3812, 0
    %v3860 = vsel %vm264, %v3813, 0
    %3862 = vmatpush.msra.mxu0 0.0
    %3863 = vmatpush.msra.mxu0 0.0
    %3864 = vmatpush.msra.mxu0 0.0
    %3865 = vmatpush.msra.mxu0 0.0
    %3866 = vmatpush.msra.mxu0 0.0
    %3867 = vmatpush.msra.mxu0 0.0
    %3868 = vmatpush.msra.mxu0 0.0
    %3869 = vmatpush.msra.mxu0 0.0
    %3870 = vmatpush.msra.mxu0 0.0
    %3871 = vmatpush.msra.mxu0 0.0
    %3872 = vmatpush.msra.mxu0 0.0
    %3873 = vmatpush.msra.mxu0 0.0
    %3874 = vmatpush.msra.mxu0 0.0
    %3875 = vmatpush.msra.mxu0 0.0
    %3876 = vmatpush.msra.mxu0 0.0
    %v3877 = vand.u32 %v226, 4294901760
    %3878 = vmatpush.msra.mxu0 %v3877
    %v3879 = vand.u32 %v3815, 4294901760
    %v3880 = vsub.f32 %v3815, %v3879
    %v3881 = vand.u32 %v3880, 4294901760
    %v3882 = vsub.f32 %v3880, %v3881
    %v3883 = vand.u32 %v3882, 4294901760
    %3884 = vmatmul.f32.gmra.mxu0 %v3883
    %v3885 = vpop.f32.mrf.mxu0
    %v3886 = vadd.f32 %v230, %v3885
    %v3887 = vand.u32 %v3818, 4294901760
    %v3888 = vsub.f32 %v3818, %v3887
    %v3889 = vand.u32 %v3888, 4294901760
    %v3890 = vsub.f32 %v3888, %v3889
    %v3891 = vand.u32 %v3890, 4294901760
    %3892 = vmatmul.f32.gmra.mxu0 %v3891
    %v3893 = vpop.f32.mrf.mxu0
    %v3894 = vadd.f32 %v230, %v3893
    %v3895 = vand.u32 %v3821, 4294901760
    %v3896 = vsub.f32 %v3821, %v3895
    %v3897 = vand.u32 %v3896, 4294901760
    %v3898 = vsub.f32 %v3896, %v3897
    %v3899 = vand.u32 %v3898, 4294901760
    %3900 = vmatmul.f32.gmra.mxu0 %v3899
    %v3901 = vpop.f32.mrf.mxu0
    %v3902 = vadd.f32 %v230, %v3901
    %v3903 = vand.u32 %v3824, 4294901760
    %v3904 = vsub.f32 %v3824, %v3903
    %v3905 = vand.u32 %v3904, 4294901760
    %v3906 = vsub.f32 %v3904, %v3905
    %v3907 = vand.u32 %v3906, 4294901760
    %3908 = vmatmul.f32.gmra.mxu0 %v3907
    %v3909 = vpop.f32.mrf.mxu0
    %v3910 = vadd.f32 %v230, %v3909
    %v3911 = vand.u32 %v3827, 4294901760
    %v3912 = vsub.f32 %v3827, %v3911
    %v3913 = vand.u32 %v3912, 4294901760
    %v3914 = vsub.f32 %v3912, %v3913
    %v3915 = vand.u32 %v3914, 4294901760
    %3916 = vmatmul.f32.gmra.mxu0 %v3915
    %v3917 = vpop.f32.mrf.mxu0
    %v3918 = vadd.f32 %v230, %v3917
    %v3919 = vand.u32 %v3830, 4294901760
    %v3920 = vsub.f32 %v3830, %v3919
    %v3921 = vand.u32 %v3920, 4294901760
    %v3922 = vsub.f32 %v3920, %v3921
    %v3923 = vand.u32 %v3922, 4294901760
    %3924 = vmatmul.f32.gmra.mxu0 %v3923
    %v3925 = vpop.f32.mrf.mxu0
    %v3926 = vadd.f32 %v230, %v3925
    %v3927 = vand.u32 %v3833, 4294901760
    %v3928 = vsub.f32 %v3833, %v3927
    %v3929 = vand.u32 %v3928, 4294901760
    %v3930 = vsub.f32 %v3928, %v3929
    %v3931 = vand.u32 %v3930, 4294901760
    %3932 = vmatmul.f32.gmra.mxu0 %v3931
    %v3933 = vpop.f32.mrf.mxu0
    %v3934 = vadd.f32 %v230, %v3933
    %v3935 = vand.u32 %v3836, 4294901760
    %v3936 = vsub.f32 %v3836, %v3935
    %v3937 = vand.u32 %v3936, 4294901760
    %v3938 = vsub.f32 %v3936, %v3937
    %v3939 = vand.u32 %v3938, 4294901760
    %3940 = vmatmul.f32.gmra.mxu0 %v3939
    %v3941 = vpop.f32.mrf.mxu0
    %v3942 = vadd.f32 %v230, %v3941
    %v3943 = vand.u32 %v3839, 4294901760
    %v3944 = vsub.f32 %v3839, %v3943
    %v3945 = vand.u32 %v3944, 4294901760
    %v3946 = vsub.f32 %v3944, %v3945
    %v3947 = vand.u32 %v3946, 4294901760
    %3948 = vmatmul.f32.gmra.mxu0 %v3947
    %v3949 = vpop.f32.mrf.mxu0
    %v3950 = vadd.f32 %v230, %v3949
    %v3951 = vand.u32 %v3842, 4294901760
    %v3952 = vsub.f32 %v3842, %v3951
    %v3953 = vand.u32 %v3952, 4294901760
    %v3954 = vsub.f32 %v3952, %v3953
    %v3955 = vand.u32 %v3954, 4294901760
    %3956 = vmatmul.f32.gmra.mxu0 %v3955
    %v3957 = vpop.f32.mrf.mxu0
    %v3958 = vadd.f32 %v230, %v3957
    %v3959 = vand.u32 %v3845, 4294901760
    %v3960 = vsub.f32 %v3845, %v3959
    %v3961 = vand.u32 %v3960, 4294901760
    %v3962 = vsub.f32 %v3960, %v3961
    %v3963 = vand.u32 %v3962, 4294901760
    %3964 = vmatmul.f32.gmra.mxu0 %v3963
    %v3965 = vpop.f32.mrf.mxu0
    %v3966 = vadd.f32 %v230, %v3965
    %v3967 = vand.u32 %v3848, 4294901760
    %v3968 = vsub.f32 %v3848, %v3967
    %v3969 = vand.u32 %v3968, 4294901760
    %v3970 = vsub.f32 %v3968, %v3969
    %v3971 = vand.u32 %v3970, 4294901760
    %3972 = vmatmul.f32.gmra.mxu0 %v3971
    %v3973 = vpop.f32.mrf.mxu0
    %v3974 = vadd.f32 %v230, %v3973
    %v3975 = vand.u32 %v3851, 4294901760
    %v3976 = vsub.f32 %v3851, %v3975
    %v3977 = vand.u32 %v3976, 4294901760
    %v3978 = vsub.f32 %v3976, %v3977
    %v3979 = vand.u32 %v3978, 4294901760
    %3980 = vmatmul.f32.gmra.mxu0 %v3979
    %v3981 = vpop.f32.mrf.mxu0
    %v3982 = vadd.f32 %v230, %v3981
    %v3983 = vand.u32 %v3854, 4294901760
    %v3984 = vsub.f32 %v3854, %v3983
    %v3985 = vand.u32 %v3984, 4294901760
    %v3986 = vsub.f32 %v3984, %v3985
    %v3987 = vand.u32 %v3986, 4294901760
    %3988 = vmatmul.f32.gmra.mxu0 %v3987
    %v3989 = vpop.f32.mrf.mxu0
    %v3990 = vadd.f32 %v230, %v3989
    %v3991 = vand.u32 %v3857, 4294901760
    %v3992 = vsub.f32 %v3857, %v3991
    %v3993 = vand.u32 %v3992, 4294901760
    %v3994 = vsub.f32 %v3992, %v3993
    %v3995 = vand.u32 %v3994, 4294901760
    %3996 = vmatmul.f32.gmra.mxu0 %v3995
    %v3997 = vpop.f32.mrf.mxu0
    %v3998 = vadd.f32 %v230, %v3997
    %v3999 = vand.u32 %v3860, 4294901760
    %v4000 = vsub.f32 %v3860, %v3999
    %v4001 = vand.u32 %v4000, 4294901760
    %v4002 = vsub.f32 %v4000, %v4001
    %v4003 = vand.u32 %v4002, 4294901760
    %4004 = vmatmul.f32.gmra.mxu0 %v4003
    %v4005 = vpop.f32.mrf.mxu0
    %v4006 = vadd.f32 %v230, %v4005
    %4007 = vdwg.mxu0
    %4008 = vmatpush.msra.mxu0 0.0
    %4009 = vmatpush.msra.mxu0 0.0
    %4010 = vmatpush.msra.mxu0 0.0
    %4011 = vmatpush.msra.mxu0 0.0
    %4012 = vmatpush.msra.mxu0 0.0
    %4013 = vmatpush.msra.mxu0 0.0
    %4014 = vmatpush.msra.mxu0 0.0
    %4015 = vmatpush.msra.mxu0 0.0
    %4016 = vmatpush.msra.mxu0 0.0
    %4017 = vmatpush.msra.mxu0 0.0
    %4018 = vmatpush.msra.mxu0 0.0
    %4019 = vmatpush.msra.mxu0 0.0
    %4020 = vmatpush.msra.mxu0 0.0
    %4021 = vmatpush.msra.mxu0 0.0
    %4022 = vmatpush.msra.mxu0 0.0
    %v4023 = vand.u32 %v226, 4294901760
    %v4024 = vsub.f32 %v226, %v4023
    %v4025 = vand.u32 %v4024, 4294901760
    %v4026 = vsub.f32 %v4024, %v4025
    %v4027 = vand.u32 %v4026, 4294901760
    %4028 = vmatpush.msra.mxu0 %v4027
    %v4029 = vand.u32 %v3815, 4294901760
    %4030 = vmatmul.f32.gmra.mxu0 %v4029
    %v4031 = vpop.f32.mrf.mxu0
    %v4032 = vadd.f32 %v3886, %v4031
    %v4033 = vand.u32 %v3818, 4294901760
    %4034 = vmatmul.f32.gmra.mxu0 %v4033
    %v4035 = vpop.f32.mrf.mxu0
    %v4036 = vadd.f32 %v3894, %v4035
    %v4037 = vand.u32 %v3821, 4294901760
    %4038 = vmatmul.f32.gmra.mxu0 %v4037
    %v4039 = vpop.f32.mrf.mxu0
    %v4040 = vadd.f32 %v3902, %v4039
    %v4041 = vand.u32 %v3824, 4294901760
    %4042 = vmatmul.f32.gmra.mxu0 %v4041
    %v4043 = vpop.f32.mrf.mxu0
    %v4044 = vadd.f32 %v3910, %v4043
    %v4045 = vand.u32 %v3827, 4294901760
    %4046 = vmatmul.f32.gmra.mxu0 %v4045
    %v4047 = vpop.f32.mrf.mxu0
    %v4048 = vadd.f32 %v3918, %v4047
    %v4049 = vand.u32 %v3830, 4294901760
    %4050 = vmatmul.f32.gmra.mxu0 %v4049
    %v4051 = vpop.f32.mrf.mxu0
    %v4052 = vadd.f32 %v3926, %v4051
    %v4053 = vand.u32 %v3833, 4294901760
    %4054 = vmatmul.f32.gmra.mxu0 %v4053
    %v4055 = vpop.f32.mrf.mxu0
    %v4056 = vadd.f32 %v3934, %v4055
    %v4057 = vand.u32 %v3836, 4294901760
    %4058 = vmatmul.f32.gmra.mxu0 %v4057
    %v4059 = vpop.f32.mrf.mxu0
    %v4060 = vadd.f32 %v3942, %v4059
    %v4061 = vand.u32 %v3839, 4294901760
    %4062 = vmatmul.f32.gmra.mxu0 %v4061
    %v4063 = vpop.f32.mrf.mxu0
    %v4064 = vadd.f32 %v3950, %v4063
    %v4065 = vand.u32 %v3842, 4294901760
    %4066 = vmatmul.f32.gmra.mxu0 %v4065
    %v4067 = vpop.f32.mrf.mxu0
    %v4068 = vadd.f32 %v3958, %v4067
    %v4069 = vand.u32 %v3845, 4294901760
    %4070 = vmatmul.f32.gmra.mxu0 %v4069
    %v4071 = vpop.f32.mrf.mxu0
    %v4072 = vadd.f32 %v3966, %v4071
    %v4073 = vand.u32 %v3848, 4294901760
    %4074 = vmatmul.f32.gmra.mxu0 %v4073
    %v4075 = vpop.f32.mrf.mxu0
    %v4076 = vadd.f32 %v3974, %v4075
    %v4077 = vand.u32 %v3851, 4294901760
    %4078 = vmatmul.f32.gmra.mxu0 %v4077
    %v4079 = vpop.f32.mrf.mxu0
    %v4080 = vadd.f32 %v3982, %v4079
    %v4081 = vand.u32 %v3854, 4294901760
    %4082 = vmatmul.f32.gmra.mxu0 %v4081
    %v4083 = vpop.f32.mrf.mxu0
    %v4084 = vadd.f32 %v3990, %v4083
    %v4085 = vand.u32 %v3857, 4294901760
    %4086 = vmatmul.f32.gmra.mxu0 %v4085
    %v4087 = vpop.f32.mrf.mxu0
    %v4088 = vadd.f32 %v3998, %v4087
    %v4089 = vand.u32 %v3860, 4294901760
    %4090 = vmatmul.f32.gmra.mxu0 %v4089
    %v4091 = vpop.f32.mrf.mxu0
    %v4092 = vadd.f32 %v4006, %v4091
    %4093 = vdwg.mxu0
    %4094 = vmatpush.msra.mxu0 0.0
    %4095 = vmatpush.msra.mxu0 0.0
    %4096 = vmatpush.msra.mxu0 0.0
    %4097 = vmatpush.msra.mxu0 0.0
    %4098 = vmatpush.msra.mxu0 0.0
    %4099 = vmatpush.msra.mxu0 0.0
    %4100 = vmatpush.msra.mxu0 0.0
    %4101 = vmatpush.msra.mxu0 0.0
    %4102 = vmatpush.msra.mxu0 0.0
    %4103 = vmatpush.msra.mxu0 0.0
    %4104 = vmatpush.msra.mxu0 0.0
    %4105 = vmatpush.msra.mxu0 0.0
    %4106 = vmatpush.msra.mxu0 0.0
    %4107 = vmatpush.msra.mxu0 0.0
    %4108 = vmatpush.msra.mxu0 0.0
    %v4109 = vand.u32 %v226, 4294901760
    %v4110 = vsub.f32 %v226, %v4109
    %4111 = vmatpush.msra.mxu0 %v4110
    %v4112 = vand.u32 %v3815, 4294901760
    %v4113 = vsub.f32 %v3815, %v4112
    %4114 = vmatmul.f32.gmra.mxu0 %v4113
    %v4115 = vpop.f32.mrf.mxu0
    %v4116 = vadd.f32 %v4032, %v4115
    %v4117 = vand.u32 %v3818, 4294901760
    %v4118 = vsub.f32 %v3818, %v4117
    %4119 = vmatmul.f32.gmra.mxu0 %v4118
    %v4120 = vpop.f32.mrf.mxu0
    %v4121 = vadd.f32 %v4036, %v4120
    %v4122 = vand.u32 %v3821, 4294901760
    %v4123 = vsub.f32 %v3821, %v4122
    %4124 = vmatmul.f32.gmra.mxu0 %v4123
    %v4125 = vpop.f32.mrf.mxu0
    %v4126 = vadd.f32 %v4040, %v4125
    %v4127 = vand.u32 %v3824, 4294901760
    %v4128 = vsub.f32 %v3824, %v4127
    %4129 = vmatmul.f32.gmra.mxu0 %v4128
    %v4130 = vpop.f32.mrf.mxu0
    %v4131 = vadd.f32 %v4044, %v4130
    %v4132 = vand.u32 %v3827, 4294901760
    %v4133 = vsub.f32 %v3827, %v4132
    %4134 = vmatmul.f32.gmra.mxu0 %v4133
    %v4135 = vpop.f32.mrf.mxu0
    %v4136 = vadd.f32 %v4048, %v4135
    %v4137 = vand.u32 %v3830, 4294901760
    %v4138 = vsub.f32 %v3830, %v4137
    %4139 = vmatmul.f32.gmra.mxu0 %v4138
    %v4140 = vpop.f32.mrf.mxu0
    %v4141 = vadd.f32 %v4052, %v4140
    %v4142 = vand.u32 %v3833, 4294901760
    %v4143 = vsub.f32 %v3833, %v4142
    %4144 = vmatmul.f32.gmra.mxu0 %v4143
    %v4145 = vpop.f32.mrf.mxu0
    %v4146 = vadd.f32 %v4056, %v4145
    %v4147 = vand.u32 %v3836, 4294901760
    %v4148 = vsub.f32 %v3836, %v4147
    %4149 = vmatmul.f32.gmra.mxu0 %v4148
    %v4150 = vpop.f32.mrf.mxu0
    %v4151 = vadd.f32 %v4060, %v4150
    %v4152 = vand.u32 %v3839, 4294901760
    %v4153 = vsub.f32 %v3839, %v4152
    %4154 = vmatmul.f32.gmra.mxu0 %v4153
    %v4155 = vpop.f32.mrf.mxu0
    %v4156 = vadd.f32 %v4064, %v4155
    %v4157 = vand.u32 %v3842, 4294901760
    %v4158 = vsub.f32 %v3842, %v4157
    %4159 = vmatmul.f32.gmra.mxu0 %v4158
    %v4160 = vpop.f32.mrf.mxu0
    %v4161 = vadd.f32 %v4068, %v4160
    %v4162 = vand.u32 %v3845, 4294901760
    %v4163 = vsub.f32 %v3845, %v4162
    %4164 = vmatmul.f32.gmra.mxu0 %v4163
    %v4165 = vpop.f32.mrf.mxu0
    %v4166 = vadd.f32 %v4072, %v4165
    %v4167 = vand.u32 %v3848, 4294901760
    %v4168 = vsub.f32 %v3848, %v4167
    %4169 = vmatmul.f32.gmra.mxu0 %v4168
    %v4170 = vpop.f32.mrf.mxu0
    %v4171 = vadd.f32 %v4076, %v4170
    %v4172 = vand.u32 %v3851, 4294901760
    %v4173 = vsub.f32 %v3851, %v4172
    %4174 = vmatmul.f32.gmra.mxu0 %v4173
    %v4175 = vpop.f32.mrf.mxu0
    %v4176 = vadd.f32 %v4080, %v4175
    %v4177 = vand.u32 %v3854, 4294901760
    %v4178 = vsub.f32 %v3854, %v4177
    %4179 = vmatmul.f32.gmra.mxu0 %v4178
    %v4180 = vpop.f32.mrf.mxu0
    %v4181 = vadd.f32 %v4084, %v4180
    %v4182 = vand.u32 %v3857, 4294901760
    %v4183 = vsub.f32 %v3857, %v4182
    %4184 = vmatmul.f32.gmra.mxu0 %v4183
    %v4185 = vpop.f32.mrf.mxu0
    %v4186 = vadd.f32 %v4088, %v4185
    %v4187 = vand.u32 %v3860, 4294901760
    %v4188 = vsub.f32 %v3860, %v4187
    %4189 = vmatmul.f32.gmra.mxu0 %v4188
    %v4190 = vpop.f32.mrf.mxu0
    %v4191 = vadd.f32 %v4092, %v4190
    %4192 = vdwg.mxu0
    %4193 = vmatpush.msra.mxu0 0.0
    %4194 = vmatpush.msra.mxu0 0.0
    %4195 = vmatpush.msra.mxu0 0.0
    %4196 = vmatpush.msra.mxu0 0.0
    %4197 = vmatpush.msra.mxu0 0.0
    %4198 = vmatpush.msra.mxu0 0.0
    %4199 = vmatpush.msra.mxu0 0.0
    %4200 = vmatpush.msra.mxu0 0.0
    %4201 = vmatpush.msra.mxu0 0.0
    %4202 = vmatpush.msra.mxu0 0.0
    %4203 = vmatpush.msra.mxu0 0.0
    %4204 = vmatpush.msra.mxu0 0.0
    %4205 = vmatpush.msra.mxu0 0.0
    %4206 = vmatpush.msra.mxu0 0.0
    %4207 = vmatpush.msra.mxu0 0.0
    %v4208 = vand.u32 %v226, 4294901760
    %4209 = vmatpush.msra.mxu0 %v4208
    %v4210 = vand.u32 %v3815, 4294901760
    %v4211 = vsub.f32 %v3815, %v4210
    %v4212 = vand.u32 %v4211, 4294901760
    %4213 = vmatmul.f32.gmra.mxu0 %v4212
    %v4214 = vpop.f32.mrf.mxu0
    %v4215 = vadd.f32 %v4116, %v4214
    %v4216 = vand.u32 %v3818, 4294901760
    %v4217 = vsub.f32 %v3818, %v4216
    %v4218 = vand.u32 %v4217, 4294901760
    %4219 = vmatmul.f32.gmra.mxu0 %v4218
    %v4220 = vpop.f32.mrf.mxu0
    %v4221 = vadd.f32 %v4121, %v4220
    %v4222 = vand.u32 %v3821, 4294901760
    %v4223 = vsub.f32 %v3821, %v4222
    %v4224 = vand.u32 %v4223, 4294901760
    %4225 = vmatmul.f32.gmra.mxu0 %v4224
    %v4226 = vpop.f32.mrf.mxu0
    %v4227 = vadd.f32 %v4126, %v4226
    %v4228 = vand.u32 %v3824, 4294901760
    %v4229 = vsub.f32 %v3824, %v4228
    %v4230 = vand.u32 %v4229, 4294901760
    %4231 = vmatmul.f32.gmra.mxu0 %v4230
    %v4232 = vpop.f32.mrf.mxu0
    %v4233 = vadd.f32 %v4131, %v4232
    %v4234 = vand.u32 %v3827, 4294901760
    %v4235 = vsub.f32 %v3827, %v4234
    %v4236 = vand.u32 %v4235, 4294901760
    %4237 = vmatmul.f32.gmra.mxu0 %v4236
    %v4238 = vpop.f32.mrf.mxu0
    %v4239 = vadd.f32 %v4136, %v4238
    %v4240 = vand.u32 %v3830, 4294901760
    %v4241 = vsub.f32 %v3830, %v4240
    %v4242 = vand.u32 %v4241, 4294901760
    %4243 = vmatmul.f32.gmra.mxu0 %v4242
    %v4244 = vpop.f32.mrf.mxu0
    %v4245 = vadd.f32 %v4141, %v4244
    %v4246 = vand.u32 %v3833, 4294901760
    %v4247 = vsub.f32 %v3833, %v4246
    %v4248 = vand.u32 %v4247, 4294901760
    %4249 = vmatmul.f32.gmra.mxu0 %v4248
    %v4250 = vpop.f32.mrf.mxu0
    %v4251 = vadd.f32 %v4146, %v4250
    %v4252 = vand.u32 %v3836, 4294901760
    %v4253 = vsub.f32 %v3836, %v4252
    %v4254 = vand.u32 %v4253, 4294901760
    %4255 = vmatmul.f32.gmra.mxu0 %v4254
    %v4256 = vpop.f32.mrf.mxu0
    %v4257 = vadd.f32 %v4151, %v4256
    %v4258 = vand.u32 %v3839, 4294901760
    %v4259 = vsub.f32 %v3839, %v4258
    %v4260 = vand.u32 %v4259, 4294901760
    %4261 = vmatmul.f32.gmra.mxu0 %v4260
    %v4262 = vpop.f32.mrf.mxu0
    %v4263 = vadd.f32 %v4156, %v4262
    %v4264 = vand.u32 %v3842, 4294901760
    %v4265 = vsub.f32 %v3842, %v4264
    %v4266 = vand.u32 %v4265, 4294901760
    %4267 = vmatmul.f32.gmra.mxu0 %v4266
    %v4268 = vpop.f32.mrf.mxu0
    %v4269 = vadd.f32 %v4161, %v4268
    %v4270 = vand.u32 %v3845, 4294901760
    %v4271 = vsub.f32 %v3845, %v4270
    %v4272 = vand.u32 %v4271, 4294901760
    %4273 = vmatmul.f32.gmra.mxu0 %v4272
    %v4274 = vpop.f32.mrf.mxu0
    %v4275 = vadd.f32 %v4166, %v4274
    %v4276 = vand.u32 %v3848, 4294901760
    %v4277 = vsub.f32 %v3848, %v4276
    %v4278 = vand.u32 %v4277, 4294901760
    %4279 = vmatmul.f32.gmra.mxu0 %v4278
    %v4280 = vpop.f32.mrf.mxu0
    %v4281 = vadd.f32 %v4171, %v4280
    %v4282 = vand.u32 %v3851, 4294901760
    %v4283 = vsub.f32 %v3851, %v4282
    %v4284 = vand.u32 %v4283, 4294901760
    %4285 = vmatmul.f32.gmra.mxu0 %v4284
    %v4286 = vpop.f32.mrf.mxu0
    %v4287 = vadd.f32 %v4176, %v4286
    %v4288 = vand.u32 %v3854, 4294901760
    %v4289 = vsub.f32 %v3854, %v4288
    %v4290 = vand.u32 %v4289, 4294901760
    %4291 = vmatmul.f32.gmra.mxu0 %v4290
    %v4292 = vpop.f32.mrf.mxu0
    %v4293 = vadd.f32 %v4181, %v4292
    %v4294 = vand.u32 %v3857, 4294901760
    %v4295 = vsub.f32 %v3857, %v4294
    %v4296 = vand.u32 %v4295, 4294901760
    %4297 = vmatmul.f32.gmra.mxu0 %v4296
    %v4298 = vpop.f32.mrf.mxu0
    %v4299 = vadd.f32 %v4186, %v4298
    %v4300 = vand.u32 %v3860, 4294901760
    %v4301 = vsub.f32 %v3860, %v4300
    %v4302 = vand.u32 %v4301, 4294901760
    %4303 = vmatmul.f32.gmra.mxu0 %v4302
    %v4304 = vpop.f32.mrf.mxu0
    %v4305 = vadd.f32 %v4191, %v4304
    %4306 = vdwg.mxu0
    %4307 = vmatpush.msra.mxu0 0.0
    %4308 = vmatpush.msra.mxu0 0.0
    %4309 = vmatpush.msra.mxu0 0.0
    %4310 = vmatpush.msra.mxu0 0.0
    %4311 = vmatpush.msra.mxu0 0.0
    %4312 = vmatpush.msra.mxu0 0.0
    %4313 = vmatpush.msra.mxu0 0.0
    %4314 = vmatpush.msra.mxu0 0.0
    %4315 = vmatpush.msra.mxu0 0.0
    %4316 = vmatpush.msra.mxu0 0.0
    %4317 = vmatpush.msra.mxu0 0.0
    %4318 = vmatpush.msra.mxu0 0.0
    %4319 = vmatpush.msra.mxu0 0.0
    %4320 = vmatpush.msra.mxu0 0.0
    %4321 = vmatpush.msra.mxu0 0.0
    %v4322 = vand.u32 %v226, 4294901760
    %v4323 = vsub.f32 %v226, %v4322
    %v4324 = vand.u32 %v4323, 4294901760
    %4325 = vmatpush.msra.mxu0 %v4324
    %v4326 = vand.u32 %v3815, 4294901760
    %4327 = vmatmul.f32.gmra.mxu0 %v4326
    %v4328 = vpop.f32.mrf.mxu0
    %v4329 = vadd.f32 %v4215, %v4328
    %v4330 = vand.u32 %v3818, 4294901760
    %4331 = vmatmul.f32.gmra.mxu0 %v4330
    %v4332 = vpop.f32.mrf.mxu0
    %v4333 = vadd.f32 %v4221, %v4332
    %v4334 = vand.u32 %v3821, 4294901760
    %4335 = vmatmul.f32.gmra.mxu0 %v4334
    %v4336 = vpop.f32.mrf.mxu0
    %v4337 = vadd.f32 %v4227, %v4336
    %v4338 = vand.u32 %v3824, 4294901760
    %4339 = vmatmul.f32.gmra.mxu0 %v4338
    %v4340 = vpop.f32.mrf.mxu0
    %v4341 = vadd.f32 %v4233, %v4340
    %v4342 = vand.u32 %v3827, 4294901760
    %4343 = vmatmul.f32.gmra.mxu0 %v4342
    %v4344 = vpop.f32.mrf.mxu0
    %v4345 = vadd.f32 %v4239, %v4344
    %v4346 = vand.u32 %v3830, 4294901760
    %4347 = vmatmul.f32.gmra.mxu0 %v4346
    %v4348 = vpop.f32.mrf.mxu0
    %v4349 = vadd.f32 %v4245, %v4348
    %v4350 = vand.u32 %v3833, 4294901760
    %4351 = vmatmul.f32.gmra.mxu0 %v4350
    %v4352 = vpop.f32.mrf.mxu0
    %v4353 = vadd.f32 %v4251, %v4352
    %v4354 = vand.u32 %v3836, 4294901760
    %4355 = vmatmul.f32.gmra.mxu0 %v4354
    %v4356 = vpop.f32.mrf.mxu0
    %v4357 = vadd.f32 %v4257, %v4356
    %v4358 = vand.u32 %v3839, 4294901760
    %4359 = vmatmul.f32.gmra.mxu0 %v4358
    %v4360 = vpop.f32.mrf.mxu0
    %v4361 = vadd.f32 %v4263, %v4360
    %v4362 = vand.u32 %v3842, 4294901760
    %4363 = vmatmul.f32.gmra.mxu0 %v4362
    %v4364 = vpop.f32.mrf.mxu0
    %v4365 = vadd.f32 %v4269, %v4364
    %v4366 = vand.u32 %v3845, 4294901760
    %4367 = vmatmul.f32.gmra.mxu0 %v4366
    %v4368 = vpop.f32.mrf.mxu0
    %v4369 = vadd.f32 %v4275, %v4368
    %v4370 = vand.u32 %v3848, 4294901760
    %4371 = vmatmul.f32.gmra.mxu0 %v4370
    %v4372 = vpop.f32.mrf.mxu0
    %v4373 = vadd.f32 %v4281, %v4372
    %v4374 = vand.u32 %v3851, 4294901760
    %4375 = vmatmul.f32.gmra.mxu0 %v4374
    %v4376 = vpop.f32.mrf.mxu0
    %v4377 = vadd.f32 %v4287, %v4376
    %v4378 = vand.u32 %v3854, 4294901760
    %4379 = vmatmul.f32.gmra.mxu0 %v4378
    %v4380 = vpop.f32.mrf.mxu0
    %v4381 = vadd.f32 %v4293, %v4380
    %v4382 = vand.u32 %v3857, 4294901760
    %4383 = vmatmul.f32.gmra.mxu0 %v4382
    %v4384 = vpop.f32.mrf.mxu0
    %v4385 = vadd.f32 %v4299, %v4384
    %v4386 = vand.u32 %v3860, 4294901760
    %4387 = vmatmul.f32.gmra.mxu0 %v4386
    %v4388 = vpop.f32.mrf.mxu0
    %v4389 = vadd.f32 %v4305, %v4388
    %4390 = vdwg.mxu0
    %4391 = vmatpush.msra.mxu0 0.0
    %4392 = vmatpush.msra.mxu0 0.0
    %4393 = vmatpush.msra.mxu0 0.0
    %4394 = vmatpush.msra.mxu0 0.0
    %4395 = vmatpush.msra.mxu0 0.0
    %4396 = vmatpush.msra.mxu0 0.0
    %4397 = vmatpush.msra.mxu0 0.0
    %4398 = vmatpush.msra.mxu0 0.0
    %4399 = vmatpush.msra.mxu0 0.0
    %4400 = vmatpush.msra.mxu0 0.0
    %4401 = vmatpush.msra.mxu0 0.0
    %4402 = vmatpush.msra.mxu0 0.0
    %4403 = vmatpush.msra.mxu0 0.0
    %4404 = vmatpush.msra.mxu0 0.0
    %4405 = vmatpush.msra.mxu0 0.0
    %v4406 = vand.u32 %v226, 4294901760
    %4407 = vmatpush.msra.mxu0 %v4406
    %v4408 = vand.u32 %v3815, 4294901760
    %4409 = vmatmul.f32.gmra.mxu0 %v4408
    %v4410 = vpop.f32.mrf.mxu0
    %v4411 = vadd.f32 %v4329, %v4410
    %v4412 = vand.u32 %v3818, 4294901760
    %4413 = vmatmul.f32.gmra.mxu0 %v4412
    %v4414 = vpop.f32.mrf.mxu0
    %v4415 = vadd.f32 %v4333, %v4414
    %v4416 = vand.u32 %v3821, 4294901760
    %4417 = vmatmul.f32.gmra.mxu0 %v4416
    %v4418 = vpop.f32.mrf.mxu0
    %v4419 = vadd.f32 %v4337, %v4418
    %v4420 = vand.u32 %v3824, 4294901760
    %4421 = vmatmul.f32.gmra.mxu0 %v4420
    %v4422 = vpop.f32.mrf.mxu0
    %v4423 = vadd.f32 %v4341, %v4422
    %v4424 = vand.u32 %v3827, 4294901760
    %4425 = vmatmul.f32.gmra.mxu0 %v4424
    %v4426 = vpop.f32.mrf.mxu0
    %v4427 = vadd.f32 %v4345, %v4426
    %v4428 = vand.u32 %v3830, 4294901760
    %4429 = vmatmul.f32.gmra.mxu0 %v4428
    %v4430 = vpop.f32.mrf.mxu0
    %v4431 = vadd.f32 %v4349, %v4430
    %v4432 = vand.u32 %v3833, 4294901760
    %4433 = vmatmul.f32.gmra.mxu0 %v4432
    %v4434 = vpop.f32.mrf.mxu0
    %v4435 = vadd.f32 %v4353, %v4434
    %v4436 = vand.u32 %v3836, 4294901760
    %4437 = vmatmul.f32.gmra.mxu0 %v4436
    %v4438 = vpop.f32.mrf.mxu0
    %v4439 = vadd.f32 %v4357, %v4438
    %v4440 = vand.u32 %v3839, 4294901760
    %4441 = vmatmul.f32.gmra.mxu0 %v4440
    %v4442 = vpop.f32.mrf.mxu0
    %v4443 = vadd.f32 %v4361, %v4442
    %v4444 = vand.u32 %v3842, 4294901760
    %4445 = vmatmul.f32.gmra.mxu0 %v4444
    %v4446 = vpop.f32.mrf.mxu0
    %v4447 = vadd.f32 %v4365, %v4446
    %v4448 = vand.u32 %v3845, 4294901760
    %4449 = vmatmul.f32.gmra.mxu0 %v4448
    %v4450 = vpop.f32.mrf.mxu0
    %v4451 = vadd.f32 %v4369, %v4450
    %v4452 = vand.u32 %v3848, 4294901760
    %4453 = vmatmul.f32.gmra.mxu0 %v4452
    %v4454 = vpop.f32.mrf.mxu0
    %v4455 = vadd.f32 %v4373, %v4454
    %v4456 = vand.u32 %v3851, 4294901760
    %4457 = vmatmul.f32.gmra.mxu0 %v4456
    %v4458 = vpop.f32.mrf.mxu0
    %v4459 = vadd.f32 %v4377, %v4458
    %v4460 = vand.u32 %v3854, 4294901760
    %4461 = vmatmul.f32.gmra.mxu0 %v4460
    %v4462 = vpop.f32.mrf.mxu0
    %v4463 = vadd.f32 %v4381, %v4462
    %v4464 = vand.u32 %v3857, 4294901760
    %4465 = vmatmul.f32.gmra.mxu0 %v4464
    %v4466 = vpop.f32.mrf.mxu0
    %v4467 = vadd.f32 %v4385, %v4466
    %v4468 = vand.u32 %v3860, 4294901760
    %4469 = vmatmul.f32.gmra.mxu0 %v4468
    %v4470 = vpop.f32.mrf.mxu0
    %v4471 = vadd.f32 %v4389, %v4470
    %4472 = vdwg.mxu0
    %s4473 = scalar_lea.vmem [#allocation6], 640
    %4474 = vst [vmem:[%s4473] sm:$0xff] %v4411
    %4475 = vst [vmem:[%s4473 + $0x8] sm:$0xff] %v4415
    %4476 = vst [vmem:[%s4473 + $0x10] sm:$0xff] %v4419
    %4477 = vst [vmem:[%s4473 + $0x18] sm:$0xff] %v4423
    %4478 = vst [vmem:[%s4473 + $0x20] sm:$0xff] %v4427
    %4479 = vst [vmem:[%s4473 + $0x28] sm:$0xff] %v4431
    %4480 = vst [vmem:[%s4473 + $0x30] sm:$0xff] %v4435
    %4481 = vst [vmem:[%s4473 + $0x38] sm:$0xff] %v4439
    %4482 = vst [vmem:[%s4473 + $0x40] sm:$0xff] %v4443
    %4483 = vst [vmem:[%s4473 + $0x48] sm:$0xff] %v4447
    %4484 = vst [vmem:[%s4473 + $0x50] sm:$0xff] %v4451
    %4485 = vst [vmem:[%s4473 + $0x58] sm:$0xff] %v4455
    %4486 = vst [vmem:[%s4473 + $0x60] sm:$0xff] %v4459
    %4487 = vst [vmem:[%s4473 + $0x68] sm:$0xff] %v4463
    %4488 = vst [vmem:[%s4473 + $0x70] sm:$0xff] %v4467
    %4489 = vst [vmem:[%s4473 + $0x78] sm:$0xff] %v4471
    %s4490 = scalar_lea.vmem [#allocation2], 48
    %v4491 = vld [vmem:[%s4490] sm:$0xff]
    %4492 = vxpose.xlu0.b32.start [1/16] %v4491, 128
    %4493 = vxpose.xlu0.b32.cont [2/16] 0.0, 128
    %4494 = vxpose.xlu0.b32.cont [3/16] 0.0, 128
    %4495 = vxpose.xlu0.b32.cont [4/16] 0.0, 128
    %4496 = vxpose.xlu0.b32.cont [5/16] 0.0, 128
    %4497 = vxpose.xlu0.b32.cont [6/16] 0.0, 128
    %4498 = vxpose.xlu0.b32.cont [7/16] 0.0, 128
    %4499 = vxpose.xlu0.b32.cont [8/16] 0.0, 128
    %4500 = vxpose.xlu0.b32.cont [9/16] 0.0, 128
    %4501 = vxpose.xlu0.b32.cont [10/16] 0.0, 128
    %4502 = vxpose.xlu0.b32.cont [11/16] 0.0, 128
    %4503 = vxpose.xlu0.b32.cont [12/16] 0.0, 128
    %4504 = vxpose.xlu0.b32.cont [13/16] 0.0, 128
    %4505 = vxpose.xlu0.b32.cont [14/16] 0.0, 128
    %4506 = vxpose.xlu0.b32.cont [15/16] 0.0, 128
    %4507 = vxpose.xlu0.b32.end [16/16] 0.0, 128
    %v4508 = vpop.trf.xlu0
    %v4509 = vpop.trf.xlu0
    %v4510 = vpop.trf.xlu0
    %v4511 = vpop.trf.xlu0
    %v4512 = vpop.trf.xlu0
    %v4513 = vpop.trf.xlu0
    %v4514 = vpop.trf.xlu0
    %v4515 = vpop.trf.xlu0
    %v4516 = vpop.trf.xlu0
    %v4517 = vpop.trf.xlu0
    %v4518 = vpop.trf.xlu0
    %v4519 = vpop.trf.xlu0
    %v4520 = vpop.trf.xlu0
    %v4521 = vpop.trf.xlu0
    %v4522 = vpop.trf.xlu0
    %v4523 = vpop.trf.xlu0
    %v4525 = vsel %vm264, %v4508, 0
    %v4528 = vsel %vm264, %v4509, 0
    %v4531 = vsel %vm264, %v4510, 0
    %v4534 = vsel %vm264, %v4511, 0
    %v4537 = vsel %vm264, %v4512, 0
    %v4540 = vsel %vm264, %v4513, 0
    %v4543 = vsel %vm264, %v4514, 0
    %v4546 = vsel %vm264, %v4515, 0
    %v4549 = vsel %vm264, %v4516, 0
    %v4552 = vsel %vm264, %v4517, 0
    %v4555 = vsel %vm264, %v4518, 0
    %v4558 = vsel %vm264, %v4519, 0
    %v4561 = vsel %vm264, %v4520, 0
    %v4564 = vsel %vm264, %v4521, 0
    %v4567 = vsel %vm264, %v4522, 0
    %v4570 = vsel %vm264, %v4523, 0
    %4572 = vmatpush.msra.mxu0 0.0
    %4573 = vmatpush.msra.mxu0 0.0
    %4574 = vmatpush.msra.mxu0 0.0
    %4575 = vmatpush.msra.mxu0 0.0
    %4576 = vmatpush.msra.mxu0 0.0
    %4577 = vmatpush.msra.mxu0 0.0
    %4578 = vmatpush.msra.mxu0 0.0
    %4579 = vmatpush.msra.mxu0 0.0
    %4580 = vmatpush.msra.mxu0 0.0
    %4581 = vmatpush.msra.mxu0 0.0
    %4582 = vmatpush.msra.mxu0 0.0
    %4583 = vmatpush.msra.mxu0 0.0
    %4584 = vmatpush.msra.mxu0 0.0
    %4585 = vmatpush.msra.mxu0 0.0
    %4586 = vmatpush.msra.mxu0 0.0
    %v4587 = vand.u32 %v226, 4294901760
    %4588 = vmatpush.msra.mxu0 %v4587
    %v4589 = vand.u32 %v4525, 4294901760
    %v4590 = vsub.f32 %v4525, %v4589
    %v4591 = vand.u32 %v4590, 4294901760
    %v4592 = vsub.f32 %v4590, %v4591
    %v4593 = vand.u32 %v4592, 4294901760
    %4594 = vmatmul.f32.gmra.mxu0 %v4593
    %v4595 = vpop.f32.mrf.mxu0
    %v4596 = vadd.f32 %v230, %v4595
    %v4597 = vand.u32 %v4528, 4294901760
    %v4598 = vsub.f32 %v4528, %v4597
    %v4599 = vand.u32 %v4598, 4294901760
    %v4600 = vsub.f32 %v4598, %v4599
    %v4601 = vand.u32 %v4600, 4294901760
    %4602 = vmatmul.f32.gmra.mxu0 %v4601
    %v4603 = vpop.f32.mrf.mxu0
    %v4604 = vadd.f32 %v230, %v4603
    %v4605 = vand.u32 %v4531, 4294901760
    %v4606 = vsub.f32 %v4531, %v4605
    %v4607 = vand.u32 %v4606, 4294901760
    %v4608 = vsub.f32 %v4606, %v4607
    %v4609 = vand.u32 %v4608, 4294901760
    %4610 = vmatmul.f32.gmra.mxu0 %v4609
    %v4611 = vpop.f32.mrf.mxu0
    %v4612 = vadd.f32 %v230, %v4611
    %v4613 = vand.u32 %v4534, 4294901760
    %v4614 = vsub.f32 %v4534, %v4613
    %v4615 = vand.u32 %v4614, 4294901760
    %v4616 = vsub.f32 %v4614, %v4615
    %v4617 = vand.u32 %v4616, 4294901760
    %4618 = vmatmul.f32.gmra.mxu0 %v4617
    %v4619 = vpop.f32.mrf.mxu0
    %v4620 = vadd.f32 %v230, %v4619
    %v4621 = vand.u32 %v4537, 4294901760
    %v4622 = vsub.f32 %v4537, %v4621
    %v4623 = vand.u32 %v4622, 4294901760
    %v4624 = vsub.f32 %v4622, %v4623
    %v4625 = vand.u32 %v4624, 4294901760
    %4626 = vmatmul.f32.gmra.mxu0 %v4625
    %v4627 = vpop.f32.mrf.mxu0
    %v4628 = vadd.f32 %v230, %v4627
    %v4629 = vand.u32 %v4540, 4294901760
    %v4630 = vsub.f32 %v4540, %v4629
    %v4631 = vand.u32 %v4630, 4294901760
    %v4632 = vsub.f32 %v4630, %v4631
    %v4633 = vand.u32 %v4632, 4294901760
    %4634 = vmatmul.f32.gmra.mxu0 %v4633
    %v4635 = vpop.f32.mrf.mxu0
    %v4636 = vadd.f32 %v230, %v4635
    %v4637 = vand.u32 %v4543, 4294901760
    %v4638 = vsub.f32 %v4543, %v4637
    %v4639 = vand.u32 %v4638, 4294901760
    %v4640 = vsub.f32 %v4638, %v4639
    %v4641 = vand.u32 %v4640, 4294901760
    %4642 = vmatmul.f32.gmra.mxu0 %v4641
    %v4643 = vpop.f32.mrf.mxu0
    %v4644 = vadd.f32 %v230, %v4643
    %v4645 = vand.u32 %v4546, 4294901760
    %v4646 = vsub.f32 %v4546, %v4645
    %v4647 = vand.u32 %v4646, 4294901760
    %v4648 = vsub.f32 %v4646, %v4647
    %v4649 = vand.u32 %v4648, 4294901760
    %4650 = vmatmul.f32.gmra.mxu0 %v4649
    %v4651 = vpop.f32.mrf.mxu0
    %v4652 = vadd.f32 %v230, %v4651
    %v4653 = vand.u32 %v4549, 4294901760
    %v4654 = vsub.f32 %v4549, %v4653
    %v4655 = vand.u32 %v4654, 4294901760
    %v4656 = vsub.f32 %v4654, %v4655
    %v4657 = vand.u32 %v4656, 4294901760
    %4658 = vmatmul.f32.gmra.mxu0 %v4657
    %v4659 = vpop.f32.mrf.mxu0
    %v4660 = vadd.f32 %v230, %v4659
    %v4661 = vand.u32 %v4552, 4294901760
    %v4662 = vsub.f32 %v4552, %v4661
    %v4663 = vand.u32 %v4662, 4294901760
    %v4664 = vsub.f32 %v4662, %v4663
    %v4665 = vand.u32 %v4664, 4294901760
    %4666 = vmatmul.f32.gmra.mxu0 %v4665
    %v4667 = vpop.f32.mrf.mxu0
    %v4668 = vadd.f32 %v230, %v4667
    %v4669 = vand.u32 %v4555, 4294901760
    %v4670 = vsub.f32 %v4555, %v4669
    %v4671 = vand.u32 %v4670, 4294901760
    %v4672 = vsub.f32 %v4670, %v4671
    %v4673 = vand.u32 %v4672, 4294901760
    %4674 = vmatmul.f32.gmra.mxu0 %v4673
    %v4675 = vpop.f32.mrf.mxu0
    %v4676 = vadd.f32 %v230, %v4675
    %v4677 = vand.u32 %v4558, 4294901760
    %v4678 = vsub.f32 %v4558, %v4677
    %v4679 = vand.u32 %v4678, 4294901760
    %v4680 = vsub.f32 %v4678, %v4679
    %v4681 = vand.u32 %v4680, 4294901760
    %4682 = vmatmul.f32.gmra.mxu0 %v4681
    %v4683 = vpop.f32.mrf.mxu0
    %v4684 = vadd.f32 %v230, %v4683
    %v4685 = vand.u32 %v4561, 4294901760
    %v4686 = vsub.f32 %v4561, %v4685
    %v4687 = vand.u32 %v4686, 4294901760
    %v4688 = vsub.f32 %v4686, %v4687
    %v4689 = vand.u32 %v4688, 4294901760
    %4690 = vmatmul.f32.gmra.mxu0 %v4689
    %v4691 = vpop.f32.mrf.mxu0
    %v4692 = vadd.f32 %v230, %v4691
    %v4693 = vand.u32 %v4564, 4294901760
    %v4694 = vsub.f32 %v4564, %v4693
    %v4695 = vand.u32 %v4694, 4294901760
    %v4696 = vsub.f32 %v4694, %v4695
    %v4697 = vand.u32 %v4696, 4294901760
    %4698 = vmatmul.f32.gmra.mxu0 %v4697
    %v4699 = vpop.f32.mrf.mxu0
    %v4700 = vadd.f32 %v230, %v4699
    %v4701 = vand.u32 %v4567, 4294901760
    %v4702 = vsub.f32 %v4567, %v4701
    %v4703 = vand.u32 %v4702, 4294901760
    %v4704 = vsub.f32 %v4702, %v4703
    %v4705 = vand.u32 %v4704, 4294901760
    %4706 = vmatmul.f32.gmra.mxu0 %v4705
    %v4707 = vpop.f32.mrf.mxu0
    %v4708 = vadd.f32 %v230, %v4707
    %v4709 = vand.u32 %v4570, 4294901760
    %v4710 = vsub.f32 %v4570, %v4709
    %v4711 = vand.u32 %v4710, 4294901760
    %v4712 = vsub.f32 %v4710, %v4711
    %v4713 = vand.u32 %v4712, 4294901760
    %4714 = vmatmul.f32.gmra.mxu0 %v4713
    %v4715 = vpop.f32.mrf.mxu0
    %v4716 = vadd.f32 %v230, %v4715
    %4717 = vdwg.mxu0
    %4718 = vmatpush.msra.mxu0 0.0
    %4719 = vmatpush.msra.mxu0 0.0
    %4720 = vmatpush.msra.mxu0 0.0
    %4721 = vmatpush.msra.mxu0 0.0
    %4722 = vmatpush.msra.mxu0 0.0
    %4723 = vmatpush.msra.mxu0 0.0
    %4724 = vmatpush.msra.mxu0 0.0
    %4725 = vmatpush.msra.mxu0 0.0
    %4726 = vmatpush.msra.mxu0 0.0
    %4727 = vmatpush.msra.mxu0 0.0
    %4728 = vmatpush.msra.mxu0 0.0
    %4729 = vmatpush.msra.mxu0 0.0
    %4730 = vmatpush.msra.mxu0 0.0
    %4731 = vmatpush.msra.mxu0 0.0
    %4732 = vmatpush.msra.mxu0 0.0
    %v4733 = vand.u32 %v226, 4294901760
    %v4734 = vsub.f32 %v226, %v4733
    %v4735 = vand.u32 %v4734, 4294901760
    %v4736 = vsub.f32 %v4734, %v4735
    %v4737 = vand.u32 %v4736, 4294901760
    %4738 = vmatpush.msra.mxu0 %v4737
    %v4739 = vand.u32 %v4525, 4294901760
    %4740 = vmatmul.f32.gmra.mxu0 %v4739
    %v4741 = vpop.f32.mrf.mxu0
    %v4742 = vadd.f32 %v4596, %v4741
    %v4743 = vand.u32 %v4528, 4294901760
    %4744 = vmatmul.f32.gmra.mxu0 %v4743
    %v4745 = vpop.f32.mrf.mxu0
    %v4746 = vadd.f32 %v4604, %v4745
    %v4747 = vand.u32 %v4531, 4294901760
    %4748 = vmatmul.f32.gmra.mxu0 %v4747
    %v4749 = vpop.f32.mrf.mxu0
    %v4750 = vadd.f32 %v4612, %v4749
    %v4751 = vand.u32 %v4534, 4294901760
    %4752 = vmatmul.f32.gmra.mxu0 %v4751
    %v4753 = vpop.f32.mrf.mxu0
    %v4754 = vadd.f32 %v4620, %v4753
    %v4755 = vand.u32 %v4537, 4294901760
    %4756 = vmatmul.f32.gmra.mxu0 %v4755
    %v4757 = vpop.f32.mrf.mxu0
    %v4758 = vadd.f32 %v4628, %v4757
    %v4759 = vand.u32 %v4540, 4294901760
    %4760 = vmatmul.f32.gmra.mxu0 %v4759
    %v4761 = vpop.f32.mrf.mxu0
    %v4762 = vadd.f32 %v4636, %v4761
    %v4763 = vand.u32 %v4543, 4294901760
    %4764 = vmatmul.f32.gmra.mxu0 %v4763
    %v4765 = vpop.f32.mrf.mxu0
    %v4766 = vadd.f32 %v4644, %v4765
    %v4767 = vand.u32 %v4546, 4294901760
    %4768 = vmatmul.f32.gmra.mxu0 %v4767
    %v4769 = vpop.f32.mrf.mxu0
    %v4770 = vadd.f32 %v4652, %v4769
    %v4771 = vand.u32 %v4549, 4294901760
    %4772 = vmatmul.f32.gmra.mxu0 %v4771
    %v4773 = vpop.f32.mrf.mxu0
    %v4774 = vadd.f32 %v4660, %v4773
    %v4775 = vand.u32 %v4552, 4294901760
    %4776 = vmatmul.f32.gmra.mxu0 %v4775
    %v4777 = vpop.f32.mrf.mxu0
    %v4778 = vadd.f32 %v4668, %v4777
    %v4779 = vand.u32 %v4555, 4294901760
    %4780 = vmatmul.f32.gmra.mxu0 %v4779
    %v4781 = vpop.f32.mrf.mxu0
    %v4782 = vadd.f32 %v4676, %v4781
    %v4783 = vand.u32 %v4558, 4294901760
    %4784 = vmatmul.f32.gmra.mxu0 %v4783
    %v4785 = vpop.f32.mrf.mxu0
    %v4786 = vadd.f32 %v4684, %v4785
    %v4787 = vand.u32 %v4561, 4294901760
    %4788 = vmatmul.f32.gmra.mxu0 %v4787
    %v4789 = vpop.f32.mrf.mxu0
    %v4790 = vadd.f32 %v4692, %v4789
    %v4791 = vand.u32 %v4564, 4294901760
    %4792 = vmatmul.f32.gmra.mxu0 %v4791
    %v4793 = vpop.f32.mrf.mxu0
    %v4794 = vadd.f32 %v4700, %v4793
    %v4795 = vand.u32 %v4567, 4294901760
    %4796 = vmatmul.f32.gmra.mxu0 %v4795
    %v4797 = vpop.f32.mrf.mxu0
    %v4798 = vadd.f32 %v4708, %v4797
    %v4799 = vand.u32 %v4570, 4294901760
    %4800 = vmatmul.f32.gmra.mxu0 %v4799
    %v4801 = vpop.f32.mrf.mxu0
    %v4802 = vadd.f32 %v4716, %v4801
    %4803 = vdwg.mxu0
    %4804 = vmatpush.msra.mxu0 0.0
    %4805 = vmatpush.msra.mxu0 0.0
    %4806 = vmatpush.msra.mxu0 0.0
    %4807 = vmatpush.msra.mxu0 0.0
    %4808 = vmatpush.msra.mxu0 0.0
    %4809 = vmatpush.msra.mxu0 0.0
    %4810 = vmatpush.msra.mxu0 0.0
    %4811 = vmatpush.msra.mxu0 0.0
    %4812 = vmatpush.msra.mxu0 0.0
    %4813 = vmatpush.msra.mxu0 0.0
    %4814 = vmatpush.msra.mxu0 0.0
    %4815 = vmatpush.msra.mxu0 0.0
    %4816 = vmatpush.msra.mxu0 0.0
    %4817 = vmatpush.msra.mxu0 0.0
    %4818 = vmatpush.msra.mxu0 0.0
    %v4819 = vand.u32 %v226, 4294901760
    %v4820 = vsub.f32 %v226, %v4819
    %4821 = vmatpush.msra.mxu0 %v4820
    %v4822 = vand.u32 %v4525, 4294901760
    %v4823 = vsub.f32 %v4525, %v4822
    %4824 = vmatmul.f32.gmra.mxu0 %v4823
    %v4825 = vpop.f32.mrf.mxu0
    %v4826 = vadd.f32 %v4742, %v4825
    %v4827 = vand.u32 %v4528, 4294901760
    %v4828 = vsub.f32 %v4528, %v4827
    %4829 = vmatmul.f32.gmra.mxu0 %v4828
    %v4830 = vpop.f32.mrf.mxu0
    %v4831 = vadd.f32 %v4746, %v4830
    %v4832 = vand.u32 %v4531, 4294901760
    %v4833 = vsub.f32 %v4531, %v4832
    %4834 = vmatmul.f32.gmra.mxu0 %v4833
    %v4835 = vpop.f32.mrf.mxu0
    %v4836 = vadd.f32 %v4750, %v4835
    %v4837 = vand.u32 %v4534, 4294901760
    %v4838 = vsub.f32 %v4534, %v4837
    %4839 = vmatmul.f32.gmra.mxu0 %v4838
    %v4840 = vpop.f32.mrf.mxu0
    %v4841 = vadd.f32 %v4754, %v4840
    %v4842 = vand.u32 %v4537, 4294901760
    %v4843 = vsub.f32 %v4537, %v4842
    %4844 = vmatmul.f32.gmra.mxu0 %v4843
    %v4845 = vpop.f32.mrf.mxu0
    %v4846 = vadd.f32 %v4758, %v4845
    %v4847 = vand.u32 %v4540, 4294901760
    %v4848 = vsub.f32 %v4540, %v4847
    %4849 = vmatmul.f32.gmra.mxu0 %v4848
    %v4850 = vpop.f32.mrf.mxu0
    %v4851 = vadd.f32 %v4762, %v4850
    %v4852 = vand.u32 %v4543, 4294901760
    %v4853 = vsub.f32 %v4543, %v4852
    %4854 = vmatmul.f32.gmra.mxu0 %v4853
    %v4855 = vpop.f32.mrf.mxu0
    %v4856 = vadd.f32 %v4766, %v4855
    %v4857 = vand.u32 %v4546, 4294901760
    %v4858 = vsub.f32 %v4546, %v4857
    %4859 = vmatmul.f32.gmra.mxu0 %v4858
    %v4860 = vpop.f32.mrf.mxu0
    %v4861 = vadd.f32 %v4770, %v4860
    %v4862 = vand.u32 %v4549, 4294901760
    %v4863 = vsub.f32 %v4549, %v4862
    %4864 = vmatmul.f32.gmra.mxu0 %v4863
    %v4865 = vpop.f32.mrf.mxu0
    %v4866 = vadd.f32 %v4774, %v4865
    %v4867 = vand.u32 %v4552, 4294901760
    %v4868 = vsub.f32 %v4552, %v4867
    %4869 = vmatmul.f32.gmra.mxu0 %v4868
    %v4870 = vpop.f32.mrf.mxu0
    %v4871 = vadd.f32 %v4778, %v4870
    %v4872 = vand.u32 %v4555, 4294901760
    %v4873 = vsub.f32 %v4555, %v4872
    %4874 = vmatmul.f32.gmra.mxu0 %v4873
    %v4875 = vpop.f32.mrf.mxu0
    %v4876 = vadd.f32 %v4782, %v4875
    %v4877 = vand.u32 %v4558, 4294901760
    %v4878 = vsub.f32 %v4558, %v4877
    %4879 = vmatmul.f32.gmra.mxu0 %v4878
    %v4880 = vpop.f32.mrf.mxu0
    %v4881 = vadd.f32 %v4786, %v4880
    %v4882 = vand.u32 %v4561, 4294901760
    %v4883 = vsub.f32 %v4561, %v4882
    %4884 = vmatmul.f32.gmra.mxu0 %v4883
    %v4885 = vpop.f32.mrf.mxu0
    %v4886 = vadd.f32 %v4790, %v4885
    %v4887 = vand.u32 %v4564, 4294901760
    %v4888 = vsub.f32 %v4564, %v4887
    %4889 = vmatmul.f32.gmra.mxu0 %v4888
    %v4890 = vpop.f32.mrf.mxu0
    %v4891 = vadd.f32 %v4794, %v4890
    %v4892 = vand.u32 %v4567, 4294901760
    %v4893 = vsub.f32 %v4567, %v4892
    %4894 = vmatmul.f32.gmra.mxu0 %v4893
    %v4895 = vpop.f32.mrf.mxu0
    %v4896 = vadd.f32 %v4798, %v4895
    %v4897 = vand.u32 %v4570, 4294901760
    %v4898 = vsub.f32 %v4570, %v4897
    %4899 = vmatmul.f32.gmra.mxu0 %v4898
    %v4900 = vpop.f32.mrf.mxu0
    %v4901 = vadd.f32 %v4802, %v4900
    %4902 = vdwg.mxu0
    %4903 = vmatpush.msra.mxu0 0.0
    %4904 = vmatpush.msra.mxu0 0.0
    %4905 = vmatpush.msra.mxu0 0.0
    %4906 = vmatpush.msra.mxu0 0.0
    %4907 = vmatpush.msra.mxu0 0.0
    %4908 = vmatpush.msra.mxu0 0.0
    %4909 = vmatpush.msra.mxu0 0.0
    %4910 = vmatpush.msra.mxu0 0.0
    %4911 = vmatpush.msra.mxu0 0.0
    %4912 = vmatpush.msra.mxu0 0.0
    %4913 = vmatpush.msra.mxu0 0.0
    %4914 = vmatpush.msra.mxu0 0.0
    %4915 = vmatpush.msra.mxu0 0.0
    %4916 = vmatpush.msra.mxu0 0.0
    %4917 = vmatpush.msra.mxu0 0.0
    %v4918 = vand.u32 %v226, 4294901760
    %4919 = vmatpush.msra.mxu0 %v4918
    %v4920 = vand.u32 %v4525, 4294901760
    %v4921 = vsub.f32 %v4525, %v4920
    %v4922 = vand.u32 %v4921, 4294901760
    %4923 = vmatmul.f32.gmra.mxu0 %v4922
    %v4924 = vpop.f32.mrf.mxu0
    %v4925 = vadd.f32 %v4826, %v4924
    %v4926 = vand.u32 %v4528, 4294901760
    %v4927 = vsub.f32 %v4528, %v4926
    %v4928 = vand.u32 %v4927, 4294901760
    %4929 = vmatmul.f32.gmra.mxu0 %v4928
    %v4930 = vpop.f32.mrf.mxu0
    %v4931 = vadd.f32 %v4831, %v4930
    %v4932 = vand.u32 %v4531, 4294901760
    %v4933 = vsub.f32 %v4531, %v4932
    %v4934 = vand.u32 %v4933, 4294901760
    %4935 = vmatmul.f32.gmra.mxu0 %v4934
    %v4936 = vpop.f32.mrf.mxu0
    %v4937 = vadd.f32 %v4836, %v4936
    %v4938 = vand.u32 %v4534, 4294901760
    %v4939 = vsub.f32 %v4534, %v4938
    %v4940 = vand.u32 %v4939, 4294901760
    %4941 = vmatmul.f32.gmra.mxu0 %v4940
    %v4942 = vpop.f32.mrf.mxu0
    %v4943 = vadd.f32 %v4841, %v4942
    %v4944 = vand.u32 %v4537, 4294901760
    %v4945 = vsub.f32 %v4537, %v4944
    %v4946 = vand.u32 %v4945, 4294901760
    %4947 = vmatmul.f32.gmra.mxu0 %v4946
    %v4948 = vpop.f32.mrf.mxu0
    %v4949 = vadd.f32 %v4846, %v4948
    %v4950 = vand.u32 %v4540, 4294901760
    %v4951 = vsub.f32 %v4540, %v4950
    %v4952 = vand.u32 %v4951, 4294901760
    %4953 = vmatmul.f32.gmra.mxu0 %v4952
    %v4954 = vpop.f32.mrf.mxu0
    %v4955 = vadd.f32 %v4851, %v4954
    %v4956 = vand.u32 %v4543, 4294901760
    %v4957 = vsub.f32 %v4543, %v4956
    %v4958 = vand.u32 %v4957, 4294901760
    %4959 = vmatmul.f32.gmra.mxu0 %v4958
    %v4960 = vpop.f32.mrf.mxu0
    %v4961 = vadd.f32 %v4856, %v4960
    %v4962 = vand.u32 %v4546, 4294901760
    %v4963 = vsub.f32 %v4546, %v4962
    %v4964 = vand.u32 %v4963, 4294901760
    %4965 = vmatmul.f32.gmra.mxu0 %v4964
    %v4966 = vpop.f32.mrf.mxu0
    %v4967 = vadd.f32 %v4861, %v4966
    %v4968 = vand.u32 %v4549, 4294901760
    %v4969 = vsub.f32 %v4549, %v4968
    %v4970 = vand.u32 %v4969, 4294901760
    %4971 = vmatmul.f32.gmra.mxu0 %v4970
    %v4972 = vpop.f32.mrf.mxu0
    %v4973 = vadd.f32 %v4866, %v4972
    %v4974 = vand.u32 %v4552, 4294901760
    %v4975 = vsub.f32 %v4552, %v4974
    %v4976 = vand.u32 %v4975, 4294901760
    %4977 = vmatmul.f32.gmra.mxu0 %v4976
    %v4978 = vpop.f32.mrf.mxu0
    %v4979 = vadd.f32 %v4871, %v4978
    %v4980 = vand.u32 %v4555, 4294901760
    %v4981 = vsub.f32 %v4555, %v4980
    %v4982 = vand.u32 %v4981, 4294901760
    %4983 = vmatmul.f32.gmra.mxu0 %v4982
    %v4984 = vpop.f32.mrf.mxu0
    %v4985 = vadd.f32 %v4876, %v4984
    %v4986 = vand.u32 %v4558, 4294901760
    %v4987 = vsub.f32 %v4558, %v4986
    %v4988 = vand.u32 %v4987, 4294901760
    %4989 = vmatmul.f32.gmra.mxu0 %v4988
    %v4990 = vpop.f32.mrf.mxu0
    %v4991 = vadd.f32 %v4881, %v4990
    %v4992 = vand.u32 %v4561, 4294901760
    %v4993 = vsub.f32 %v4561, %v4992
    %v4994 = vand.u32 %v4993, 4294901760
    %4995 = vmatmul.f32.gmra.mxu0 %v4994
    %v4996 = vpop.f32.mrf.mxu0
    %v4997 = vadd.f32 %v4886, %v4996
    %v4998 = vand.u32 %v4564, 4294901760
    %v4999 = vsub.f32 %v4564, %v4998
    %v5000 = vand.u32 %v4999, 4294901760
    %5001 = vmatmul.f32.gmra.mxu0 %v5000
    %v5002 = vpop.f32.mrf.mxu0
    %v5003 = vadd.f32 %v4891, %v5002
    %v5004 = vand.u32 %v4567, 4294901760
    %v5005 = vsub.f32 %v4567, %v5004
    %v5006 = vand.u32 %v5005, 4294901760
    %5007 = vmatmul.f32.gmra.mxu0 %v5006
    %v5008 = vpop.f32.mrf.mxu0
    %v5009 = vadd.f32 %v4896, %v5008
    %v5010 = vand.u32 %v4570, 4294901760
    %v5011 = vsub.f32 %v4570, %v5010
    %v5012 = vand.u32 %v5011, 4294901760
    %5013 = vmatmul.f32.gmra.mxu0 %v5012
    %v5014 = vpop.f32.mrf.mxu0
    %v5015 = vadd.f32 %v4901, %v5014
    %5016 = vdwg.mxu0
    %5017 = vmatpush.msra.mxu0 0.0
    %5018 = vmatpush.msra.mxu0 0.0
    %5019 = vmatpush.msra.mxu0 0.0
    %5020 = vmatpush.msra.mxu0 0.0
    %5021 = vmatpush.msra.mxu0 0.0
    %5022 = vmatpush.msra.mxu0 0.0
    %5023 = vmatpush.msra.mxu0 0.0
    %5024 = vmatpush.msra.mxu0 0.0
    %5025 = vmatpush.msra.mxu0 0.0
    %5026 = vmatpush.msra.mxu0 0.0
    %5027 = vmatpush.msra.mxu0 0.0
    %5028 = vmatpush.msra.mxu0 0.0
    %5029 = vmatpush.msra.mxu0 0.0
    %5030 = vmatpush.msra.mxu0 0.0
    %5031 = vmatpush.msra.mxu0 0.0
    %v5032 = vand.u32 %v226, 4294901760
    %v5033 = vsub.f32 %v226, %v5032
    %v5034 = vand.u32 %v5033, 4294901760
    %5035 = vmatpush.msra.mxu0 %v5034
    %v5036 = vand.u32 %v4525, 4294901760
    %5037 = vmatmul.f32.gmra.mxu0 %v5036
    %v5038 = vpop.f32.mrf.mxu0
    %v5039 = vadd.f32 %v4925, %v5038
    %v5040 = vand.u32 %v4528, 4294901760
    %5041 = vmatmul.f32.gmra.mxu0 %v5040
    %v5042 = vpop.f32.mrf.mxu0
    %v5043 = vadd.f32 %v4931, %v5042
    %v5044 = vand.u32 %v4531, 4294901760
    %5045 = vmatmul.f32.gmra.mxu0 %v5044
    %v5046 = vpop.f32.mrf.mxu0
    %v5047 = vadd.f32 %v4937, %v5046
    %v5048 = vand.u32 %v4534, 4294901760
    %5049 = vmatmul.f32.gmra.mxu0 %v5048
    %v5050 = vpop.f32.mrf.mxu0
    %v5051 = vadd.f32 %v4943, %v5050
    %v5052 = vand.u32 %v4537, 4294901760
    %5053 = vmatmul.f32.gmra.mxu0 %v5052
    %v5054 = vpop.f32.mrf.mxu0
    %v5055 = vadd.f32 %v4949, %v5054
    %v5056 = vand.u32 %v4540, 4294901760
    %5057 = vmatmul.f32.gmra.mxu0 %v5056
    %v5058 = vpop.f32.mrf.mxu0
    %v5059 = vadd.f32 %v4955, %v5058
    %v5060 = vand.u32 %v4543, 4294901760
    %5061 = vmatmul.f32.gmra.mxu0 %v5060
    %v5062 = vpop.f32.mrf.mxu0
    %v5063 = vadd.f32 %v4961, %v5062
    %v5064 = vand.u32 %v4546, 4294901760
    %5065 = vmatmul.f32.gmra.mxu0 %v5064
    %v5066 = vpop.f32.mrf.mxu0
    %v5067 = vadd.f32 %v4967, %v5066
    %v5068 = vand.u32 %v4549, 4294901760
    %5069 = vmatmul.f32.gmra.mxu0 %v5068
    %v5070 = vpop.f32.mrf.mxu0
    %v5071 = vadd.f32 %v4973, %v5070
    %v5072 = vand.u32 %v4552, 4294901760
    %5073 = vmatmul.f32.gmra.mxu0 %v5072
    %v5074 = vpop.f32.mrf.mxu0
    %v5075 = vadd.f32 %v4979, %v5074
    %v5076 = vand.u32 %v4555, 4294901760
    %5077 = vmatmul.f32.gmra.mxu0 %v5076
    %v5078 = vpop.f32.mrf.mxu0
    %v5079 = vadd.f32 %v4985, %v5078
    %v5080 = vand.u32 %v4558, 4294901760
    %5081 = vmatmul.f32.gmra.mxu0 %v5080
    %v5082 = vpop.f32.mrf.mxu0
    %v5083 = vadd.f32 %v4991, %v5082
    %v5084 = vand.u32 %v4561, 4294901760
    %5085 = vmatmul.f32.gmra.mxu0 %v5084
    %v5086 = vpop.f32.mrf.mxu0
    %v5087 = vadd.f32 %v4997, %v5086
    %v5088 = vand.u32 %v4564, 4294901760
    %5089 = vmatmul.f32.gmra.mxu0 %v5088
    %v5090 = vpop.f32.mrf.mxu0
    %v5091 = vadd.f32 %v5003, %v5090
    %v5092 = vand.u32 %v4567, 4294901760
    %5093 = vmatmul.f32.gmra.mxu0 %v5092
    %v5094 = vpop.f32.mrf.mxu0
    %v5095 = vadd.f32 %v5009, %v5094
    %v5096 = vand.u32 %v4570, 4294901760
    %5097 = vmatmul.f32.gmra.mxu0 %v5096
    %v5098 = vpop.f32.mrf.mxu0
    %v5099 = vadd.f32 %v5015, %v5098
    %5100 = vdwg.mxu0
    %5101 = vmatpush.msra.mxu0 0.0
    %5102 = vmatpush.msra.mxu0 0.0
    %5103 = vmatpush.msra.mxu0 0.0
    %5104 = vmatpush.msra.mxu0 0.0
    %5105 = vmatpush.msra.mxu0 0.0
    %5106 = vmatpush.msra.mxu0 0.0
    %5107 = vmatpush.msra.mxu0 0.0
    %5108 = vmatpush.msra.mxu0 0.0
    %5109 = vmatpush.msra.mxu0 0.0
    %5110 = vmatpush.msra.mxu0 0.0
    %5111 = vmatpush.msra.mxu0 0.0
    %5112 = vmatpush.msra.mxu0 0.0
    %5113 = vmatpush.msra.mxu0 0.0
    %5114 = vmatpush.msra.mxu0 0.0
    %5115 = vmatpush.msra.mxu0 0.0
    %v5116 = vand.u32 %v226, 4294901760
    %5117 = vmatpush.msra.mxu0 %v5116
    %v5118 = vand.u32 %v4525, 4294901760
    %5119 = vmatmul.f32.gmra.mxu0 %v5118
    %v5120 = vpop.f32.mrf.mxu0
    %v5121 = vadd.f32 %v5039, %v5120
    %v5122 = vand.u32 %v4528, 4294901760
    %5123 = vmatmul.f32.gmra.mxu0 %v5122
    %v5124 = vpop.f32.mrf.mxu0
    %v5125 = vadd.f32 %v5043, %v5124
    %v5126 = vand.u32 %v4531, 4294901760
    %5127 = vmatmul.f32.gmra.mxu0 %v5126
    %v5128 = vpop.f32.mrf.mxu0
    %v5129 = vadd.f32 %v5047, %v5128
    %v5130 = vand.u32 %v4534, 4294901760
    %5131 = vmatmul.f32.gmra.mxu0 %v5130
    %v5132 = vpop.f32.mrf.mxu0
    %v5133 = vadd.f32 %v5051, %v5132
    %v5134 = vand.u32 %v4537, 4294901760
    %5135 = vmatmul.f32.gmra.mxu0 %v5134
    %v5136 = vpop.f32.mrf.mxu0
    %v5137 = vadd.f32 %v5055, %v5136
    %v5138 = vand.u32 %v4540, 4294901760
    %5139 = vmatmul.f32.gmra.mxu0 %v5138
    %v5140 = vpop.f32.mrf.mxu0
    %v5141 = vadd.f32 %v5059, %v5140
    %v5142 = vand.u32 %v4543, 4294901760
    %5143 = vmatmul.f32.gmra.mxu0 %v5142
    %v5144 = vpop.f32.mrf.mxu0
    %v5145 = vadd.f32 %v5063, %v5144
    %v5146 = vand.u32 %v4546, 4294901760
    %5147 = vmatmul.f32.gmra.mxu0 %v5146
    %v5148 = vpop.f32.mrf.mxu0
    %v5149 = vadd.f32 %v5067, %v5148
    %v5150 = vand.u32 %v4549, 4294901760
    %5151 = vmatmul.f32.gmra.mxu0 %v5150
    %v5152 = vpop.f32.mrf.mxu0
    %v5153 = vadd.f32 %v5071, %v5152
    %v5154 = vand.u32 %v4552, 4294901760
    %5155 = vmatmul.f32.gmra.mxu0 %v5154
    %v5156 = vpop.f32.mrf.mxu0
    %v5157 = vadd.f32 %v5075, %v5156
    %v5158 = vand.u32 %v4555, 4294901760
    %5159 = vmatmul.f32.gmra.mxu0 %v5158
    %v5160 = vpop.f32.mrf.mxu0
    %v5161 = vadd.f32 %v5079, %v5160
    %v5162 = vand.u32 %v4558, 4294901760
    %5163 = vmatmul.f32.gmra.mxu0 %v5162
    %v5164 = vpop.f32.mrf.mxu0
    %v5165 = vadd.f32 %v5083, %v5164
    %v5166 = vand.u32 %v4561, 4294901760
    %5167 = vmatmul.f32.gmra.mxu0 %v5166
    %v5168 = vpop.f32.mrf.mxu0
    %v5169 = vadd.f32 %v5087, %v5168
    %v5170 = vand.u32 %v4564, 4294901760
    %5171 = vmatmul.f32.gmra.mxu0 %v5170
    %v5172 = vpop.f32.mrf.mxu0
    %v5173 = vadd.f32 %v5091, %v5172
    %v5174 = vand.u32 %v4567, 4294901760
    %5175 = vmatmul.f32.gmra.mxu0 %v5174
    %v5176 = vpop.f32.mrf.mxu0
    %v5177 = vadd.f32 %v5095, %v5176
    %v5178 = vand.u32 %v4570, 4294901760
    %5179 = vmatmul.f32.gmra.mxu0 %v5178
    %v5180 = vpop.f32.mrf.mxu0
    %v5181 = vadd.f32 %v5099, %v5180
    %5182 = vdwg.mxu0
    %s5183 = scalar_lea.vmem [#allocation6], 768
    %5184 = vst [vmem:[%s5183] sm:$0xff] %v5121
    %5185 = vst [vmem:[%s5183 + $0x8] sm:$0xff] %v5125
    %5186 = vst [vmem:[%s5183 + $0x10] sm:$0xff] %v5129
    %5187 = vst [vmem:[%s5183 + $0x18] sm:$0xff] %v5133
    %5188 = vst [vmem:[%s5183 + $0x20] sm:$0xff] %v5137
    %5189 = vst [vmem:[%s5183 + $0x28] sm:$0xff] %v5141
    %5190 = vst [vmem:[%s5183 + $0x30] sm:$0xff] %v5145
    %5191 = vst [vmem:[%s5183 + $0x38] sm:$0xff] %v5149
    %5192 = vst [vmem:[%s5183 + $0x40] sm:$0xff] %v5153
    %5193 = vst [vmem:[%s5183 + $0x48] sm:$0xff] %v5157
    %5194 = vst [vmem:[%s5183 + $0x50] sm:$0xff] %v5161
    %5195 = vst [vmem:[%s5183 + $0x58] sm:$0xff] %v5165
    %5196 = vst [vmem:[%s5183 + $0x60] sm:$0xff] %v5169
    %5197 = vst [vmem:[%s5183 + $0x68] sm:$0xff] %v5173
    %5198 = vst [vmem:[%s5183 + $0x70] sm:$0xff] %v5177
    %5199 = vst [vmem:[%s5183 + $0x78] sm:$0xff] %v5181
    %s5200 = scalar_lea.vmem [#allocation2], 56
    %v5201 = vld [vmem:[%s5200] sm:$0xff]
    %5202 = vxpose.xlu0.b32.start [1/16] %v5201, 128
    %5203 = vxpose.xlu0.b32.cont [2/16] 0.0, 128
    %5204 = vxpose.xlu0.b32.cont [3/16] 0.0, 128
    %5205 = vxpose.xlu0.b32.cont [4/16] 0.0, 128
    %5206 = vxpose.xlu0.b32.cont [5/16] 0.0, 128
    %5207 = vxpose.xlu0.b32.cont [6/16] 0.0, 128
    %5208 = vxpose.xlu0.b32.cont [7/16] 0.0, 128
    %5209 = vxpose.xlu0.b32.cont [8/16] 0.0, 128
    %5210 = vxpose.xlu0.b32.cont [9/16] 0.0, 128
    %5211 = vxpose.xlu0.b32.cont [10/16] 0.0, 128
    %5212 = vxpose.xlu0.b32.cont [11/16] 0.0, 128
    %5213 = vxpose.xlu0.b32.cont [12/16] 0.0, 128
    %5214 = vxpose.xlu0.b32.cont [13/16] 0.0, 128
    %5215 = vxpose.xlu0.b32.cont [14/16] 0.0, 128
    %5216 = vxpose.xlu0.b32.cont [15/16] 0.0, 128
    %5217 = vxpose.xlu0.b32.end [16/16] 0.0, 128
    %v5218 = vpop.trf.xlu0
    %v5219 = vpop.trf.xlu0
    %v5220 = vpop.trf.xlu0
    %v5221 = vpop.trf.xlu0
    %v5222 = vpop.trf.xlu0
    %v5223 = vpop.trf.xlu0
    %v5224 = vpop.trf.xlu0
    %v5225 = vpop.trf.xlu0
    %v5226 = vpop.trf.xlu0
    %v5227 = vpop.trf.xlu0
    %v5228 = vpop.trf.xlu0
    %v5229 = vpop.trf.xlu0
    %v5230 = vpop.trf.xlu0
    %v5231 = vpop.trf.xlu0
    %v5232 = vpop.trf.xlu0
    %v5233 = vpop.trf.xlu0
    %v5235 = vsel %vm264, %v5218, 0
    %v5238 = vsel %vm264, %v5219, 0
    %v5241 = vsel %vm264, %v5220, 0
    %v5244 = vsel %vm264, %v5221, 0
    %v5247 = vsel %vm264, %v5222, 0
    %v5250 = vsel %vm264, %v5223, 0
    %v5253 = vsel %vm264, %v5224, 0
    %v5256 = vsel %vm264, %v5225, 0
    %v5259 = vsel %vm264, %v5226, 0
    %v5262 = vsel %vm264, %v5227, 0
    %v5265 = vsel %vm264, %v5228, 0
    %v5268 = vsel %vm264, %v5229, 0
    %v5271 = vsel %vm264, %v5230, 0
    %v5274 = vsel %vm264, %v5231, 0
    %v5277 = vsel %vm264, %v5232, 0
    %v5280 = vsel %vm264, %v5233, 0
    %5282 = vmatpush.msra.mxu0 0.0
    %5283 = vmatpush.msra.mxu0 0.0
    %5284 = vmatpush.msra.mxu0 0.0
    %5285 = vmatpush.msra.mxu0 0.0
    %5286 = vmatpush.msra.mxu0 0.0
    %5287 = vmatpush.msra.mxu0 0.0
    %5288 = vmatpush.msra.mxu0 0.0
    %5289 = vmatpush.msra.mxu0 0.0
    %5290 = vmatpush.msra.mxu0 0.0
    %5291 = vmatpush.msra.mxu0 0.0
    %5292 = vmatpush.msra.mxu0 0.0
    %5293 = vmatpush.msra.mxu0 0.0
    %5294 = vmatpush.msra.mxu0 0.0
    %5295 = vmatpush.msra.mxu0 0.0
    %5296 = vmatpush.msra.mxu0 0.0
    %v5297 = vand.u32 %v226, 4294901760
    %5298 = vmatpush.msra.mxu0 %v5297
    %v5299 = vand.u32 %v5235, 4294901760
    %v5300 = vsub.f32 %v5235, %v5299
    %v5301 = vand.u32 %v5300, 4294901760
    %v5302 = vsub.f32 %v5300, %v5301
    %v5303 = vand.u32 %v5302, 4294901760
    %5304 = vmatmul.f32.gmra.mxu0 %v5303
    %v5305 = vpop.f32.mrf.mxu0
    %v5306 = vadd.f32 %v230, %v5305
    %v5307 = vand.u32 %v5238, 4294901760
    %v5308 = vsub.f32 %v5238, %v5307
    %v5309 = vand.u32 %v5308, 4294901760
    %v5310 = vsub.f32 %v5308, %v5309
    %v5311 = vand.u32 %v5310, 4294901760
    %5312 = vmatmul.f32.gmra.mxu0 %v5311
    %v5313 = vpop.f32.mrf.mxu0
    %v5314 = vadd.f32 %v230, %v5313
    %v5315 = vand.u32 %v5241, 4294901760
    %v5316 = vsub.f32 %v5241, %v5315
    %v5317 = vand.u32 %v5316, 4294901760
    %v5318 = vsub.f32 %v5316, %v5317
    %v5319 = vand.u32 %v5318, 4294901760
    %5320 = vmatmul.f32.gmra.mxu0 %v5319
    %v5321 = vpop.f32.mrf.mxu0
    %v5322 = vadd.f32 %v230, %v5321
    %v5323 = vand.u32 %v5244, 4294901760
    %v5324 = vsub.f32 %v5244, %v5323
    %v5325 = vand.u32 %v5324, 4294901760
    %v5326 = vsub.f32 %v5324, %v5325
    %v5327 = vand.u32 %v5326, 4294901760
    %5328 = vmatmul.f32.gmra.mxu0 %v5327
    %v5329 = vpop.f32.mrf.mxu0
    %v5330 = vadd.f32 %v230, %v5329
    %v5331 = vand.u32 %v5247, 4294901760
    %v5332 = vsub.f32 %v5247, %v5331
    %v5333 = vand.u32 %v5332, 4294901760
    %v5334 = vsub.f32 %v5332, %v5333
    %v5335 = vand.u32 %v5334, 4294901760
    %5336 = vmatmul.f32.gmra.mxu0 %v5335
    %v5337 = vpop.f32.mrf.mxu0
    %v5338 = vadd.f32 %v230, %v5337
    %v5339 = vand.u32 %v5250, 4294901760
    %v5340 = vsub.f32 %v5250, %v5339
    %v5341 = vand.u32 %v5340, 4294901760
    %v5342 = vsub.f32 %v5340, %v5341
    %v5343 = vand.u32 %v5342, 4294901760
    %5344 = vmatmul.f32.gmra.mxu0 %v5343
    %v5345 = vpop.f32.mrf.mxu0
    %v5346 = vadd.f32 %v230, %v5345
    %v5347 = vand.u32 %v5253, 4294901760
    %v5348 = vsub.f32 %v5253, %v5347
    %v5349 = vand.u32 %v5348, 4294901760
    %v5350 = vsub.f32 %v5348, %v5349
    %v5351 = vand.u32 %v5350, 4294901760
    %5352 = vmatmul.f32.gmra.mxu0 %v5351
    %v5353 = vpop.f32.mrf.mxu0
    %v5354 = vadd.f32 %v230, %v5353
    %v5355 = vand.u32 %v5256, 4294901760
    %v5356 = vsub.f32 %v5256, %v5355
    %v5357 = vand.u32 %v5356, 4294901760
    %v5358 = vsub.f32 %v5356, %v5357
    %v5359 = vand.u32 %v5358, 4294901760
    %5360 = vmatmul.f32.gmra.mxu0 %v5359
    %v5361 = vpop.f32.mrf.mxu0
    %v5362 = vadd.f32 %v230, %v5361
    %v5363 = vand.u32 %v5259, 4294901760
    %v5364 = vsub.f32 %v5259, %v5363
    %v5365 = vand.u32 %v5364, 4294901760
    %v5366 = vsub.f32 %v5364, %v5365
    %v5367 = vand.u32 %v5366, 4294901760
    %5368 = vmatmul.f32.gmra.mxu0 %v5367
    %v5369 = vpop.f32.mrf.mxu0
    %v5370 = vadd.f32 %v230, %v5369
    %v5371 = vand.u32 %v5262, 4294901760
    %v5372 = vsub.f32 %v5262, %v5371
    %v5373 = vand.u32 %v5372, 4294901760
    %v5374 = vsub.f32 %v5372, %v5373
    %v5375 = vand.u32 %v5374, 4294901760
    %5376 = vmatmul.f32.gmra.mxu0 %v5375
    %v5377 = vpop.f32.mrf.mxu0
    %v5378 = vadd.f32 %v230, %v5377
    %v5379 = vand.u32 %v5265, 4294901760
    %v5380 = vsub.f32 %v5265, %v5379
    %v5381 = vand.u32 %v5380, 4294901760
    %v5382 = vsub.f32 %v5380, %v5381
    %v5383 = vand.u32 %v5382, 4294901760
    %5384 = vmatmul.f32.gmra.mxu0 %v5383
    %v5385 = vpop.f32.mrf.mxu0
    %v5386 = vadd.f32 %v230, %v5385
    %v5387 = vand.u32 %v5268, 4294901760
    %v5388 = vsub.f32 %v5268, %v5387
    %v5389 = vand.u32 %v5388, 4294901760
    %v5390 = vsub.f32 %v5388, %v5389
    %v5391 = vand.u32 %v5390, 4294901760
    %5392 = vmatmul.f32.gmra.mxu0 %v5391
    %v5393 = vpop.f32.mrf.mxu0
    %v5394 = vadd.f32 %v230, %v5393
    %v5395 = vand.u32 %v5271, 4294901760
    %v5396 = vsub.f32 %v5271, %v5395
    %v5397 = vand.u32 %v5396, 4294901760
    %v5398 = vsub.f32 %v5396, %v5397
    %v5399 = vand.u32 %v5398, 4294901760
    %5400 = vmatmul.f32.gmra.mxu0 %v5399
    %v5401 = vpop.f32.mrf.mxu0
    %v5402 = vadd.f32 %v230, %v5401
    %v5403 = vand.u32 %v5274, 4294901760
    %v5404 = vsub.f32 %v5274, %v5403
    %v5405 = vand.u32 %v5404, 4294901760
    %v5406 = vsub.f32 %v5404, %v5405
    %v5407 = vand.u32 %v5406, 4294901760
    %5408 = vmatmul.f32.gmra.mxu0 %v5407
    %v5409 = vpop.f32.mrf.mxu0
    %v5410 = vadd.f32 %v230, %v5409
    %v5411 = vand.u32 %v5277, 4294901760
    %v5412 = vsub.f32 %v5277, %v5411
    %v5413 = vand.u32 %v5412, 4294901760
    %v5414 = vsub.f32 %v5412, %v5413
    %v5415 = vand.u32 %v5414, 4294901760
    %5416 = vmatmul.f32.gmra.mxu0 %v5415
    %v5417 = vpop.f32.mrf.mxu0
    %v5418 = vadd.f32 %v230, %v5417
    %v5419 = vand.u32 %v5280, 4294901760
    %v5420 = vsub.f32 %v5280, %v5419
    %v5421 = vand.u32 %v5420, 4294901760
    %v5422 = vsub.f32 %v5420, %v5421
    %v5423 = vand.u32 %v5422, 4294901760
    %5424 = vmatmul.f32.gmra.mxu0 %v5423
    %v5425 = vpop.f32.mrf.mxu0
    %v5426 = vadd.f32 %v230, %v5425
    %5427 = vdwg.mxu0
    %5428 = vmatpush.msra.mxu0 0.0
    %5429 = vmatpush.msra.mxu0 0.0
    %5430 = vmatpush.msra.mxu0 0.0
    %5431 = vmatpush.msra.mxu0 0.0
    %5432 = vmatpush.msra.mxu0 0.0
    %5433 = vmatpush.msra.mxu0 0.0
    %5434 = vmatpush.msra.mxu0 0.0
    %5435 = vmatpush.msra.mxu0 0.0
    %5436 = vmatpush.msra.mxu0 0.0
    %5437 = vmatpush.msra.mxu0 0.0
    %5438 = vmatpush.msra.mxu0 0.0
    %5439 = vmatpush.msra.mxu0 0.0
    %5440 = vmatpush.msra.mxu0 0.0
    %5441 = vmatpush.msra.mxu0 0.0
    %5442 = vmatpush.msra.mxu0 0.0
    %v5443 = vand.u32 %v226, 4294901760
    %v5444 = vsub.f32 %v226, %v5443
    %v5445 = vand.u32 %v5444, 4294901760
    %v5446 = vsub.f32 %v5444, %v5445
    %v5447 = vand.u32 %v5446, 4294901760
    %5448 = vmatpush.msra.mxu0 %v5447
    %v5449 = vand.u32 %v5235, 4294901760
    %5450 = vmatmul.f32.gmra.mxu0 %v5449
    %v5451 = vpop.f32.mrf.mxu0
    %v5452 = vadd.f32 %v5306, %v5451
    %v5453 = vand.u32 %v5238, 4294901760
    %5454 = vmatmul.f32.gmra.mxu0 %v5453
    %v5455 = vpop.f32.mrf.mxu0
    %v5456 = vadd.f32 %v5314, %v5455
    %v5457 = vand.u32 %v5241, 4294901760
    %5458 = vmatmul.f32.gmra.mxu0 %v5457
    %v5459 = vpop.f32.mrf.mxu0
    %v5460 = vadd.f32 %v5322, %v5459
    %v5461 = vand.u32 %v5244, 4294901760
    %5462 = vmatmul.f32.gmra.mxu0 %v5461
    %v5463 = vpop.f32.mrf.mxu0
    %v5464 = vadd.f32 %v5330, %v5463
    %v5465 = vand.u32 %v5247, 4294901760
    %5466 = vmatmul.f32.gmra.mxu0 %v5465
    %v5467 = vpop.f32.mrf.mxu0
    %v5468 = vadd.f32 %v5338, %v5467
    %v5469 = vand.u32 %v5250, 4294901760
    %5470 = vmatmul.f32.gmra.mxu0 %v5469
    %v5471 = vpop.f32.mrf.mxu0
    %v5472 = vadd.f32 %v5346, %v5471
    %v5473 = vand.u32 %v5253, 4294901760
    %5474 = vmatmul.f32.gmra.mxu0 %v5473
    %v5475 = vpop.f32.mrf.mxu0
    %v5476 = vadd.f32 %v5354, %v5475
    %v5477 = vand.u32 %v5256, 4294901760
    %5478 = vmatmul.f32.gmra.mxu0 %v5477
    %v5479 = vpop.f32.mrf.mxu0
    %v5480 = vadd.f32 %v5362, %v5479
    %v5481 = vand.u32 %v5259, 4294901760
    %5482 = vmatmul.f32.gmra.mxu0 %v5481
    %v5483 = vpop.f32.mrf.mxu0
    %v5484 = vadd.f32 %v5370, %v5483
    %v5485 = vand.u32 %v5262, 4294901760
    %5486 = vmatmul.f32.gmra.mxu0 %v5485
    %v5487 = vpop.f32.mrf.mxu0
    %v5488 = vadd.f32 %v5378, %v5487
    %v5489 = vand.u32 %v5265, 4294901760
    %5490 = vmatmul.f32.gmra.mxu0 %v5489
    %v5491 = vpop.f32.mrf.mxu0
    %v5492 = vadd.f32 %v5386, %v5491
    %v5493 = vand.u32 %v5268, 4294901760
    %5494 = vmatmul.f32.gmra.mxu0 %v5493
    %v5495 = vpop.f32.mrf.mxu0
    %v5496 = vadd.f32 %v5394, %v5495
    %v5497 = vand.u32 %v5271, 4294901760
    %5498 = vmatmul.f32.gmra.mxu0 %v5497
    %v5499 = vpop.f32.mrf.mxu0
    %v5500 = vadd.f32 %v5402, %v5499
    %v5501 = vand.u32 %v5274, 4294901760
    %5502 = vmatmul.f32.gmra.mxu0 %v5501
    %v5503 = vpop.f32.mrf.mxu0
    %v5504 = vadd.f32 %v5410, %v5503
    %v5505 = vand.u32 %v5277, 4294901760
    %5506 = vmatmul.f32.gmra.mxu0 %v5505
    %v5507 = vpop.f32.mrf.mxu0
    %v5508 = vadd.f32 %v5418, %v5507
    %v5509 = vand.u32 %v5280, 4294901760
    %5510 = vmatmul.f32.gmra.mxu0 %v5509
    %v5511 = vpop.f32.mrf.mxu0
    %v5512 = vadd.f32 %v5426, %v5511
    %5513 = vdwg.mxu0
    %5514 = vmatpush.msra.mxu0 0.0
    %5515 = vmatpush.msra.mxu0 0.0
    %5516 = vmatpush.msra.mxu0 0.0
    %5517 = vmatpush.msra.mxu0 0.0
    %5518 = vmatpush.msra.mxu0 0.0
    %5519 = vmatpush.msra.mxu0 0.0
    %5520 = vmatpush.msra.mxu0 0.0
    %5521 = vmatpush.msra.mxu0 0.0
    %5522 = vmatpush.msra.mxu0 0.0
    %5523 = vmatpush.msra.mxu0 0.0
    %5524 = vmatpush.msra.mxu0 0.0
    %5525 = vmatpush.msra.mxu0 0.0
    %5526 = vmatpush.msra.mxu0 0.0
    %5527 = vmatpush.msra.mxu0 0.0
    %5528 = vmatpush.msra.mxu0 0.0
    %v5529 = vand.u32 %v226, 4294901760
    %v5530 = vsub.f32 %v226, %v5529
    %5531 = vmatpush.msra.mxu0 %v5530
    %v5532 = vand.u32 %v5235, 4294901760
    %v5533 = vsub.f32 %v5235, %v5532
    %5534 = vmatmul.f32.gmra.mxu0 %v5533
    %v5535 = vpop.f32.mrf.mxu0
    %v5536 = vadd.f32 %v5452, %v5535
    %v5537 = vand.u32 %v5238, 4294901760
    %v5538 = vsub.f32 %v5238, %v5537
    %5539 = vmatmul.f32.gmra.mxu0 %v5538
    %v5540 = vpop.f32.mrf.mxu0
    %v5541 = vadd.f32 %v5456, %v5540
    %v5542 = vand.u32 %v5241, 4294901760
    %v5543 = vsub.f32 %v5241, %v5542
    %5544 = vmatmul.f32.gmra.mxu0 %v5543
    %v5545 = vpop.f32.mrf.mxu0
    %v5546 = vadd.f32 %v5460, %v5545
    %v5547 = vand.u32 %v5244, 4294901760
    %v5548 = vsub.f32 %v5244, %v5547
    %5549 = vmatmul.f32.gmra.mxu0 %v5548
    %v5550 = vpop.f32.mrf.mxu0
    %v5551 = vadd.f32 %v5464, %v5550
    %v5552 = vand.u32 %v5247, 4294901760
    %v5553 = vsub.f32 %v5247, %v5552
    %5554 = vmatmul.f32.gmra.mxu0 %v5553
    %v5555 = vpop.f32.mrf.mxu0
    %v5556 = vadd.f32 %v5468, %v5555
    %v5557 = vand.u32 %v5250, 4294901760
    %v5558 = vsub.f32 %v5250, %v5557
    %5559 = vmatmul.f32.gmra.mxu0 %v5558
    %v5560 = vpop.f32.mrf.mxu0
    %v5561 = vadd.f32 %v5472, %v5560
    %v5562 = vand.u32 %v5253, 4294901760
    %v5563 = vsub.f32 %v5253, %v5562
    %5564 = vmatmul.f32.gmra.mxu0 %v5563
    %v5565 = vpop.f32.mrf.mxu0
    %v5566 = vadd.f32 %v5476, %v5565
    %v5567 = vand.u32 %v5256, 4294901760
    %v5568 = vsub.f32 %v5256, %v5567
    %5569 = vmatmul.f32.gmra.mxu0 %v5568
    %v5570 = vpop.f32.mrf.mxu0
    %v5571 = vadd.f32 %v5480, %v5570
    %v5572 = vand.u32 %v5259, 4294901760
    %v5573 = vsub.f32 %v5259, %v5572
    %5574 = vmatmul.f32.gmra.mxu0 %v5573
    %v5575 = vpop.f32.mrf.mxu0
    %v5576 = vadd.f32 %v5484, %v5575
    %v5577 = vand.u32 %v5262, 4294901760
    %v5578 = vsub.f32 %v5262, %v5577
    %5579 = vmatmul.f32.gmra.mxu0 %v5578
    %v5580 = vpop.f32.mrf.mxu0
    %v5581 = vadd.f32 %v5488, %v5580
    %v5582 = vand.u32 %v5265, 4294901760
    %v5583 = vsub.f32 %v5265, %v5582
    %5584 = vmatmul.f32.gmra.mxu0 %v5583
    %v5585 = vpop.f32.mrf.mxu0
    %v5586 = vadd.f32 %v5492, %v5585
    %v5587 = vand.u32 %v5268, 4294901760
    %v5588 = vsub.f32 %v5268, %v5587
    %5589 = vmatmul.f32.gmra.mxu0 %v5588
    %v5590 = vpop.f32.mrf.mxu0
    %v5591 = vadd.f32 %v5496, %v5590
    %v5592 = vand.u32 %v5271, 4294901760
    %v5593 = vsub.f32 %v5271, %v5592
    %5594 = vmatmul.f32.gmra.mxu0 %v5593
    %v5595 = vpop.f32.mrf.mxu0
    %v5596 = vadd.f32 %v5500, %v5595
    %v5597 = vand.u32 %v5274, 4294901760
    %v5598 = vsub.f32 %v5274, %v5597
    %5599 = vmatmul.f32.gmra.mxu0 %v5598
    %v5600 = vpop.f32.mrf.mxu0
    %v5601 = vadd.f32 %v5504, %v5600
    %v5602 = vand.u32 %v5277, 4294901760
    %v5603 = vsub.f32 %v5277, %v5602
    %5604 = vmatmul.f32.gmra.mxu0 %v5603
    %v5605 = vpop.f32.mrf.mxu0
    %v5606 = vadd.f32 %v5508, %v5605
    %v5607 = vand.u32 %v5280, 4294901760
    %v5608 = vsub.f32 %v5280, %v5607
    %5609 = vmatmul.f32.gmra.mxu0 %v5608
    %v5610 = vpop.f32.mrf.mxu0
    %v5611 = vadd.f32 %v5512, %v5610
    %5612 = vdwg.mxu0
    %5613 = vmatpush.msra.mxu0 0.0
    %5614 = vmatpush.msra.mxu0 0.0
    %5615 = vmatpush.msra.mxu0 0.0
    %5616 = vmatpush.msra.mxu0 0.0
    %5617 = vmatpush.msra.mxu0 0.0
    %5618 = vmatpush.msra.mxu0 0.0
    %5619 = vmatpush.msra.mxu0 0.0
    %5620 = vmatpush.msra.mxu0 0.0
    %5621 = vmatpush.msra.mxu0 0.0
    %5622 = vmatpush.msra.mxu0 0.0
    %5623 = vmatpush.msra.mxu0 0.0
    %5624 = vmatpush.msra.mxu0 0.0
    %5625 = vmatpush.msra.mxu0 0.0
    %5626 = vmatpush.msra.mxu0 0.0
    %5627 = vmatpush.msra.mxu0 0.0
    %v5628 = vand.u32 %v226, 4294901760
    %5629 = vmatpush.msra.mxu0 %v5628
    %v5630 = vand.u32 %v5235, 4294901760
    %v5631 = vsub.f32 %v5235, %v5630
    %v5632 = vand.u32 %v5631, 4294901760
    %5633 = vmatmul.f32.gmra.mxu0 %v5632
    %v5634 = vpop.f32.mrf.mxu0
    %v5635 = vadd.f32 %v5536, %v5634
    %v5636 = vand.u32 %v5238, 4294901760
    %v5637 = vsub.f32 %v5238, %v5636
    %v5638 = vand.u32 %v5637, 4294901760
    %5639 = vmatmul.f32.gmra.mxu0 %v5638
    %v5640 = vpop.f32.mrf.mxu0
    %v5641 = vadd.f32 %v5541, %v5640
    %v5642 = vand.u32 %v5241, 4294901760
    %v5643 = vsub.f32 %v5241, %v5642
    %v5644 = vand.u32 %v5643, 4294901760
    %5645 = vmatmul.f32.gmra.mxu0 %v5644
    %v5646 = vpop.f32.mrf.mxu0
    %v5647 = vadd.f32 %v5546, %v5646
    %v5648 = vand.u32 %v5244, 4294901760
    %v5649 = vsub.f32 %v5244, %v5648
    %v5650 = vand.u32 %v5649, 4294901760
    %5651 = vmatmul.f32.gmra.mxu0 %v5650
    %v5652 = vpop.f32.mrf.mxu0
    %v5653 = vadd.f32 %v5551, %v5652
    %v5654 = vand.u32 %v5247, 4294901760
    %v5655 = vsub.f32 %v5247, %v5654
    %v5656 = vand.u32 %v5655, 4294901760
    %5657 = vmatmul.f32.gmra.mxu0 %v5656
    %v5658 = vpop.f32.mrf.mxu0
    %v5659 = vadd.f32 %v5556, %v5658
    %v5660 = vand.u32 %v5250, 4294901760
    %v5661 = vsub.f32 %v5250, %v5660
    %v5662 = vand.u32 %v5661, 4294901760
    %5663 = vmatmul.f32.gmra.mxu0 %v5662
    %v5664 = vpop.f32.mrf.mxu0
    %v5665 = vadd.f32 %v5561, %v5664
    %v5666 = vand.u32 %v5253, 4294901760
    %v5667 = vsub.f32 %v5253, %v5666
    %v5668 = vand.u32 %v5667, 4294901760
    %5669 = vmatmul.f32.gmra.mxu0 %v5668
    %v5670 = vpop.f32.mrf.mxu0
    %v5671 = vadd.f32 %v5566, %v5670
    %v5672 = vand.u32 %v5256, 4294901760
    %v5673 = vsub.f32 %v5256, %v5672
    %v5674 = vand.u32 %v5673, 4294901760
    %5675 = vmatmul.f32.gmra.mxu0 %v5674
    %v5676 = vpop.f32.mrf.mxu0
    %v5677 = vadd.f32 %v5571, %v5676
    %v5678 = vand.u32 %v5259, 4294901760
    %v5679 = vsub.f32 %v5259, %v5678
    %v5680 = vand.u32 %v5679, 4294901760
    %5681 = vmatmul.f32.gmra.mxu0 %v5680
    %v5682 = vpop.f32.mrf.mxu0
    %v5683 = vadd.f32 %v5576, %v5682
    %v5684 = vand.u32 %v5262, 4294901760
    %v5685 = vsub.f32 %v5262, %v5684
    %v5686 = vand.u32 %v5685, 4294901760
    %5687 = vmatmul.f32.gmra.mxu0 %v5686
    %v5688 = vpop.f32.mrf.mxu0
    %v5689 = vadd.f32 %v5581, %v5688
    %v5690 = vand.u32 %v5265, 4294901760
    %v5691 = vsub.f32 %v5265, %v5690
    %v5692 = vand.u32 %v5691, 4294901760
    %5693 = vmatmul.f32.gmra.mxu0 %v5692
    %v5694 = vpop.f32.mrf.mxu0
    %v5695 = vadd.f32 %v5586, %v5694
    %v5696 = vand.u32 %v5268, 4294901760
    %v5697 = vsub.f32 %v5268, %v5696
    %v5698 = vand.u32 %v5697, 4294901760
    %5699 = vmatmul.f32.gmra.mxu0 %v5698
    %v5700 = vpop.f32.mrf.mxu0
    %v5701 = vadd.f32 %v5591, %v5700
    %v5702 = vand.u32 %v5271, 4294901760
    %v5703 = vsub.f32 %v5271, %v5702
    %v5704 = vand.u32 %v5703, 4294901760
    %5705 = vmatmul.f32.gmra.mxu0 %v5704
    %v5706 = vpop.f32.mrf.mxu0
    %v5707 = vadd.f32 %v5596, %v5706
    %v5708 = vand.u32 %v5274, 4294901760
    %v5709 = vsub.f32 %v5274, %v5708
    %v5710 = vand.u32 %v5709, 4294901760
    %5711 = vmatmul.f32.gmra.mxu0 %v5710
    %v5712 = vpop.f32.mrf.mxu0
    %v5713 = vadd.f32 %v5601, %v5712
    %v5714 = vand.u32 %v5277, 4294901760
    %v5715 = vsub.f32 %v5277, %v5714
    %v5716 = vand.u32 %v5715, 4294901760
    %5717 = vmatmul.f32.gmra.mxu0 %v5716
    %v5718 = vpop.f32.mrf.mxu0
    %v5719 = vadd.f32 %v5606, %v5718
    %v5720 = vand.u32 %v5280, 4294901760
    %v5721 = vsub.f32 %v5280, %v5720
    %v5722 = vand.u32 %v5721, 4294901760
    %5723 = vmatmul.f32.gmra.mxu0 %v5722
    %v5724 = vpop.f32.mrf.mxu0
    %v5725 = vadd.f32 %v5611, %v5724
    %5726 = vdwg.mxu0
    %5727 = vmatpush.msra.mxu0 0.0
    %5728 = vmatpush.msra.mxu0 0.0
    %5729 = vmatpush.msra.mxu0 0.0
    %5730 = vmatpush.msra.mxu0 0.0
    %5731 = vmatpush.msra.mxu0 0.0
    %5732 = vmatpush.msra.mxu0 0.0
    %5733 = vmatpush.msra.mxu0 0.0
    %5734 = vmatpush.msra.mxu0 0.0
    %5735 = vmatpush.msra.mxu0 0.0
    %5736 = vmatpush.msra.mxu0 0.0
    %5737 = vmatpush.msra.mxu0 0.0
    %5738 = vmatpush.msra.mxu0 0.0
    %5739 = vmatpush.msra.mxu0 0.0
    %5740 = vmatpush.msra.mxu0 0.0
    %5741 = vmatpush.msra.mxu0 0.0
    %v5742 = vand.u32 %v226, 4294901760
    %v5743 = vsub.f32 %v226, %v5742
    %v5744 = vand.u32 %v5743, 4294901760
    %5745 = vmatpush.msra.mxu0 %v5744
    %v5746 = vand.u32 %v5235, 4294901760
    %5747 = vmatmul.f32.gmra.mxu0 %v5746
    %v5748 = vpop.f32.mrf.mxu0
    %v5749 = vadd.f32 %v5635, %v5748
    %v5750 = vand.u32 %v5238, 4294901760
    %5751 = vmatmul.f32.gmra.mxu0 %v5750
    %v5752 = vpop.f32.mrf.mxu0
    %v5753 = vadd.f32 %v5641, %v5752
    %v5754 = vand.u32 %v5241, 4294901760
    %5755 = vmatmul.f32.gmra.mxu0 %v5754
    %v5756 = vpop.f32.mrf.mxu0
    %v5757 = vadd.f32 %v5647, %v5756
    %v5758 = vand.u32 %v5244, 4294901760
    %5759 = vmatmul.f32.gmra.mxu0 %v5758
    %v5760 = vpop.f32.mrf.mxu0
    %v5761 = vadd.f32 %v5653, %v5760
    %v5762 = vand.u32 %v5247, 4294901760
    %5763 = vmatmul.f32.gmra.mxu0 %v5762
    %v5764 = vpop.f32.mrf.mxu0
    %v5765 = vadd.f32 %v5659, %v5764
    %v5766 = vand.u32 %v5250, 4294901760
    %5767 = vmatmul.f32.gmra.mxu0 %v5766
    %v5768 = vpop.f32.mrf.mxu0
    %v5769 = vadd.f32 %v5665, %v5768
    %v5770 = vand.u32 %v5253, 4294901760
    %5771 = vmatmul.f32.gmra.mxu0 %v5770
    %v5772 = vpop.f32.mrf.mxu0
    %v5773 = vadd.f32 %v5671, %v5772
    %v5774 = vand.u32 %v5256, 4294901760
    %5775 = vmatmul.f32.gmra.mxu0 %v5774
    %v5776 = vpop.f32.mrf.mxu0
    %v5777 = vadd.f32 %v5677, %v5776
    %v5778 = vand.u32 %v5259, 4294901760
    %5779 = vmatmul.f32.gmra.mxu0 %v5778
    %v5780 = vpop.f32.mrf.mxu0
    %v5781 = vadd.f32 %v5683, %v5780
    %v5782 = vand.u32 %v5262, 4294901760
    %5783 = vmatmul.f32.gmra.mxu0 %v5782
    %v5784 = vpop.f32.mrf.mxu0
    %v5785 = vadd.f32 %v5689, %v5784
    %v5786 = vand.u32 %v5265, 4294901760
    %5787 = vmatmul.f32.gmra.mxu0 %v5786
    %v5788 = vpop.f32.mrf.mxu0
    %v5789 = vadd.f32 %v5695, %v5788
    %v5790 = vand.u32 %v5268, 4294901760
    %5791 = vmatmul.f32.gmra.mxu0 %v5790
    %v5792 = vpop.f32.mrf.mxu0
    %v5793 = vadd.f32 %v5701, %v5792
    %v5794 = vand.u32 %v5271, 4294901760
    %5795 = vmatmul.f32.gmra.mxu0 %v5794
    %v5796 = vpop.f32.mrf.mxu0
    %v5797 = vadd.f32 %v5707, %v5796
    %v5798 = vand.u32 %v5274, 4294901760
    %5799 = vmatmul.f32.gmra.mxu0 %v5798
    %v5800 = vpop.f32.mrf.mxu0
    %v5801 = vadd.f32 %v5713, %v5800
    %v5802 = vand.u32 %v5277, 4294901760
    %5803 = vmatmul.f32.gmra.mxu0 %v5802
    %v5804 = vpop.f32.mrf.mxu0
    %v5805 = vadd.f32 %v5719, %v5804
    %v5806 = vand.u32 %v5280, 4294901760
    %5807 = vmatmul.f32.gmra.mxu0 %v5806
    %v5808 = vpop.f32.mrf.mxu0
    %v5809 = vadd.f32 %v5725, %v5808
    %5810 = vdwg.mxu0
    %5811 = vmatpush.msra.mxu0 0.0
    %5812 = vmatpush.msra.mxu0 0.0
    %5813 = vmatpush.msra.mxu0 0.0
    %5814 = vmatpush.msra.mxu0 0.0
    %5815 = vmatpush.msra.mxu0 0.0
    %5816 = vmatpush.msra.mxu0 0.0
    %5817 = vmatpush.msra.mxu0 0.0
    %5818 = vmatpush.msra.mxu0 0.0
    %5819 = vmatpush.msra.mxu0 0.0
    %5820 = vmatpush.msra.mxu0 0.0
    %5821 = vmatpush.msra.mxu0 0.0
    %5822 = vmatpush.msra.mxu0 0.0
    %5823 = vmatpush.msra.mxu0 0.0
    %5824 = vmatpush.msra.mxu0 0.0
    %5825 = vmatpush.msra.mxu0 0.0
    %v5826 = vand.u32 %v226, 4294901760
    %5827 = vmatpush.msra.mxu0 %v5826
    %v5828 = vand.u32 %v5235, 4294901760
    %5829 = vmatmul.f32.gmra.mxu0 %v5828
    %v5830 = vpop.f32.mrf.mxu0
    %v5831 = vadd.f32 %v5749, %v5830
    %v5832 = vand.u32 %v5238, 4294901760
    %5833 = vmatmul.f32.gmra.mxu0 %v5832
    %v5834 = vpop.f32.mrf.mxu0
    %v5835 = vadd.f32 %v5753, %v5834
    %v5836 = vand.u32 %v5241, 4294901760
    %5837 = vmatmul.f32.gmra.mxu0 %v5836
    %v5838 = vpop.f32.mrf.mxu0
    %v5839 = vadd.f32 %v5757, %v5838
    %v5840 = vand.u32 %v5244, 4294901760
    %5841 = vmatmul.f32.gmra.mxu0 %v5840
    %v5842 = vpop.f32.mrf.mxu0
    %v5843 = vadd.f32 %v5761, %v5842
    %v5844 = vand.u32 %v5247, 4294901760
    %5845 = vmatmul.f32.gmra.mxu0 %v5844
    %v5846 = vpop.f32.mrf.mxu0
    %v5847 = vadd.f32 %v5765, %v5846
    %v5848 = vand.u32 %v5250, 4294901760
    %5849 = vmatmul.f32.gmra.mxu0 %v5848
    %v5850 = vpop.f32.mrf.mxu0
    %v5851 = vadd.f32 %v5769, %v5850
    %v5852 = vand.u32 %v5253, 4294901760
    %5853 = vmatmul.f32.gmra.mxu0 %v5852
    %v5854 = vpop.f32.mrf.mxu0
    %v5855 = vadd.f32 %v5773, %v5854
    %v5856 = vand.u32 %v5256, 4294901760
    %5857 = vmatmul.f32.gmra.mxu0 %v5856
    %v5858 = vpop.f32.mrf.mxu0
    %v5859 = vadd.f32 %v5777, %v5858
    %v5860 = vand.u32 %v5259, 4294901760
    %5861 = vmatmul.f32.gmra.mxu0 %v5860
    %v5862 = vpop.f32.mrf.mxu0
    %v5863 = vadd.f32 %v5781, %v5862
    %v5864 = vand.u32 %v5262, 4294901760
    %5865 = vmatmul.f32.gmra.mxu0 %v5864
    %v5866 = vpop.f32.mrf.mxu0
    %v5867 = vadd.f32 %v5785, %v5866
    %v5868 = vand.u32 %v5265, 4294901760
    %5869 = vmatmul.f32.gmra.mxu0 %v5868
    %v5870 = vpop.f32.mrf.mxu0
    %v5871 = vadd.f32 %v5789, %v5870
    %v5872 = vand.u32 %v5268, 4294901760
    %5873 = vmatmul.f32.gmra.mxu0 %v5872
    %v5874 = vpop.f32.mrf.mxu0
    %v5875 = vadd.f32 %v5793, %v5874
    %v5876 = vand.u32 %v5271, 4294901760
    %5877 = vmatmul.f32.gmra.mxu0 %v5876
    %v5878 = vpop.f32.mrf.mxu0
    %v5879 = vadd.f32 %v5797, %v5878
    %v5880 = vand.u32 %v5274, 4294901760
    %5881 = vmatmul.f32.gmra.mxu0 %v5880
    %v5882 = vpop.f32.mrf.mxu0
    %v5883 = vadd.f32 %v5801, %v5882
    %v5884 = vand.u32 %v5277, 4294901760
    %5885 = vmatmul.f32.gmra.mxu0 %v5884
    %v5886 = vpop.f32.mrf.mxu0
    %v5887 = vadd.f32 %v5805, %v5886
    %v5888 = vand.u32 %v5280, 4294901760
    %5889 = vmatmul.f32.gmra.mxu0 %v5888
    %v5890 = vpop.f32.mrf.mxu0
    %v5891 = vadd.f32 %v5809, %v5890
    %5892 = vdwg.mxu0
    %s5893 = scalar_lea.vmem [#allocation6], 896
    %5894 = vst [vmem:[%s5893] sm:$0xff] %v5831
    %5895 = vst [vmem:[%s5893 + $0x8] sm:$0xff] %v5835
    %5896 = vst [vmem:[%s5893 + $0x10] sm:$0xff] %v5839
    %5897 = vst [vmem:[%s5893 + $0x18] sm:$0xff] %v5843
    %5898 = vst [vmem:[%s5893 + $0x20] sm:$0xff] %v5847
    %5899 = vst [vmem:[%s5893 + $0x28] sm:$0xff] %v5851
    %5900 = vst [vmem:[%s5893 + $0x30] sm:$0xff] %v5855
    %5901 = vst [vmem:[%s5893 + $0x38] sm:$0xff] %v5859
    %5902 = vst [vmem:[%s5893 + $0x40] sm:$0xff] %v5863
    %5903 = vst [vmem:[%s5893 + $0x48] sm:$0xff] %v5867
    %5904 = vst [vmem:[%s5893 + $0x50] sm:$0xff] %v5871
    %5905 = vst [vmem:[%s5893 + $0x58] sm:$0xff] %v5875
    %5906 = vst [vmem:[%s5893 + $0x60] sm:$0xff] %v5879
    %5907 = vst [vmem:[%s5893 + $0x68] sm:$0xff] %v5883
    %5908 = vst [vmem:[%s5893 + $0x70] sm:$0xff] %v5887
    %5909 = vst [vmem:[%s5893 + $0x78] sm:$0xff] %v5891
    // Predicated region
    $region22: #{tpu_custom_call.1} parent=1 // pred_check
      _
    $region23: #{tpu_custom_call.1} parent=1 // pred_check_branch
      %5911 = sbr.rel (0) target = $region25
    $region24: #{tpu_custom_call.1} parent=1 // pred_region
      %5913 = vsyncadd [#allocation5], 0
      %s5914 = sshll.u32 [#allocation6], 4
      %s5915 = int_to_ptr.vmem [resolvable:$true] %s5914
      %s5916 = sshll.u32 %s4, 4
      %s5917 = int_to_ptr.hbm [resolvable:$true] %s5916
      %5922 = dma.vmem_to_hbm [thread:$0]  %s5915, 16384, %s5917, [#allocation5], 128, 128, 8
    $region25: #{tpu_custom_call.1} parent=1 // pred_fallthru
      _
    // Predicated region
    $region26: #{tpu_custom_call.1} parent=1 // pred_check
      _
    $region27: #{tpu_custom_call.1} parent=1 // pred_check_branch
      %5924 = sbr.rel (0) target = $region29
    $region28: #{tpu_custom_call.1} parent=1 // pred_region
      %5926 = dma.done [#allocation5], 16384
    $region29: #{tpu_custom_call.1} parent=1 // pred_fallthru
      _
    %5927 = vsyncpa [#allocation4], 1
    %5928 = vsyncpa [#allocation5], 1

</llo_original>
